<compile_context>
chip_gen: v6e
topology: v6e:2x2x1
jax: 0.10.0
libtpu: 0.0.40
codegen_flags: <defaults>
</compile_context>

<pallas_src>
import math
import functools

import jax
import jax.numpy as jnp
from jax import lax
from jax.experimental import pallas as pl
from jax.experimental.pallas import tpu as pltpu


_VMEM_LIMIT = 48 * 1024 * 1024   # below v7x's 64 MiB physical, above default scoped limits


# ------------------------------ tiling helpers ------------------------------ #

def _round_up(x, m):
    return ((x + m - 1) // m) * m


def _tile(dim, target):
    """Pick a tile (full dim, or a 128-multiple divisor <= target) and padded dim."""
    if dim <= target:
        return dim, dim                       # full-dim block: always layout-legal
    t = target
    while t >= 128:
        if dim % t == 0:
            return t, dim
        t -= 128
    return target, _round_up(dim, target)     # rare fallback: pad


def _pad2d(a, rows, cols):
    r, c = a.shape
    if r == rows and c == cols:
        return a                               # no-op in the common (pre-padded) case
    return jnp.pad(a, ((0, rows - r), (0, cols - c)))


def _q_tile(sq):
    for t in (256, 128):
        if sq > t and sq % t == 0:
            return t
    return sq


# ------------------------------ Pallas kernels ------------------------------ #

def _layernorm_rows(y, g, b, eps):
    # single-pass statistics: E[x^2] - E[x]^2
    mean = jnp.mean(y, axis=-1, keepdims=True)
    meansq = jnp.mean(y * y, axis=-1, keepdims=True)
    var = jnp.maximum(meansq - mean * mean, 0.0)
    return (y - mean) * lax.rsqrt(var + eps) * g + b


def matmul_kernel(x_ref, w_ref, b_ref, o_ref, acc_ref, *, activation=None):
    # One (i, j) output tile; accumulate over the K grid axis (innermost).
    @pl.when(pl.program_id(2) == 0)
    def _():
        acc_ref[...] = jnp.zeros_like(acc_ref)

    acc_ref[...] += jnp.dot(x_ref[...], w_ref[...],
                            preferred_element_type=jnp.float32)

    @pl.when(pl.program_id(2) == pl.num_programs(2) - 1)
    def _():
        y = acc_ref[...] + b_ref[...].astype(jnp.float32)
        if activation == "relu":
            y = jnp.maximum(y, 0.0)
        o_ref[...] = y.astype(o_ref.dtype)


def matmul_residual_ln_kernel(x_ref, w_ref, b_ref, r_ref, g_ref, bb_ref,
                              o_ref, acc_ref, *, eps):
    # y = LayerNorm((x @ w + b) + residual); K tiled ("arbitrary"), N = d_model full.
    @pl.when(pl.program_id(1) == 0)
    def _():
        acc_ref[...] = jnp.zeros_like(acc_ref)

    acc_ref[...] += jnp.dot(x_ref[...], w_ref[...],
                            preferred_element_type=jnp.float32)

    @pl.when(pl.program_id(1) == pl.num_programs(1) - 1)
    def _():
        y = (acc_ref[...] + b_ref[...].astype(jnp.float32)
             + r_ref[...].astype(jnp.float32))
        o_ref[...] = _layernorm_rows(y, g_ref[...].astype(jnp.float32),
                                     bb_ref[...].astype(jnp.float32),
                                     eps).astype(o_ref.dtype)


def ffn_residual_ln_kernel(x_ref, w1_ref, b1_ref, w2_ref, b2_ref, g_ref, bb_ref,
                           o_ref, acc_ref, *, eps):
    # y = LayerNorm(relu(x @ w1 + b1) @ w2 + b2 + x); hidden dim tiled ("arbitrary").
    @pl.when(pl.program_id(1) == 0)
    def _():
        acc_ref[...] = jnp.zeros_like(acc_ref)

    h = jnp.dot(x_ref[...], w1_ref[...], preferred_element_type=jnp.float32)
    h = jnp.maximum(h + b1_ref[...].astype(jnp.float32), 0.0)
    acc_ref[...] += jnp.dot(h.astype(w2_ref.dtype), w2_ref[...],
                            preferred_element_type=jnp.float32)

    @pl.when(pl.program_id(1) == pl.num_programs(1) - 1)
    def _():
        y = (acc_ref[...] + b2_ref[...].astype(jnp.float32)
             + x_ref[...].astype(jnp.float32))          # residual = FFN input block
        o_ref[...] = _layernorm_rows(y, g_ref[...].astype(jnp.float32),
                                     bb_ref[...].astype(jnp.float32),
                                     eps).astype(o_ref.dtype)


def mha_kernel(*refs, causal, q_block, has_kv_len):
    """One head, one q tile: q [tq, dh], k/v [Sk, dh] -> o [tq, dh].

    The 1/sqrt(d_head) scale is folded into Wq at init.  Masking is generated
    in-kernel (causal via iota) or from SMEM key lengths (cross-attention).
    """
    if has_kv_len:
        kvlen_ref, q_ref, k_ref, v_ref, o_ref = refs
    else:
        q_ref, k_ref, v_ref, o_ref = refs

    # QK^T: contract the head dim of q and k (no explicit K transpose).
    s = lax.dot_general(q_ref[...], k_ref[...], (((1,), (1,)), ((), ())),
                        preferred_element_type=jnp.float32)          # [tq, Sk]

    neg = jnp.float32(-1e9)
    if causal:
        row = (pl.program_id(2) * q_block
               + lax.broadcasted_iota(jnp.int32, s.shape, 0))
        col = lax.broadcasted_iota(jnp.int32, s.shape, 1)
        s = jnp.where(col <= row, s, neg)
    if has_kv_len:
        col = lax.broadcasted_iota(jnp.int32, s.shape, 1)
        s = jnp.where(col < kvlen_ref[pl.program_id(0)], s, neg)

    m = jnp.max(s, axis=-1, keepdims=True)
    p = jnp.exp(s - m)
    p = p * pl.reciprocal(jnp.sum(p, axis=-1, keepdims=True), approx=True)
    out = jnp.dot(p.astype(v_ref.dtype), v_ref[...],
                  preferred_element_type=jnp.float32)
    o_ref[...] = out.astype(o_ref.dtype)


# ------------------------------ Pallas wrappers ----------------------------- #

def pallas_linear(x, w, b, *, activation=None, out_dtype=None,
                  tm_t=256, tk_t=512, tn_t=256):
    """Tiled y = act(x @ w + b); x: [M, K] bf16, w: [K, N] bf16, b: [N] f32."""
    M, K = x.shape
    _, N = w.shape
    out_dtype = out_dtype or x.dtype
    tm, Mp = _tile(M, tm_t)
    tk, Kp = _tile(K, tk_t)
    tn, Np = _tile(N, tn_t)
    xp = _pad2d(x, Mp, Kp)
    wp = _pad2d(w, Kp, Np)
    bp = _pad2d(b.reshape(1, N), 1, Np)
    grid = (Mp // tm, Np // tn, Kp // tk)
    out = pl.pallas_call(
        functools.partial(matmul_kernel, activation=activation),
        out_shape=jax.ShapeDtypeStruct((Mp, Np), out_dtype),
        grid=grid,
        in_specs=[pl.BlockSpec((tm, tk), lambda i, j, k: (i, k)),
                  pl.BlockSpec((tk, tn), lambda i, j, k: (k, j)),
                  pl.BlockSpec((1, tn), lambda i, j, k: (0, j))],
        out_specs=pl.BlockSpec((tm, tn), lambda i, j, k: (i, j)),
        scratch_shapes=[pltpu.VMEM((tm, tn), jnp.float32)],
        compiler_params=pltpu.CompilerParams(
            dimension_semantics=("parallel", "parallel", "arbitrary"),
            vmem_limit_bytes=_VMEM_LIMIT),
    )(xp, wp, bp)
    if Mp != M or Np != N:
        out = out[:M, :N]
    return out


def pallas_matmul_residual_ln(x, w, b, residual, gamma, beta, eps=1e-5):
    """Fused y = LayerNorm(x @ w + b + residual); N = d_model kept un-tiled."""
    M, K = x.shape
    N = w.shape[1]
    tm, Mp = _tile(M, 128)
    tk, Kp = _tile(K, 512)
    xp = _pad2d(x, Mp, Kp)
    wp = _pad2d(w, Kp, N)
    rp = _pad2d(residual, Mp, N)
    grid = (Mp // tm, Kp // tk)
    out = pl.pallas_call(
        functools.partial(matmul_residual_ln_kernel, eps=eps),
        out_shape=jax.ShapeDtypeStruct((Mp, N), x.dtype),
        grid=grid,
        in_specs=[pl.BlockSpec((tm, tk), lambda i, k: (i, k)),
                  pl.BlockSpec((tk, N), lambda i, k: (k, 0)),
                  pl.BlockSpec((1, N), lambda i, k: (0, 0)),
                  pl.BlockSpec((tm, N), lambda i, k: (i, 0)),
                  pl.BlockSpec((1, N), lambda i, k: (0, 0)),
                  pl.BlockSpec((1, N), lambda i, k: (0, 0))],
        out_specs=pl.BlockSpec((tm, N), lambda i, k: (i, 0)),
        scratch_shapes=[pltpu.VMEM((tm, N), jnp.float32)],
        compiler_params=pltpu.CompilerParams(
            dimension_semantics=("parallel", "arbitrary"),
            vmem_limit_bytes=_VMEM_LIMIT),
    )(xp, wp, b.reshape(1, N), rp, gamma.reshape(1, N), beta.reshape(1, N))
    return out[:M] if Mp != M else out


def pallas_ffn_residual_ln(x, w1, b1, w2, b2, gamma, beta, eps=1e-5):
    """Fused y = LayerNorm(relu(x@w1+b1)@w2 + b2 + x); hidden dim tiled."""
    M, D = x.shape
    H = w1.shape[1]
    tm, Mp = _tile(M, 128)
    th, Hp = _tile(H, 256)
    xp = _pad2d(x, Mp, D)
    w1p = _pad2d(w1, D, Hp)
    b1p = _pad2d(b1.reshape(1, H), 1, Hp)
    w2p = _pad2d(w2, Hp, D)
    grid = (Mp // tm, Hp // th)
    out = pl.pallas_call(
        functools.partial(ffn_residual_ln_kernel, eps=eps),
        out_shape=jax.ShapeDtypeStruct((Mp, D), x.dtype),
        grid=grid,
        in_specs=[pl.BlockSpec((tm, D), lambda i, j: (i, 0)),   # x (also residual)
                  pl.BlockSpec((D, th), lambda i, j: (0, j)),   # w1
                  pl.BlockSpec((1, th), lambda i, j: (0, j)),   # b1
                  pl.BlockSpec((th, D), lambda i, j: (j, 0)),   # w2
                  pl.BlockSpec((1, D), lambda i, j: (0, 0)),    # b2
                  pl.BlockSpec((1, D), lambda i, j: (0, 0)),    # gamma
                  pl.BlockSpec((1, D), lambda i, j: (0, 0))],   # beta
        out_specs=pl.BlockSpec((tm, D), lambda i, j: (i, 0)),
        scratch_shapes=[pltpu.VMEM((tm, D), jnp.float32)],
        compiler_params=pltpu.CompilerParams(
            dimension_semantics=("parallel", "arbitrary"),
            vmem_limit_bytes=_VMEM_LIMIT),
    )(xp, w1p, b1p, w2p, b2.reshape(1, D), gamma.reshape(1, D), beta.reshape(1, D))
    return out[:M] if Mp != M else out


def pallas_self_attention(q, k, v):
    """Causal MHA. q/k/v: [B, H, S, dh] -> [B, H, S, dh]; grid (B, H, Sq_tiles)."""
    B, H, Sq, dh = q.shape
    Sk = k.shape[2]
    tq = _q_tile(Sq)
    kern = functools.partial(mha_kernel, causal=True, q_block=tq, has_kv_len=False)
    return pl.pallas_call(
        kern,
        out_shape=jax.ShapeDtypeStruct((B, H, Sq, dh), q.dtype),
        grid=(B, H, Sq // tq),
        in_specs=[pl.BlockSpec((pl.Squeezed(), pl.Squeezed(), tq, dh),
                               lambda b, h, i: (b, h, i, 0)),
                  pl.BlockSpec((pl.Squeezed(), pl.Squeezed(), Sk, dh),
                               lambda b, h, i: (b, h, 0, 0)),
                  pl.BlockSpec((pl.Squeezed(), pl.Squeezed(), Sk, dh),
                               lambda b, h, i: (b, h, 0, 0))],
        out_specs=pl.BlockSpec((pl.Squeezed(), pl.Squeezed(), tq, dh),
                               lambda b, h, i: (b, h, i, 0)),
        compiler_params=pltpu.CompilerParams(
            dimension_semantics=("parallel", "parallel", "arbitrary"),
            vmem_limit_bytes=_VMEM_LIMIT),
    )(q, k, v)


def pallas_cross_attention(q, k, v, kv_len):
    """Cross MHA with per-batch key lengths (scalar prefetch, no dense mask)."""
    B, H, Sq, dh = q.shape
    Sk = k.shape[2]
    tq = _q_tile(Sq)
    kern = functools.partial(mha_kernel, causal=False, q_block=tq, has_kv_len=True)
    grid_spec = pltpu.PrefetchScalarGridSpec(
        num_scalar_prefetch=1,
        grid=(B, H, Sq // tq),
        in_specs=[pl.BlockSpec((pl.Squeezed(), pl.Squeezed(), tq, dh),
                               lambda b, h, i, kvlen: (b, h, i, 0)),
                  pl.BlockSpec((pl.Squeezed(), pl.Squeezed(), Sk, dh),
                               lambda b, h, i, kvlen: (b, h, 0, 0)),
                  pl.BlockSpec((pl.Squeezed(), pl.Squeezed(), Sk, dh),
                               lambda b, h, i, kvlen: (b, h, 0, 0))],
        out_specs=pl.BlockSpec((pl.Squeezed(), pl.Squeezed(), tq, dh),
                               lambda b, h, i, kvlen: (b, h, i, 0)),
    )
    return pl.pallas_call(
        kern,
        out_shape=jax.ShapeDtypeStruct((B, H, Sq, dh), q.dtype),
        grid_spec=grid_spec,
        compiler_params=pltpu.CompilerParams(
            dimension_semantics=("parallel", "parallel", "arbitrary"),
            vmem_limit_bytes=_VMEM_LIMIT),
    )(kv_len, q, k, v)


# ------------------------------ Model (glue) -------------------------------- #

def sinusoidal_pos_encoding(max_len, d_model):
    pos = jnp.arange(max_len, dtype=jnp.float32)[:, None]
    i = jnp.arange(0, d_model, 2, dtype=jnp.float32)
    div = jnp.exp(-(i / d_model) * math.log(10000.0))
    pe = jnp.zeros((max_len, d_model), dtype=jnp.float32)
    pe = pe.at[:, 0::2].set(jnp.sin(pos * div))
    pe = pe.at[:, 1::2].set(jnp.cos(pos * div))
    return pe


def _split_heads(x, n_head, n_chunks):
    """[B, S, n_chunks*D] -> n_chunks arrays of [B, n_head, S, d_head]."""
    B, S, CD = x.shape
    D = CD // n_chunks
    dh = D // n_head
    x = x.reshape(B, S, n_chunks, n_head, dh)
    x = jnp.transpose(x, (2, 0, 3, 1, 4))          # [C, B, H, S, dh]
    return tuple(x[i] for i in range(n_chunks))


def _merge_heads(x):
    """[B, H, S, dh] -> [B, S, H*dh]."""
    B, H, S, dh = x.shape
    return jnp.transpose(x, (0, 2, 1, 3)).reshape(B, S, H * dh)


def decoder_layer(dec, enc, kv_len, p, n_head):
    B, Sq, D = dec.shape
    Sk = enc.shape[1]
    # 1) masked self-attention: fused QKV matmul -> per-head attention -> Wo+add&norm
    qkv = pallas_linear(dec.reshape(-1, D), p["self_wqkv"],
                        p["self_bqkv"]).reshape(B, Sq, 3 * D)
    q, k, v = _split_heads(qkv, n_head, 3)
    attn = _merge_heads(pallas_self_attention(q, k, v))
    dec = pallas_matmul_residual_ln(attn.reshape(-1, D), p["self_wo"], p["self_bo"],
                                    dec.reshape(-1, D), p["ln1_g"],
                                    p["ln1_b"]).reshape(B, Sq, D)
    # 2) cross-attention: q proj + fused KV proj -> per-head attention -> Wo+add&norm
    qx = pallas_linear(dec.reshape(-1, D), p["cross_wq"],
                       p["cross_bq"]).reshape(B, Sq, D)
    kvx = pallas_linear(enc.reshape(-1, D), p["cross_wkv"],
                        p["cross_bkv"]).reshape(B, Sk, 2 * D)
    (q,) = _split_heads(qx, n_head, 1)
    k, v = _split_heads(kvx, n_head, 2)
    attn = _merge_heads(pallas_cross_attention(q, k, v, kv_len))
    dec = pallas_matmul_residual_ln(attn.reshape(-1, D), p["cross_wo"], p["cross_bo"],
                                    dec.reshape(-1, D), p["ln2_g"],
                                    p["ln2_b"]).reshape(B, Sq, D)
    # 3) fused position-wise FFN (w1 -> relu -> w2) + add&norm
    dec = pallas_ffn_residual_ln(dec.reshape(-1, D), p["ffn_w1"], p["ffn_b1"],
                                 p["ffn_w2"], p["ffn_b2"],
                                 p["ln3_g"], p["ln3_b"]).reshape(B, Sq, D)
    return dec


def decoder_forward(params, dec_tokens, enc, t_mask, s_mask, *, n_head, dec_voc_size):
    B, S = dec_tokens.shape
    D = params["tok_emb"].shape[1]
    # TODO(synk): t_mask assumed causal; built in-kernel (not streamed as [B,1,S,S]).
    del t_mask
    # cross-attention padding mask -> per-batch valid key length (scalar prefetch)
    kv_len = jnp.sum(s_mask[:, 0, 0, :] != 0, axis=-1).astype(jnp.int32)    # [B]
    # TransformerEmbedding: token embedding (XLA gather) + sinusoidal positions.
    tok = jnp.take(params["tok_emb"], dec_tokens, axis=0)                   # [B,S,D]
    x = (tok + params["pos_emb"][:S][None, :, :]).astype(jnp.bfloat16)
    enc = enc.astype(jnp.bfloat16)
    for p in params["layers"]:
        x = decoder_layer(x, enc, kv_len, p, n_head)
    # final fc: d_model -> dec_voc_size (weight pre-padded to a lane multiple)
    logits = pallas_linear(x.reshape(-1, D), params["fc_w"], params["fc_b"],
                           out_dtype=jnp.float32, tn_t=512)
    logits = logits[:, :dec_voc_size]
    return logits.reshape(B, S, -1)


# ------------------------------ Param init ---------------------------------- #

def init_params(key, dec_voc_size, max_len, d_model, fnn_hidden, n_head, n_layer):
    d_head = d_model // n_head
    scale = 1.0 / math.sqrt(d_head)
    bf = lambda a: a.astype(jnp.bfloat16)

    def dense(k, din, dout):
        kw, kb = jax.random.split(k)
        lim = 1.0 / math.sqrt(din)
        return (jax.random.uniform(kw, (din, dout), jnp.float32, -lim, lim),
                jax.random.uniform(kb, (dout,), jnp.float32, -lim, lim))

    keys = jax.random.split(key, 2 + n_layer)
    params = {
        "tok_emb": jax.random.normal(keys[0], (dec_voc_size, d_model), jnp.float32) * 0.02,
        "pos_emb": sinusoidal_pos_encoding(max_len, d_model),
    }
    layers = []
    for li in range(n_layer):
        lk = jax.random.split(keys[2 + li], 10)
        wq, bq = dense(lk[0], d_model, d_model)
        wk, bk = dense(lk[1], d_model, d_model)
        wv, bv = dense(lk[2], d_model, d_model)
        wo, bo = dense(lk[3], d_model, d_model)
        cwq, cbq = dense(lk[4], d_model, d_model)
        cwk, cbk = dense(lk[5], d_model, d_model)
        cwv, cbv = dense(lk[6], d_model, d_model)
        cwo, cbo = dense(lk[7], d_model, d_model)
        w1, b1 = dense(lk[8], d_model, fnn_hidden)
        w2, b2 = dense(lk[9], fnn_hidden, d_model)
        # fold 1/sqrt(d_head) attention scale into the query projections
        wq, bq = wq * scale, bq * scale
        cwq, cbq = cwq * scale, cbq * scale
        layers.append(dict(
            self_wqkv=bf(jnp.concatenate([wq, wk, wv], axis=1)),
            self_bqkv=jnp.concatenate([bq, bk, bv], axis=0),
            self_wo=bf(wo), self_bo=bo,
            cross_wq=bf(cwq), cross_bq=cbq,
            cross_wkv=bf(jnp.concatenate([cwk, cwv], axis=1)),
            cross_bkv=jnp.concatenate([cbk, cbv], axis=0),
            cross_wo=bf(cwo), cross_bo=cbo,
            ffn_w1=bf(w1), ffn_b1=b1, ffn_w2=bf(w2), ffn_b2=b2,
            ln1_g=jnp.ones((d_model,), jnp.float32), ln1_b=jnp.zeros((d_model,), jnp.float32),
            ln2_g=jnp.ones((d_model,), jnp.float32), ln2_b=jnp.zeros((d_model,), jnp.float32),
            ln3_g=jnp.ones((d_model,), jnp.float32), ln3_b=jnp.zeros((d_model,), jnp.float32),
        ))
    params["layers"] = layers
    fw, fb = dense(keys[1], d_model, dec_voc_size)
    voc_pad = _round_up(dec_voc_size, 128)           # pre-pad once (no per-call pads)
    params["fc_w"] = bf(jnp.pad(fw, ((0, 0), (0, voc_pad - dec_voc_size))))
    params["fc_b"] = jnp.pad(fb, (0, voc_pad - dec_voc_size))
    return params


# --------------------------------- Main -------------------------------------- #

if __name__ == "__main__":
    # Small, module-consistent shapes.
    B, S_dec, S_enc = 2, 8, 8
    d_model, n_head, fnn_hidden = 32, 4, 64
    dec_voc_size, max_len, n_layer = 50, 16, 2

    key = jax.random.PRNGKey(0)
    k_par, k_tok, k_enc = jax.random.split(key, 3)

    params = init_params(k_par, dec_voc_size, max_len, d_model, fnn_hidden,
                         n_head, n_layer)

    dec_tokens = jax.random.randint(k_tok, (B, S_dec), 0, dec_voc_size, dtype=jnp.int32)
    enc = jax.random.normal(k_enc, (B, S_enc, d_model), jnp.float32)

    # t_mask: causal [B, 1, S_dec, S_dec]; s_mask: all-ones [B, 1, S_dec, S_enc]
    t_mask = jnp.tril(jnp.ones((S_dec, S_dec), jnp.float32))[None, None].repeat(B, axis=0)
    s_mask = jnp.ones((B, 1, S_dec, S_enc), jnp.float32)

    fwd = jax.jit(functools.partial(decoder_forward, n_head=n_head,
                                    dec_voc_size=dec_voc_size))
    out = fwd(params, dec_tokens, enc, t_mask, s_mask)
    out = jax.block_until_ready(out)
    assert out.shape == (B, S_dec, dec_voc_size)
    assert bool(jnp.all(jnp.isfinite(out)))
    print("KERNEL_OK")
</pallas_src>

<mosaic_0001>
module attributes {stable_mosaic.version = 11 : i64} {
  func.func @matmul_kernel(%arg0: i32, %arg1: i32, %arg2: i32, %arg3: memref<16x32xbf16, #tpu.memory_space<vmem>>, %arg4: memref<32x32xbf16, #tpu.memory_space<vmem>>, %arg5: memref<1x32xf32, #tpu.memory_space<vmem>>, %arg6: memref<16x32xbf16, #tpu.memory_space<vmem>>, %arg7: memref<16x32xf32, #tpu.memory_space<vmem>>) attributes {dimension_semantics = [#tpu.dimension_semantics<parallel>, #tpu.dimension_semantics<parallel>, #tpu.dimension_semantics<arbitrary>], iteration_bounds = array<i64: 1, 1, 1>, scalar_prefetch = 0 : i64, scratch_operands = 1 : i64, tpu.core_type = #tpu.core_type<tc>, window_params = [{transform_indices = @transform_0, window_bounds = array<i64: 16, 32>}, {transform_indices = @transform_1, window_bounds = array<i64: 32, 32>}, {transform_indices = @transform_2, window_bounds = array<i64: 1, 32>}, {transform_indices = @transform_3, window_bounds = array<i64: 16, 32>}]} {
    %c0_i32 = arith.constant 0 : i32
    %0 = arith.cmpi eq, %arg2, %c0_i32 : i32
    %1 = arith.extui %0 : i1 to i32
    %c0_i32_0 = arith.constant 0 : i32
    %2 = arith.cmpi ne, %1, %c0_i32_0 : i32
    scf.if %2 {
      %cst_10 = arith.constant 0.000000e+00 : f32
      %12 = vector.broadcast %cst_10 : f32 to vector<16x32xf32>
      %c0_11 = arith.constant 0 : index
      %c0_12 = arith.constant 0 : index
      %13 = vector.load %arg7[%c0_11, %c0_12] : memref<16x32xf32, #tpu.memory_space<vmem>>, vector<16x32xf32>
      tpu.vector_store %arg7[%c0_11, %c0_12], %12 {strides = array<i32>} : memref<16x32xf32, #tpu.memory_space<vmem>>, vector<16x32xf32>,
    } else {
    }
    %c0 = arith.constant 0 : index
    %c0_1 = arith.constant 0 : index
    %3 = vector.load %arg7[%c0, %c0_1] : memref<16x32xf32, #tpu.memory_space<vmem>>, vector<16x32xf32>
    %c0_2 = arith.constant 0 : index
    %c0_3 = arith.constant 0 : index
    %4 = vector.load %arg3[%c0_2, %c0_3] : memref<16x32xbf16, #tpu.memory_space<vmem>>, vector<16x32xbf16>
    %c0_4 = arith.constant 0 : index
    %c0_5 = arith.constant 0 : index
    %5 = vector.load %arg4[%c0_4, %c0_5] : memref<32x32xbf16, #tpu.memory_space<vmem>>, vector<32x32xbf16>
    %cst = arith.constant dense<0.000000e+00> : vector<16x32xf32>
    %6 = tpu.matmul %4, %5, %cst {dimension_numbers = #tpu.dot_dimension_numbers<[1], [0], [0], [1], [0, 0, 1, 1], [], []>} : vector<16x32xbf16>, vector<32x32xbf16>, vector<16x32xf32> -> vector<16x32xf32>
    %7 = arith.addf %3, %6 : vector<16x32xf32>
    %c0_6 = arith.constant 0 : index
    %c0_7 = arith.constant 0 : index
    %8 = vector.load %arg7[%c0_6, %c0_7] : memref<16x32xf32, #tpu.memory_space<vmem>>, vector<16x32xf32>
    tpu.vector_store %arg7[%c0_6, %c0_7], %7 {strides = array<i32>} : memref<16x32xf32, #tpu.memory_space<vmem>>, vector<16x32xf32>,
    %c0_i32_8 = arith.constant 0 : i32
    %9 = arith.cmpi eq, %arg2, %c0_i32_8 : i32
    %10 = arith.extui %9 : i1 to i32
    %c0_i32_9 = arith.constant 0 : i32
    %11 = arith.cmpi ne, %10, %c0_i32_9 : i32
    scf.if %11 {
      %c0_10 = arith.constant 0 : index
      %c0_11 = arith.constant 0 : index
      %12 = vector.load %arg7[%c0_10, %c0_11] : memref<16x32xf32, #tpu.memory_space<vmem>>, vector<16x32xf32>
      %c0_12 = arith.constant 0 : index
      %c0_13 = arith.constant 0 : index
      %13 = vector.load %arg5[%c0_12, %c0_13] : memref<1x32xf32, #tpu.memory_space<vmem>>, vector<1x32xf32>
      %14 = vector.broadcast %13 : vector<1x32xf32> to vector<16x32xf32>
      %15 = arith.addf %12, %14 : vector<16x32xf32>
      %16 = arith.truncf %15 : vector<16x32xf32> to vector<16x32xbf16>
      %c0_14 = arith.constant 0 : index
      %c0_15 = arith.constant 0 : index
      %17 = vector.load %arg6[%c0_14, %c0_15] : memref<16x32xbf16, #tpu.memory_space<vmem>>, vector<16x32xbf16>
      tpu.vector_store %arg6[%c0_14, %c0_15], %16 {strides = array<i32>} : memref<16x32xbf16, #tpu.memory_space<vmem>>, vector<16x32xbf16>,
    } else {
    }
    return
  }
  func.func @transform_0(%arg0: i32, %arg1: i32, %arg2: i32) -> (i32, i32) {
    %c0_i32 = arith.constant 0 : i32
    return %arg0, %arg2 : i32, i32
  }
  func.func @transform_1(%arg0: i32, %arg1: i32, %arg2: i32) -> (i32, i32) {
    %c0_i32 = arith.constant 0 : i32
    return %arg2, %arg1 : i32, i32
  }
  func.func @transform_2(%arg0: i32, %arg1: i32, %arg2: i32) -> (i32, i32) {
    %c0_i32 = arith.constant 0 : i32
    %c0_i32_0 = arith.constant 0 : i32
    return %c0_i32, %arg1 : i32, i32
  }
  func.func @transform_3(%arg0: i32, %arg1: i32, %arg2: i32) -> (i32, i32) {
    %c0_i32 = arith.constant 0 : i32
    return %arg0, %arg1 : i32, i32
  }
}

module attributes {stable_mosaic.version = 11 : i64} {
  func.func @matmul_kernel(%arg0: i32, %arg1: i32, %arg2: i32, %arg3: memref<16x32xbf16, #tpu.memory_space<vmem>>, %arg4: memref<32x96xbf16, #tpu.memory_space<vmem>>, %arg5: memref<1x96xf32, #tpu.memory_space<vmem>>, %arg6: memref<16x96xbf16, #tpu.memory_space<vmem>>, %arg7: memref<16x96xf32, #tpu.memory_space<vmem>>) attributes {dimension_semantics = [#tpu.dimension_semantics<parallel>, #tpu.dimension_semantics<parallel>, #tpu.dimension_semantics<arbitrary>], iteration_bounds = array<i64: 1, 1, 1>, scalar_prefetch = 0 : i64, scratch_operands = 1 : i64, tpu.core_type = #tpu.core_type<tc>, window_params = [{transform_indices = @transform_0, window_bounds = array<i64: 16, 32>}, {transform_indices = @transform_1, window_bounds = array<i64: 32, 96>}, {transform_indices = @transform_2, window_bounds = array<i64: 1, 96>}, {transform_indices = @transform_3, window_bounds = array<i64: 16, 96>}]} {
    %c0_i32 = arith.constant 0 : i32
    %0 = arith.cmpi eq, %arg2, %c0_i32 : i32
    %1 = arith.extui %0 : i1 to i32
    %c0_i32_0 = arith.constant 0 : i32
    %2 = arith.cmpi ne, %1, %c0_i32_0 : i32
    scf.if %2 {
      %cst_10 = arith.constant 0.000000e+00 : f32
      %12 = vector.broadcast %cst_10 : f32 to vector<16x96xf32>
      %c0_11 = arith.constant 0 : index
      %c0_12 = arith.constant 0 : index
      %13 = vector.load %arg7[%c0_11, %c0_12] : memref<16x96xf32, #tpu.memory_space<vmem>>, vector<16x96xf32>
      tpu.vector_store %arg7[%c0_11, %c0_12], %12 {strides = array<i32>} : memref<16x96xf32, #tpu.memory_space<vmem>>, vector<16x96xf32>,
    } else {
    }
    %c0 = arith.constant 0 : index
    %c0_1 = arith.constant 0 : index
    %3 = vector.load %arg7[%c0, %c0_1] : memref<16x96xf32, #tpu.memory_space<vmem>>, vector<16x96xf32>
    %c0_2 = arith.constant 0 : index
    %c0_3 = arith.constant 0 : index
    %4 = vector.load %arg3[%c0_2, %c0_3] : memref<16x32xbf16, #tpu.memory_space<vmem>>, vector<16x32xbf16>
    %c0_4 = arith.constant 0 : index
    %c0_5 = arith.constant 0 : index
    %5 = vector.load %arg4[%c0_4, %c0_5] : memref<32x96xbf16, #tpu.memory_space<vmem>>, vector<32x96xbf16>
    %cst = arith.constant dense<0.000000e+00> : vector<16x96xf32>
    %6 = tpu.matmul %4, %5, %cst {dimension_numbers = #tpu.dot_dimension_numbers<[1], [0], [0], [1], [0, 0, 1, 1], [], []>} : vector<16x32xbf16>, vector<32x96xbf16>, vector<16x96xf32> -> vector<16x96xf32>
    %7 = arith.addf %3, %6 : vector<16x96xf32>
    %c0_6 = arith.constant 0 : index
    %c0_7 = arith.constant 0 : index
    %8 = vector.load %arg7[%c0_6, %c0_7] : memref<16x96xf32, #tpu.memory_space<vmem>>, vector<16x96xf32>
    tpu.vector_store %arg7[%c0_6, %c0_7], %7 {strides = array<i32>} : memref<16x96xf32, #tpu.memory_space<vmem>>, vector<16x96xf32>,
    %c0_i32_8 = arith.constant 0 : i32
    %9 = arith.cmpi eq, %arg2, %c0_i32_8 : i32
    %10 = arith.extui %9 : i1 to i32
    %c0_i32_9 = arith.constant 0 : i32
    %11 = arith.cmpi ne, %10, %c0_i32_9 : i32
    scf.if %11 {
      %c0_10 = arith.constant 0 : index
      %c0_11 = arith.constant 0 : index
      %12 = vector.load %arg7[%c0_10, %c0_11] : memref<16x96xf32, #tpu.memory_space<vmem>>, vector<16x96xf32>
      %c0_12 = arith.constant 0 : index
      %c0_13 = arith.constant 0 : index
      %13 = vector.load %arg5[%c0_12, %c0_13] : memref<1x96xf32, #tpu.memory_space<vmem>>, vector<1x96xf32>
      %14 = vector.broadcast %13 : vector<1x96xf32> to vector<16x96xf32>
      %15 = arith.addf %12, %14 : vector<16x96xf32>
      %16 = arith.truncf %15 : vector<16x96xf32> to vector<16x96xbf16>
      %c0_14 = arith.constant 0 : index
      %c0_15 = arith.constant 0 : index
      %17 = vector.load %arg6[%c0_14, %c0_15] : memref<16x96xbf16, #tpu.memory_space<vmem>>, vector<16x96xbf16>
      tpu.vector_store %arg6[%c0_14, %c0_15], %16 {strides = array<i32>} : memref<16x96xbf16, #tpu.memory_space<vmem>>, vector<16x96xbf16>,
    } else {
    }
    return
  }
  func.func @transform_0(%arg0: i32, %arg1: i32, %arg2: i32) -> (i32, i32) {
    %c0_i32 = arith.constant 0 : i32
    return %arg0, %arg2 : i32, i32
  }
  func.func @transform_1(%arg0: i32, %arg1: i32, %arg2: i32) -> (i32, i32) {
    %c0_i32 = arith.constant 0 : i32
    return %arg2, %arg1 : i32, i32
  }
  func.func @transform_2(%arg0: i32, %arg1: i32, %arg2: i32) -> (i32, i32) {
    %c0_i32 = arith.constant 0 : i32
    %c0_i32_0 = arith.constant 0 : i32
    return %c0_i32, %arg1 : i32, i32
  }
  func.func @transform_3(%arg0: i32, %arg1: i32, %arg2: i32) -> (i32, i32) {
    %c0_i32 = arith.constant 0 : i32
    return %arg0, %arg1 : i32, i32
  }
}

module attributes {stable_mosaic.version = 11 : i64} {
  func.func @matmul_residual_ln_kernel(%arg0: i32, %arg1: i32, %arg2: memref<16x32xbf16, #tpu.memory_space<vmem>>, %arg3: memref<32x32xbf16, #tpu.memory_space<vmem>>, %arg4: memref<1x32xf32, #tpu.memory_space<vmem>>, %arg5: memref<16x32xbf16, #tpu.memory_space<vmem>>, %arg6: memref<1x32xf32, #tpu.memory_space<vmem>>, %arg7: memref<1x32xf32, #tpu.memory_space<vmem>>, %arg8: memref<16x32xbf16, #tpu.memory_space<vmem>>, %arg9: memref<16x32xf32, #tpu.memory_space<vmem>>) attributes {dimension_semantics = [#tpu.dimension_semantics<parallel>, #tpu.dimension_semantics<arbitrary>], iteration_bounds = array<i64: 1, 1>, scalar_prefetch = 0 : i64, scratch_operands = 1 : i64, tpu.core_type = #tpu.core_type<tc>, window_params = [{transform_indices = @transform_0, window_bounds = array<i64: 16, 32>}, {transform_indices = @transform_1, window_bounds = array<i64: 32, 32>}, {pipeline_mode = #tpu.pipeline_mode<synchronous>, transform_indices = @transform_2, window_bounds = array<i64: 1, 32>}, {transform_indices = @transform_3, window_bounds = array<i64: 16, 32>}, {pipeline_mode = #tpu.pipeline_mode<synchronous>, transform_indices = @transform_4, window_bounds = array<i64: 1, 32>}, {pipeline_mode = #tpu.pipeline_mode<synchronous>, transform_indices = @transform_5, window_bounds = array<i64: 1, 32>}, {transform_indices = @transform_6, window_bounds = array<i64: 16, 32>}]} {
    %c0_i32 = arith.constant 0 : i32
    %0 = arith.cmpi eq, %arg1, %c0_i32 : i32
    %1 = arith.extui %0 : i1 to i32
    %c0_i32_0 = arith.constant 0 : i32
    %2 = arith.cmpi ne, %1, %c0_i32_0 : i32
    scf.if %2 {
      %cst_10 = arith.constant 0.000000e+00 : f32
      %12 = vector.broadcast %cst_10 : f32 to vector<16x32xf32>
      %c0_11 = arith.constant 0 : index
      %c0_12 = arith.constant 0 : index
      %13 = vector.load %arg9[%c0_11, %c0_12] : memref<16x32xf32, #tpu.memory_space<vmem>>, vector<16x32xf32>
      tpu.vector_store %arg9[%c0_11, %c0_12], %12 {strides = array<i32>} : memref<16x32xf32, #tpu.memory_space<vmem>>, vector<16x32xf32>,
    } else {
    }
    %c0 = arith.constant 0 : index
    %c0_1 = arith.constant 0 : index
    %3 = vector.load %arg9[%c0, %c0_1] : memref<16x32xf32, #tpu.memory_space<vmem>>, vector<16x32xf32>
    %c0_2 = arith.constant 0 : index
    %c0_3 = arith.constant 0 : index
    %4 = vector.load %arg2[%c0_2, %c0_3] : memref<16x32xbf16, #tpu.memory_space<vmem>>, vector<16x32xbf16>
    %c0_4 = arith.constant 0 : index
    %c0_5 = arith.constant 0 : index
    %5 = vector.load %arg3[%c0_4, %c0_5] : memref<32x32xbf16, #tpu.memory_space<vmem>>, vector<32x32xbf16>
    %cst = arith.constant dense<0.000000e+00> : vector<16x32xf32>
    %6 = tpu.matmul %4, %5, %cst {dimension_numbers = #tpu.dot_dimension_numbers<[1], [0], [0], [1], [0, 0, 1, 1], [], []>} : vector<16x32xbf16>, vector<32x32xbf16>, vector<16x32xf32> -> vector<16x32xf32>
    %7 = arith.addf %3, %6 : vector<16x32xf32>
    %c0_6 = arith.constant 0 : index
    %c0_7 = arith.constant 0 : index
    %8 = vector.load %arg9[%c0_6, %c0_7] : memref<16x32xf32, #tpu.memory_space<vmem>>, vector<16x32xf32>
    tpu.vector_store %arg9[%c0_6, %c0_7], %7 {strides = array<i32>} : memref<16x32xf32, #tpu.memory_space<vmem>>, vector<16x32xf32>,
    %c0_i32_8 = arith.constant 0 : i32
    %9 = arith.cmpi eq, %arg1, %c0_i32_8 : i32
    %10 = arith.extui %9 : i1 to i32
    %c0_i32_9 = arith.constant 0 : i32
    %11 = arith.cmpi ne, %10, %c0_i32_9 : i32
    scf.if %11 {
      %c0_10 = arith.constant 0 : index
      %c0_11 = arith.constant 0 : index
      %12 = vector.load %arg9[%c0_10, %c0_11] : memref<16x32xf32, #tpu.memory_space<vmem>>, vector<16x32xf32>
      %c0_12 = arith.constant 0 : index
      %c0_13 = arith.constant 0 : index
      %13 = vector.load %arg4[%c0_12, %c0_13] : memref<1x32xf32, #tpu.memory_space<vmem>>, vector<1x32xf32>
      %14 = vector.broadcast %13 : vector<1x32xf32> to vector<16x32xf32>
      %15 = arith.addf %12, %14 : vector<16x32xf32>
      %c0_14 = arith.constant 0 : index
      %c0_15 = arith.constant 0 : index
      %16 = vector.load %arg5[%c0_14, %c0_15] : memref<16x32xbf16, #tpu.memory_space<vmem>>, vector<16x32xbf16>
      %17 = arith.extf %16 : vector<16x32xbf16> to vector<16x32xf32>
      %18 = arith.addf %15, %17 : vector<16x32xf32>
      %c0_16 = arith.constant 0 : index
      %c0_17 = arith.constant 0 : index
      %19 = vector.load %arg6[%c0_16, %c0_17] : memref<1x32xf32, #tpu.memory_space<vmem>>, vector<1x32xf32>
      %c0_18 = arith.constant 0 : index
      %c0_19 = arith.constant 0 : index
      %20 = vector.load %arg7[%c0_18, %c0_19] : memref<1x32xf32, #tpu.memory_space<vmem>>, vector<1x32xf32>
      %cst_20 = arith.constant dense<0.000000e+00> : vector<16xf32>
      %21 = vector.multi_reduction <add>, %18, %cst_20 [1] : vector<16x32xf32> to vector<16xf32>
      %22 = vector.shape_cast %21 : vector<16xf32> to vector<16x1xf32>
      %cst_21 = arith.constant 3.200000e+01 : f32
      %23 = vector.broadcast %cst_21 : f32 to vector<16x1xf32>
      %24 = arith.divf %22, %23 : vector<16x1xf32>
      %25 = arith.mulf %18, %18 : vector<16x32xf32>
      %cst_22 = arith.constant dense<0.000000e+00> : vector<16xf32>
      %26 = vector.multi_reduction <add>, %25, %cst_22 [1] : vector<16x32xf32> to vector<16xf32>
      %27 = vector.shape_cast %26 : vector<16xf32> to vector<16x1xf32>
      %cst_23 = arith.constant 3.200000e+01 : f32
      %28 = vector.broadcast %cst_23 : f32 to vector<16x1xf32>
      %29 = arith.divf %27, %28 : vector<16x1xf32>
      %30 = arith.mulf %24, %24 : vector<16x1xf32>
      %31 = arith.subf %29, %30 : vector<16x1xf32>
      %cst_24 = arith.constant 0.000000e+00 : f32
      %32 = vector.broadcast %cst_24 : f32 to vector<16x1xf32>
      %33 = arith.maximumf %31, %32 : vector<16x1xf32>
      %34 = vector.broadcast %24 : vector<16x1xf32> to vector<16x32xf32>
      %35 = arith.subf %18, %34 : vector<16x32xf32>
      %cst_25 = arith.constant 9.99999974E-6 : f32
      %36 = vector.broadcast %cst_25 : f32 to vector<16x1xf32>
      %37 = arith.addf %33, %36 : vector<16x1xf32>
      %38 = math.rsqrt %37 : vector<16x1xf32>
      %39 = vector.broadcast %38 : vector<16x1xf32> to vector<16x32xf32>
      %40 = arith.mulf %35, %39 : vector<16x32xf32>
      %41 = vector.broadcast %19 : vector<1x32xf32> to vector<16x32xf32>
      %42 = arith.mulf %40, %41 : vector<16x32xf32>
      %43 = vector.broadcast %20 : vector<1x32xf32> to vector<16x32xf32>
      %44 = arith.addf %42, %43 : vector<16x32xf32>
      %45 = arith.truncf %44 : vector<16x32xf32> to vector<16x32xbf16>
      %c0_26 = arith.constant 0 : index
      %c0_27 = arith.constant 0 : index
      %46 = vector.load %arg8[%c0_26, %c0_27] : memref<16x32xbf16, #tpu.memory_space<vmem>>, vector<16x32xbf16>
      tpu.vector_store %arg8[%c0_26, %c0_27], %45 {strides = array<i32>} : memref<16x32xbf16, #tpu.memory_space<vmem>>, vector<16x32xbf16>,
    } else {
    }
    return
  }
  func.func @transform_0(%arg0: i32, %arg1: i32) -> (i32, i32) {
    %c0_i32 = arith.constant 0 : i32
    return %arg0, %arg1 : i32, i32
  }
  func.func @transform_1(%arg0: i32, %arg1: i32) -> (i32, i32) {
    %c0_i32 = arith.constant 0 : i32
    %c0_i32_0 = arith.constant 0 : i32
    return %arg1, %c0_i32 : i32, i32
  }
  func.func @transform_2(%arg0: i32, %arg1: i32) -> (i32, i32) {
    %c0_i32 = arith.constant 0 : i32
    %c0_i32_0 = arith.constant 0 : i32
    %c0_i32_1 = arith.constant 0 : i32
    return %c0_i32, %c0_i32_0 : i32, i32
  }
  func.func @transform_3(%arg0: i32, %arg1: i32) -> (i32, i32) {
    %c0_i32 = arith.constant 0 : i32
    %c0_i32_0 = arith.constant 0 : i32
    return %arg0, %c0_i32 : i32, i32
  }
  func.func @transform_4(%arg0: i32, %arg1: i32) -> (i32, i32) {
    %c0_i32 = arith.constant 0 : i32
    %c0_i32_0 = arith.constant 0 : i32
    %c0_i32_1 = arith.constant 0 : i32
    return %c0_i32, %c0_i32_0 : i32, i32
  }
  func.func @transform_5(%arg0: i32, %arg1: i32) -> (i32, i32) {
    %c0_i32 = arith.constant 0 : i32
    %c0_i32_0 = arith.constant 0 : i32
    %c0_i32_1 = arith.constant 0 : i32
    return %c0_i32, %c0_i32_0 : i32, i32
  }
  func.func @transform_6(%arg0: i32, %arg1: i32) -> (i32, i32) {
    %c0_i32 = arith.constant 0 : i32
    %c0_i32_0 = arith.constant 0 : i32
    return %arg0, %c0_i32 : i32, i32
  }
}

module attributes {stable_mosaic.version = 11 : i64} {
  func.func @mha_kernel(%arg0: i32, %arg1: i32, %arg2: i32, %arg3: memref<1x1x8x8xbf16, #tpu.memory_space<vmem>>, %arg4: memref<1x1x8x8xbf16, #tpu.memory_space<vmem>>, %arg5: memref<1x1x8x8xbf16, #tpu.memory_space<vmem>>, %arg6: memref<1x1x8x8xbf16, #tpu.memory_space<vmem>>) attributes {dimension_semantics = [#tpu.dimension_semantics<parallel>, #tpu.dimension_semantics<parallel>, #tpu.dimension_semantics<arbitrary>], iteration_bounds = array<i64: 2, 4, 1>, scalar_prefetch = 0 : i64, scratch_operands = 0 : i64, tpu.core_type = #tpu.core_type<tc>, window_params = [{transform_indices = @transform_0, window_bounds = array<i64: 1, 1, 8, 8>}, {transform_indices = @transform_1, window_bounds = array<i64: 1, 1, 8, 8>}, {transform_indices = @transform_2, window_bounds = array<i64: 1, 1, 8, 8>}, {transform_indices = @transform_3, window_bounds = array<i64: 1, 1, 8, 8>}]} {
    %c0 = arith.constant 0 : index
    %c0_0 = arith.constant 0 : index
    %c0_1 = arith.constant 0 : index
    %c0_2 = arith.constant 0 : index
    %0 = vector.load %arg3[%c0, %c0_0, %c0_1, %c0_2] : memref<1x1x8x8xbf16, #tpu.memory_space<vmem>>, vector<1x1x8x8xbf16>
    %1 = vector.shape_cast %0 : vector<1x1x8x8xbf16> to vector<8x8xbf16>
    %c0_3 = arith.constant 0 : index
    %c0_4 = arith.constant 0 : index
    %c0_5 = arith.constant 0 : index
    %c0_6 = arith.constant 0 : index
    %2 = vector.load %arg4[%c0_3, %c0_4, %c0_5, %c0_6] : memref<1x1x8x8xbf16, #tpu.memory_space<vmem>>, vector<1x1x8x8xbf16>
    %3 = vector.shape_cast %2 : vector<1x1x8x8xbf16> to vector<8x8xbf16>
    %cst = arith.constant dense<0.000000e+00> : vector<8x8xf32>
    %4 = tpu.matmul %1, %3, %cst {dimension_numbers = #tpu.dot_dimension_numbers<[1], [1], [0], [0], [0, 0, 1, 0], [], []>} : vector<8x8xbf16>, vector<8x8xbf16>, vector<8x8xf32> -> vector<8x8xf32>
    %c8_i32 = arith.constant 8 : i32
    %5 = arith.muli %arg2, %c8_i32 : i32
    %6 = tpu.iota {dimensions = array<i32: 0>} : vector<8x8xi32>
    %7 = vector.broadcast %5 : i32 to vector<8x8xi32>
    %8 = arith.addi %7, %6 : vector<8x8xi32>
    %9 = tpu.iota {dimensions = array<i32: 1>} : vector<8x8xi32>
    %10 = arith.cmpi sle, %9, %8 : vector<8x8xi32>
    %cst_7 = arith.constant -1.000000e+09 : f32
    %11 = vector.broadcast %cst_7 : f32 to vector<8x8xf32>
    %12 = arith.select %10, %4, %11 : vector<8x8xi1>, vector<8x8xf32>
    %cst_8 = arith.constant dense<0xFF800000> : vector<8xf32>
    %13 = vector.multi_reduction <maximumf>, %12, %cst_8 [1] : vector<8x8xf32> to vector<8xf32>
    %14 = vector.shape_cast %13 : vector<8xf32> to vector<8x1xf32>
    %15 = vector.broadcast %14 : vector<8x1xf32> to vector<8x8xf32>
    %16 = arith.subf %12, %15 : vector<8x8xf32>
    %17 = math.exp %16 : vector<8x8xf32>
    %cst_9 = arith.constant dense<0.000000e+00> : vector<8xf32>
    %18 = vector.multi_reduction <add>, %17, %cst_9 [1] : vector<8x8xf32> to vector<8xf32>
    %19 = vector.shape_cast %18 : vector<8xf32> to vector<8x1xf32>
    %20 = tpu.reciprocal %19 {approx = true} : vector<8x1xf32> -> vector<8x1xf32>
    %21 = vector.broadcast %20 : vector<8x1xf32> to vector<8x8xf32>
    %22 = arith.mulf %17, %21 : vector<8x8xf32>
    %23 = arith.truncf %22 : vector<8x8xf32> to vector<8x8xbf16>
    %c0_10 = arith.constant 0 : index
    %c0_11 = arith.constant 0 : index
    %c0_12 = arith.constant 0 : index
    %c0_13 = arith.constant 0 : index
    %24 = vector.load %arg5[%c0_10, %c0_11, %c0_12, %c0_13] : memref<1x1x8x8xbf16, #tpu.memory_space<vmem>>, vector<1x1x8x8xbf16>
    %25 = vector.shape_cast %24 : vector<1x1x8x8xbf16> to vector<8x8xbf16>
    %cst_14 = arith.constant dense<0.000000e+00> : vector<8x8xf32>
    %26 = tpu.matmul %23, %25, %cst_14 {dimension_numbers = #tpu.dot_dimension_numbers<[1], [0], [0], [1], [0, 0, 1, 1], [], []>} : vector<8x8xbf16>, vector<8x8xbf16>, vector<8x8xf32> -> vector<8x8xf32>
    %27 = arith.truncf %26 : vector<8x8xf32> to vector<8x8xbf16>
    %c0_15 = arith.constant 0 : index
    %c0_16 = arith.constant 0 : index
    %c0_17 = arith.constant 0 : index
    %c0_18 = arith.constant 0 : index
    %28 = vector.load %arg6[%c0_15, %c0_16, %c0_17, %c0_18] : memref<1x1x8x8xbf16, #tpu.memory_space<vmem>>, vector<1x1x8x8xbf16>
    %29 = vector.shape_cast %28 : vector<1x1x8x8xbf16> to vector<8x8xbf16>
    %30 = vector.shape_cast %27 : vector<8x8xbf16> to vector<1x1x8x8xbf16>
    tpu.vector_store %arg6[%c0_15, %c0_16, %c0_17, %c0_18], %30 {strides = array<i32>} : memref<1x1x8x8xbf16, #tpu.memory_space<vmem>>, vector<1x1x8x8xbf16>,
    return
  }
  func.func @transform_0(%arg0: i32, %arg1: i32, %arg2: i32) -> (i32, i32, i32, i32) {
    %c0_i32 = arith.constant 0 : i32
    %c0_i32_0 = arith.constant 0 : i32
    return %arg0, %arg1, %arg2, %c0_i32 : i32, i32, i32, i32
  }
  func.func @transform_1(%arg0: i32, %arg1: i32, %arg2: i32) -> (i32, i32, i32, i32) {
    %c0_i32 = arith.constant 0 : i32
    %c0_i32_0 = arith.constant 0 : i32
    %c0_i32_1 = arith.constant 0 : i32
    return %arg0, %arg1, %c0_i32, %c0_i32_0 : i32, i32, i32, i32
  }
  func.func @transform_2(%arg0: i32, %arg1: i32, %arg2: i32) -> (i32, i32, i32, i32) {
    %c0_i32 = arith.constant 0 : i32
    %c0_i32_0 = arith.constant 0 : i32
    %c0_i32_1 = arith.constant 0 : i32
    return %arg0, %arg1, %c0_i32, %c0_i32_0 : i32, i32, i32, i32
  }
  func.func @transform_3(%arg0: i32, %arg1: i32, %arg2: i32) -> (i32, i32, i32, i32) {
    %c0_i32 = arith.constant 0 : i32
    %c0_i32_0 = arith.constant 0 : i32
    return %arg0, %arg1, %arg2, %c0_i32 : i32, i32, i32, i32
  }
}

module attributes {stable_mosaic.version = 11 : i64} {
  func.func @matmul_kernel(%arg0: i32, %arg1: i32, %arg2: i32, %arg3: memref<16x32xbf16, #tpu.memory_space<vmem>>, %arg4: memref<32x64xbf16, #tpu.memory_space<vmem>>, %arg5: memref<1x64xf32, #tpu.memory_space<vmem>>, %arg6: memref<16x64xbf16, #tpu.memory_space<vmem>>, %arg7: memref<16x64xf32, #tpu.memory_space<vmem>>) attributes {dimension_semantics = [#tpu.dimension_semantics<parallel>, #tpu.dimension_semantics<parallel>, #tpu.dimension_semantics<arbitrary>], iteration_bounds = array<i64: 1, 1, 1>, scalar_prefetch = 0 : i64, scratch_operands = 1 : i64, tpu.core_type = #tpu.core_type<tc>, window_params = [{transform_indices = @transform_0, window_bounds = array<i64: 16, 32>}, {transform_indices = @transform_1, window_bounds = array<i64: 32, 64>}, {transform_indices = @transform_2, window_bounds = array<i64: 1, 64>}, {transform_indices = @transform_3, window_bounds = array<i64: 16, 64>}]} {
    %c0_i32 = arith.constant 0 : i32
    %0 = arith.cmpi eq, %arg2, %c0_i32 : i32
    %1 = arith.extui %0 : i1 to i32
    %c0_i32_0 = arith.constant 0 : i32
    %2 = arith.cmpi ne, %1, %c0_i32_0 : i32
    scf.if %2 {
      %cst_10 = arith.constant 0.000000e+00 : f32
      %12 = vector.broadcast %cst_10 : f32 to vector<16x64xf32>
      %c0_11 = arith.constant 0 : index
      %c0_12 = arith.constant 0 : index
      %13 = vector.load %arg7[%c0_11, %c0_12] : memref<16x64xf32, #tpu.memory_space<vmem>>, vector<16x64xf32>
      tpu.vector_store %arg7[%c0_11, %c0_12], %12 {strides = array<i32>} : memref<16x64xf32, #tpu.memory_space<vmem>>, vector<16x64xf32>,
    } else {
    }
    %c0 = arith.constant 0 : index
    %c0_1 = arith.constant 0 : index
    %3 = vector.load %arg7[%c0, %c0_1] : memref<16x64xf32, #tpu.memory_space<vmem>>, vector<16x64xf32>
    %c0_2 = arith.constant 0 : index
    %c0_3 = arith.constant 0 : index
    %4 = vector.load %arg3[%c0_2, %c0_3] : memref<16x32xbf16, #tpu.memory_space<vmem>>, vector<16x32xbf16>
    %c0_4 = arith.constant 0 : index
    %c0_5 = arith.constant 0 : index
    %5 = vector.load %arg4[%c0_4, %c0_5] : memref<32x64xbf16, #tpu.memory_space<vmem>>, vector<32x64xbf16>
    %cst = arith.constant dense<0.000000e+00> : vector<16x64xf32>
    %6 = tpu.matmul %4, %5, %cst {dimension_numbers = #tpu.dot_dimension_numbers<[1], [0], [0], [1], [0, 0, 1, 1], [], []>} : vector<16x32xbf16>, vector<32x64xbf16>, vector<16x64xf32> -> vector<16x64xf32>
    %7 = arith.addf %3, %6 : vector<16x64xf32>
    %c0_6 = arith.constant 0 : index
    %c0_7 = arith.constant 0 : index
    %8 = vector.load %arg7[%c0_6, %c0_7] : memref<16x64xf32, #tpu.memory_space<vmem>>, vector<16x64xf32>
    tpu.vector_store %arg7[%c0_6, %c0_7], %7 {strides = array<i32>} : memref<16x64xf32, #tpu.memory_space<vmem>>, vector<16x64xf32>,
    %c0_i32_8 = arith.constant 0 : i32
    %9 = arith.cmpi eq, %arg2, %c0_i32_8 : i32
    %10 = arith.extui %9 : i1 to i32
    %c0_i32_9 = arith.constant 0 : i32
    %11 = arith.cmpi ne, %10, %c0_i32_9 : i32
    scf.if %11 {
      %c0_10 = arith.constant 0 : index
      %c0_11 = arith.constant 0 : index
      %12 = vector.load %arg7[%c0_10, %c0_11] : memref<16x64xf32, #tpu.memory_space<vmem>>, vector<16x64xf32>
      %c0_12 = arith.constant 0 : index
      %c0_13 = arith.constant 0 : index
      %13 = vector.load %arg5[%c0_12, %c0_13] : memref<1x64xf32, #tpu.memory_space<vmem>>, vector<1x64xf32>
      %14 = vector.broadcast %13 : vector<1x64xf32> to vector<16x64xf32>
      %15 = arith.addf %12, %14 : vector<16x64xf32>
      %16 = arith.truncf %15 : vector<16x64xf32> to vector<16x64xbf16>
      %c0_14 = arith.constant 0 : index
      %c0_15 = arith.constant 0 : index
      %17 = vector.load %arg6[%c0_14, %c0_15] : memref<16x64xbf16, #tpu.memory_space<vmem>>, vector<16x64xbf16>
      tpu.vector_store %arg6[%c0_14, %c0_15], %16 {strides = array<i32>} : memref<16x64xbf16, #tpu.memory_space<vmem>>, vector<16x64xbf16>,
    } else {
    }
    return
  }
  func.func @transform_0(%arg0: i32, %arg1: i32, %arg2: i32) -> (i32, i32) {
    %c0_i32 = arith.constant 0 : i32
    return %arg0, %arg2 : i32, i32
  }
  func.func @transform_1(%arg0: i32, %arg1: i32, %arg2: i32) -> (i32, i32) {
    %c0_i32 = arith.constant 0 : i32
    return %arg2, %arg1 : i32, i32
  }
  func.func @transform_2(%arg0: i32, %arg1: i32, %arg2: i32) -> (i32, i32) {
    %c0_i32 = arith.constant 0 : i32
    %c0_i32_0 = arith.constant 0 : i32
    return %c0_i32, %arg1 : i32, i32
  }
  func.func @transform_3(%arg0: i32, %arg1: i32, %arg2: i32) -> (i32, i32) {
    %c0_i32 = arith.constant 0 : i32
    return %arg0, %arg1 : i32, i32
  }
}

module attributes {stable_mosaic.version = 11 : i64} {
  func.func @mha_kernel(%arg0: i32, %arg1: i32, %arg2: i32, %arg3: memref<2xi32, #tpu.memory_space<smem>>, %arg4: memref<1x1x8x8xbf16, #tpu.memory_space<vmem>>, %arg5: memref<1x1x8x8xbf16, #tpu.memory_space<vmem>>, %arg6: memref<1x1x8x8xbf16, #tpu.memory_space<vmem>>, %arg7: memref<1x1x8x8xbf16, #tpu.memory_space<vmem>>) attributes {dimension_semantics = [#tpu.dimension_semantics<parallel>, #tpu.dimension_semantics<parallel>, #tpu.dimension_semantics<arbitrary>], iteration_bounds = array<i64: 2, 4, 1>, scalar_prefetch = 1 : i64, scratch_operands = 0 : i64, tpu.core_type = #tpu.core_type<tc>, window_params = [{transform_indices = @transform_0, window_bounds = array<i64: 1, 1, 8, 8>}, {transform_indices = @transform_1, window_bounds = array<i64: 1, 1, 8, 8>}, {transform_indices = @transform_2, window_bounds = array<i64: 1, 1, 8, 8>}, {transform_indices = @transform_3, window_bounds = array<i64: 1, 1, 8, 8>}]} {
    %c0 = arith.constant 0 : index
    %c0_0 = arith.constant 0 : index
    %c0_1 = arith.constant 0 : index
    %c0_2 = arith.constant 0 : index
    %0 = vector.load %arg4[%c0, %c0_0, %c0_1, %c0_2] : memref<1x1x8x8xbf16, #tpu.memory_space<vmem>>, vector<1x1x8x8xbf16>
    %1 = vector.shape_cast %0 : vector<1x1x8x8xbf16> to vector<8x8xbf16>
    %c0_3 = arith.constant 0 : index
    %c0_4 = arith.constant 0 : index
    %c0_5 = arith.constant 0 : index
    %c0_6 = arith.constant 0 : index
    %2 = vector.load %arg5[%c0_3, %c0_4, %c0_5, %c0_6] : memref<1x1x8x8xbf16, #tpu.memory_space<vmem>>, vector<1x1x8x8xbf16>
    %3 = vector.shape_cast %2 : vector<1x1x8x8xbf16> to vector<8x8xbf16>
    %cst = arith.constant dense<0.000000e+00> : vector<8x8xf32>
    %4 = tpu.matmul %1, %3, %cst {dimension_numbers = #tpu.dot_dimension_numbers<[1], [1], [0], [0], [0, 0, 1, 0], [], []>} : vector<8x8xbf16>, vector<8x8xbf16>, vector<8x8xf32> -> vector<8x8xf32>
    %5 = tpu.iota {dimensions = array<i32: 1>} : vector<8x8xi32>
    %6 = arith.index_cast %arg0 : i32 to index
    %7 = memref.load %arg3[%6] : memref<2xi32, #tpu.memory_space<smem>>
    %8 = vector.broadcast %7 : i32 to vector<8x8xi32>
    %9 = arith.cmpi slt, %5, %8 : vector<8x8xi32>
    %cst_7 = arith.constant -1.000000e+09 : f32
    %10 = vector.broadcast %cst_7 : f32 to vector<8x8xf32>
    %11 = arith.select %9, %4, %10 : vector<8x8xi1>, vector<8x8xf32>
    %cst_8 = arith.constant dense<0xFF800000> : vector<8xf32>
    %12 = vector.multi_reduction <maximumf>, %11, %cst_8 [1] : vector<8x8xf32> to vector<8xf32>
    %13 = vector.shape_cast %12 : vector<8xf32> to vector<8x1xf32>
    %14 = vector.broadcast %13 : vector<8x1xf32> to vector<8x8xf32>
    %15 = arith.subf %11, %14 : vector<8x8xf32>
    %16 = math.exp %15 : vector<8x8xf32>
    %cst_9 = arith.constant dense<0.000000e+00> : vector<8xf32>
    %17 = vector.multi_reduction <add>, %16, %cst_9 [1] : vector<8x8xf32> to vector<8xf32>
    %18 = vector.shape_cast %17 : vector<8xf32> to vector<8x1xf32>
    %19 = tpu.reciprocal %18 {approx = true} : vector<8x1xf32> -> vector<8x1xf32>
    %20 = vector.broadcast %19 : vector<8x1xf32> to vector<8x8xf32>
    %21 = arith.mulf %16, %20 : vector<8x8xf32>
    %22 = arith.truncf %21 : vector<8x8xf32> to vector<8x8xbf16>
    %c0_10 = arith.constant 0 : index
    %c0_11 = arith.constant 0 : index
    %c0_12 = arith.constant 0 : index
    %c0_13 = arith.constant 0 : index
    %23 = vector.load %arg6[%c0_10, %c0_11, %c0_12, %c0_13] : memref<1x1x8x8xbf16, #tpu.memory_space<vmem>>, vector<1x1x8x8xbf16>
    %24 = vector.shape_cast %23 : vector<1x1x8x8xbf16> to vector<8x8xbf16>
    %cst_14 = arith.constant dense<0.000000e+00> : vector<8x8xf32>
    %25 = tpu.matmul %22, %24, %cst_14 {dimension_numbers = #tpu.dot_dimension_numbers<[1], [0], [0], [1], [0, 0, 1, 1], [], []>} : vector<8x8xbf16>, vector<8x8xbf16>, vector<8x8xf32> -> vector<8x8xf32>
    %26 = arith.truncf %25 : vector<8x8xf32> to vector<8x8xbf16>
    %c0_15 = arith.constant 0 : index
    %c0_16 = arith.constant 0 : index
    %c0_17 = arith.constant 0 : index
    %c0_18 = arith.constant 0 : index
    %27 = vector.load %arg7[%c0_15, %c0_16, %c0_17, %c0_18] : memref<1x1x8x8xbf16, #tpu.memory_space<vmem>>, vector<1x1x8x8xbf16>
    %28 = vector.shape_cast %27 : vector<1x1x8x8xbf16> to vector<8x8xbf16>
    %29 = vector.shape_cast %26 : vector<8x8xbf16> to vector<1x1x8x8xbf16>
    tpu.vector_store %arg7[%c0_15, %c0_16, %c0_17, %c0_18], %29 {strides = array<i32>} : memref<1x1x8x8xbf16, #tpu.memory_space<vmem>>, vector<1x1x8x8xbf16>,
    return
  }
  func.func @transform_0(%arg0: i32, %arg1: i32, %arg2: i32, %arg3: memref<2xi32, #tpu.memory_space<smem>>) -> (i32, i32, i32, i32) {
    %c0_i32 = arith.constant 0 : i32
    %c0_i32_0 = arith.constant 0 : i32
    return %arg0, %arg1, %arg2, %c0_i32 : i32, i32, i32, i32
  }
  func.func @transform_1(%arg0: i32, %arg1: i32, %arg2: i32, %arg3: memref<2xi32, #tpu.memory_space<smem>>) -> (i32, i32, i32, i32) {
    %c0_i32 = arith.constant 0 : i32
    %c0_i32_0 = arith.constant 0 : i32
    %c0_i32_1 = arith.constant 0 : i32
    return %arg0, %arg1, %c0_i32, %c0_i32_0 : i32, i32, i32, i32
  }
  func.func @transform_2(%arg0: i32, %arg1: i32, %arg2: i32, %arg3: memref<2xi32, #tpu.memory_space<smem>>) -> (i32, i32, i32, i32) {
    %c0_i32 = arith.constant 0 : i32
    %c0_i32_0 = arith.constant 0 : i32
    %c0_i32_1 = arith.constant 0 : i32
    return %arg0, %arg1, %c0_i32, %c0_i32_0 : i32, i32, i32, i32
  }
  func.func @transform_3(%arg0: i32, %arg1: i32, %arg2: i32, %arg3: memref<2xi32, #tpu.memory_space<smem>>) -> (i32, i32, i32, i32) {
    %c0_i32 = arith.constant 0 : i32
    %c0_i32_0 = arith.constant 0 : i32
    return %arg0, %arg1, %arg2, %c0_i32 : i32, i32, i32, i32
  }
}

module attributes {stable_mosaic.version = 11 : i64} {
  func.func @ffn_residual_ln_kernel(%arg0: i32, %arg1: i32, %arg2: memref<16x32xbf16, #tpu.memory_space<vmem>>, %arg3: memref<32x64xbf16, #tpu.memory_space<vmem>>, %arg4: memref<1x64xf32, #tpu.memory_space<vmem>>, %arg5: memref<64x32xbf16, #tpu.memory_space<vmem>>, %arg6: memref<1x32xf32, #tpu.memory_space<vmem>>, %arg7: memref<1x32xf32, #tpu.memory_space<vmem>>, %arg8: memref<1x32xf32, #tpu.memory_space<vmem>>, %arg9: memref<16x32xbf16, #tpu.memory_space<vmem>>, %arg10: memref<16x32xf32, #tpu.memory_space<vmem>>) attributes {dimension_semantics = [#tpu.dimension_semantics<parallel>, #tpu.dimension_semantics<arbitrary>], iteration_bounds = array<i64: 1, 1>, scalar_prefetch = 0 : i64, scratch_operands = 1 : i64, tpu.core_type = #tpu.core_type<tc>, window_params = [{transform_indices = @transform_0, window_bounds = array<i64: 16, 32>}, {transform_indices = @transform_1, window_bounds = array<i64: 32, 64>}, {transform_indices = @transform_2, window_bounds = array<i64: 1, 64>}, {transform_indices = @transform_3, window_bounds = array<i64: 64, 32>}, {pipeline_mode = #tpu.pipeline_mode<synchronous>, transform_indices = @transform_4, window_bounds = array<i64: 1, 32>}, {pipeline_mode = #tpu.pipeline_mode<synchronous>, transform_indices = @transform_5, window_bounds = array<i64: 1, 32>}, {pipeline_mode = #tpu.pipeline_mode<synchronous>, transform_indices = @transform_6, window_bounds = array<i64: 1, 32>}, {transform_indices = @transform_7, window_bounds = array<i64: 16, 32>}]} {
    %c0_i32 = arith.constant 0 : i32
    %0 = arith.cmpi eq, %arg1, %c0_i32 : i32
    %1 = arith.extui %0 : i1 to i32
    %c0_i32_0 = arith.constant 0 : i32
    %2 = arith.cmpi ne, %1, %c0_i32_0 : i32
    scf.if %2 {
      %cst_16 = arith.constant 0.000000e+00 : f32
      %20 = vector.broadcast %cst_16 : f32 to vector<16x32xf32>
      %c0_17 = arith.constant 0 : index
      %c0_18 = arith.constant 0 : index
      %21 = vector.load %arg10[%c0_17, %c0_18] : memref<16x32xf32, #tpu.memory_space<vmem>>, vector<16x32xf32>
      tpu.vector_store %arg10[%c0_17, %c0_18], %20 {strides = array<i32>} : memref<16x32xf32, #tpu.memory_space<vmem>>, vector<16x32xf32>,
    } else {
    }
    %c0 = arith.constant 0 : index
    %c0_1 = arith.constant 0 : index
    %3 = vector.load %arg2[%c0, %c0_1] : memref<16x32xbf16, #tpu.memory_space<vmem>>, vector<16x32xbf16>
    %c0_2 = arith.constant 0 : index
    %c0_3 = arith.constant 0 : index
    %4 = vector.load %arg3[%c0_2, %c0_3] : memref<32x64xbf16, #tpu.memory_space<vmem>>, vector<32x64xbf16>
    %cst = arith.constant dense<0.000000e+00> : vector<16x64xf32>
    %5 = tpu.matmul %3, %4, %cst {dimension_numbers = #tpu.dot_dimension_numbers<[1], [0], [0], [1], [0, 0, 1, 1], [], []>} : vector<16x32xbf16>, vector<32x64xbf16>, vector<16x64xf32> -> vector<16x64xf32>
    %c0_4 = arith.constant 0 : index
    %c0_5 = arith.constant 0 : index
    %6 = vector.load %arg4[%c0_4, %c0_5] : memref<1x64xf32, #tpu.memory_space<vmem>>, vector<1x64xf32>
    %7 = vector.broadcast %6 : vector<1x64xf32> to vector<16x64xf32>
    %8 = arith.addf %5, %7 : vector<16x64xf32>
    %cst_6 = arith.constant 0.000000e+00 : f32
    %9 = vector.broadcast %cst_6 : f32 to vector<16x64xf32>
    %10 = arith.maximumf %8, %9 : vector<16x64xf32>
    %c0_7 = arith.constant 0 : index
    %c0_8 = arith.constant 0 : index
    %11 = vector.load %arg10[%c0_7, %c0_8] : memref<16x32xf32, #tpu.memory_space<vmem>>, vector<16x32xf32>
    %12 = arith.truncf %10 : vector<16x64xf32> to vector<16x64xbf16>
    %c0_9 = arith.constant 0 : index
    %c0_10 = arith.constant 0 : index
    %13 = vector.load %arg5[%c0_9, %c0_10] : memref<64x32xbf16, #tpu.memory_space<vmem>>, vector<64x32xbf16>
    %cst_11 = arith.constant dense<0.000000e+00> : vector<16x32xf32>
    %14 = tpu.matmul %12, %13, %cst_11 {dimension_numbers = #tpu.dot_dimension_numbers<[1], [0], [0], [1], [0, 0, 1, 1], [], []>} : vector<16x64xbf16>, vector<64x32xbf16>, vector<16x32xf32> -> vector<16x32xf32>
    %15 = arith.addf %11, %14 : vector<16x32xf32>
    %c0_12 = arith.constant 0 : index
    %c0_13 = arith.constant 0 : index
    %16 = vector.load %arg10[%c0_12, %c0_13] : memref<16x32xf32, #tpu.memory_space<vmem>>, vector<16x32xf32>
    tpu.vector_store %arg10[%c0_12, %c0_13], %15 {strides = array<i32>} : memref<16x32xf32, #tpu.memory_space<vmem>>, vector<16x32xf32>,
    %c0_i32_14 = arith.constant 0 : i32
    %17 = arith.cmpi eq, %arg1, %c0_i32_14 : i32
    %18 = arith.extui %17 : i1 to i32
    %c0_i32_15 = arith.constant 0 : i32
    %19 = arith.cmpi ne, %18, %c0_i32_15 : i32
    scf.if %19 {
      %c0_16 = arith.constant 0 : index
      %c0_17 = arith.constant 0 : index
      %20 = vector.load %arg10[%c0_16, %c0_17] : memref<16x32xf32, #tpu.memory_space<vmem>>, vector<16x32xf32>
      %c0_18 = arith.constant 0 : index
      %c0_19 = arith.constant 0 : index
      %21 = vector.load %arg6[%c0_18, %c0_19] : memref<1x32xf32, #tpu.memory_space<vmem>>, vector<1x32xf32>
      %22 = vector.broadcast %21 : vector<1x32xf32> to vector<16x32xf32>
      %23 = arith.addf %20, %22 : vector<16x32xf32>
      %c0_20 = arith.constant 0 : index
      %c0_21 = arith.constant 0 : index
      %24 = vector.load %arg2[%c0_20, %c0_21] : memref<16x32xbf16, #tpu.memory_space<vmem>>, vector<16x32xbf16>
      %25 = arith.extf %24 : vector<16x32xbf16> to vector<16x32xf32>
      %26 = arith.addf %23, %25 : vector<16x32xf32>
      %c0_22 = arith.constant 0 : index
      %c0_23 = arith.constant 0 : index
      %27 = vector.load %arg7[%c0_22, %c0_23] : memref<1x32xf32, #tpu.memory_space<vmem>>, vector<1x32xf32>
      %c0_24 = arith.constant 0 : index
      %c0_25 = arith.constant 0 : index
      %28 = vector.load %arg8[%c0_24, %c0_25] : memref<1x32xf32, #tpu.memory_space<vmem>>, vector<1x32xf32>
      %cst_26 = arith.constant dense<0.000000e+00> : vector<16xf32>
      %29 = vector.multi_reduction <add>, %26, %cst_26 [1] : vector<16x32xf32> to vector<16xf32>
      %30 = vector.shape_cast %29 : vector<16xf32> to vector<16x1xf32>
      %cst_27 = arith.constant 3.200000e+01 : f32
      %31 = vector.broadcast %cst_27 : f32 to vector<16x1xf32>
      %32 = arith.divf %30, %31 : vector<16x1xf32>
      %33 = arith.mulf %26, %26 : vector<16x32xf32>
      %cst_28 = arith.constant dense<0.000000e+00> : vector<16xf32>
      %34 = vector.multi_reduction <add>, %33, %cst_28 [1] : vector<16x32xf32> to vector<16xf32>
      %35 = vector.shape_cast %34 : vector<16xf32> to vector<16x1xf32>
      %cst_29 = arith.constant 3.200000e+01 : f32
      %36 = vector.broadcast %cst_29 : f32 to vector<16x1xf32>
      %37 = arith.divf %35, %36 : vector<16x1xf32>
      %38 = arith.mulf %32, %32 : vector<16x1xf32>
      %39 = arith.subf %37, %38 : vector<16x1xf32>
      %cst_30 = arith.constant 0.000000e+00 : f32
      %40 = vector.broadcast %cst_30 : f32 to vector<16x1xf32>
      %41 = arith.maximumf %39, %40 : vector<16x1xf32>
      %42 = vector.broadcast %32 : vector<16x1xf32> to vector<16x32xf32>
      %43 = arith.subf %26, %42 : vector<16x32xf32>
      %cst_31 = arith.constant 9.99999974E-6 : f32
      %44 = vector.broadcast %cst_31 : f32 to vector<16x1xf32>
      %45 = arith.addf %41, %44 : vector<16x1xf32>
      %46 = math.rsqrt %45 : vector<16x1xf32>
      %47 = vector.broadcast %46 : vector<16x1xf32> to vector<16x32xf32>
      %48 = arith.mulf %43, %47 : vector<16x32xf32>
      %49 = vector.broadcast %27 : vector<1x32xf32> to vector<16x32xf32>
      %50 = arith.mulf %48, %49 : vector<16x32xf32>
      %51 = vector.broadcast %28 : vector<1x32xf32> to vector<16x32xf32>
      %52 = arith.addf %50, %51 : vector<16x32xf32>
      %53 = arith.truncf %52 : vector<16x32xf32> to vector<16x32xbf16>
      %c0_32 = arith.constant 0 : index
      %c0_33 = arith.constant 0 : index
      %54 = vector.load %arg9[%c0_32, %c0_33] : memref<16x32xbf16, #tpu.memory_space<vmem>>, vector<16x32xbf16>
      tpu.vector_store %arg9[%c0_32, %c0_33], %53 {strides = array<i32>} : memref<16x32xbf16, #tpu.memory_space<vmem>>, vector<16x32xbf16>,
    } else {
    }
    return
  }
  func.func @transform_0(%arg0: i32, %arg1: i32) -> (i32, i32) {
    %c0_i32 = arith.constant 0 : i32
    %c0_i32_0 = arith.constant 0 : i32
    return %arg0, %c0_i32 : i32, i32
  }
  func.func @transform_1(%arg0: i32, %arg1: i32) -> (i32, i32) {
    %c0_i32 = arith.constant 0 : i32
    %c0_i32_0 = arith.constant 0 : i32
    return %c0_i32, %arg1 : i32, i32
  }
  func.func @transform_2(%arg0: i32, %arg1: i32) -> (i32, i32) {
    %c0_i32 = arith.constant 0 : i32
    %c0_i32_0 = arith.constant 0 : i32
    return %c0_i32, %arg1 : i32, i32
  }
  func.func @transform_3(%arg0: i32, %arg1: i32) -> (i32, i32) {
    %c0_i32 = arith.constant 0 : i32
    %c0_i32_0 = arith.constant 0 : i32
    return %arg1, %c0_i32 : i32, i32
  }
  func.func @transform_4(%arg0: i32, %arg1: i32) -> (i32, i32) {
    %c0_i32 = arith.constant 0 : i32
    %c0_i32_0 = arith.constant 0 : i32
    %c0_i32_1 = arith.constant 0 : i32
    return %c0_i32, %c0_i32_0 : i32, i32
  }
  func.func @transform_5(%arg0: i32, %arg1: i32) -> (i32, i32) {
    %c0_i32 = arith.constant 0 : i32
    %c0_i32_0 = arith.constant 0 : i32
    %c0_i32_1 = arith.constant 0 : i32
    return %c0_i32, %c0_i32_0 : i32, i32
  }
  func.func @transform_6(%arg0: i32, %arg1: i32) -> (i32, i32) {
    %c0_i32 = arith.constant 0 : i32
    %c0_i32_0 = arith.constant 0 : i32
    %c0_i32_1 = arith.constant 0 : i32
    return %c0_i32, %c0_i32_0 : i32, i32
  }
  func.func @transform_7(%arg0: i32, %arg1: i32) -> (i32, i32) {
    %c0_i32 = arith.constant 0 : i32
    %c0_i32_0 = arith.constant 0 : i32
    return %arg0, %c0_i32 : i32, i32
  }
}

module attributes {stable_mosaic.version = 11 : i64} {
  func.func @matmul_kernel(%arg0: i32, %arg1: i32, %arg2: i32, %arg3: memref<16x32xbf16, #tpu.memory_space<vmem>>, %arg4: memref<32x128xbf16, #tpu.memory_space<vmem>>, %arg5: memref<1x128xf32, #tpu.memory_space<vmem>>, %arg6: memref<16x128xf32, #tpu.memory_space<vmem>>, %arg7: memref<16x128xf32, #tpu.memory_space<vmem>>) attributes {dimension_semantics = [#tpu.dimension_semantics<parallel>, #tpu.dimension_semantics<parallel>, #tpu.dimension_semantics<arbitrary>], iteration_bounds = array<i64: 1, 1, 1>, scalar_prefetch = 0 : i64, scratch_operands = 1 : i64, tpu.core_type = #tpu.core_type<tc>, window_params = [{transform_indices = @transform_0, window_bounds = array<i64: 16, 32>}, {transform_indices = @transform_1, window_bounds = array<i64: 32, 128>}, {transform_indices = @transform_2, window_bounds = array<i64: 1, 128>}, {transform_indices = @transform_3, window_bounds = array<i64: 16, 128>}]} {
    %c0_i32 = arith.constant 0 : i32
    %0 = arith.cmpi eq, %arg2, %c0_i32 : i32
    %1 = arith.extui %0 : i1 to i32
    %c0_i32_0 = arith.constant 0 : i32
    %2 = arith.cmpi ne, %1, %c0_i32_0 : i32
    scf.if %2 {
      %cst_10 = arith.constant 0.000000e+00 : f32
      %12 = vector.broadcast %cst_10 : f32 to vector<16x128xf32>
      %c0_11 = arith.constant 0 : index
      %c0_12 = arith.constant 0 : index
      %13 = vector.load %arg7[%c0_11, %c0_12] : memref<16x128xf32, #tpu.memory_space<vmem>>, vector<16x128xf32>
      tpu.vector_store %arg7[%c0_11, %c0_12], %12 {strides = array<i32>} : memref<16x128xf32, #tpu.memory_space<vmem>>, vector<16x128xf32>,
    } else {
    }
    %c0 = arith.constant 0 : index
    %c0_1 = arith.constant 0 : index
    %3 = vector.load %arg7[%c0, %c0_1] : memref<16x128xf32, #tpu.memory_space<vmem>>, vector<16x128xf32>
    %c0_2 = arith.constant 0 : index
    %c0_3 = arith.constant 0 : index
    %4 = vector.load %arg3[%c0_2, %c0_3] : memref<16x32xbf16, #tpu.memory_space<vmem>>, vector<16x32xbf16>
    %c0_4 = arith.constant 0 : index
    %c0_5 = arith.constant 0 : index
    %5 = vector.load %arg4[%c0_4, %c0_5] : memref<32x128xbf16, #tpu.memory_space<vmem>>, vector<32x128xbf16>
    %cst = arith.constant dense<0.000000e+00> : vector<16x128xf32>
    %6 = tpu.matmul %4, %5, %cst {dimension_numbers = #tpu.dot_dimension_numbers<[1], [0], [0], [1], [0, 0, 1, 1], [], []>} : vector<16x32xbf16>, vector<32x128xbf16>, vector<16x128xf32> -> vector<16x128xf32>
    %7 = arith.addf %3, %6 : vector<16x128xf32>
    %c0_6 = arith.constant 0 : index
    %c0_7 = arith.constant 0 : index
    %8 = vector.load %arg7[%c0_6, %c0_7] : memref<16x128xf32, #tpu.memory_space<vmem>>, vector<16x128xf32>
    tpu.vector_store %arg7[%c0_6, %c0_7], %7 {strides = array<i32>} : memref<16x128xf32, #tpu.memory_space<vmem>>, vector<16x128xf32>,
    %c0_i32_8 = arith.constant 0 : i32
    %9 = arith.cmpi eq, %arg2, %c0_i32_8 : i32
    %10 = arith.extui %9 : i1 to i32
    %c0_i32_9 = arith.constant 0 : i32
    %11 = arith.cmpi ne, %10, %c0_i32_9 : i32
    scf.if %11 {
      %c0_10 = arith.constant 0 : index
      %c0_11 = arith.constant 0 : index
      %12 = vector.load %arg7[%c0_10, %c0_11] : memref<16x128xf32, #tpu.memory_space<vmem>>, vector<16x128xf32>
      %c0_12 = arith.constant 0 : index
      %c0_13 = arith.constant 0 : index
      %13 = vector.load %arg5[%c0_12, %c0_13] : memref<1x128xf32, #tpu.memory_space<vmem>>, vector<1x128xf32>
      %14 = vector.broadcast %13 : vector<1x128xf32> to vector<16x128xf32>
      %15 = arith.addf %12, %14 : vector<16x128xf32>
      %c0_14 = arith.constant 0 : index
      %c0_15 = arith.constant 0 : index
      %16 = vector.load %arg6[%c0_14, %c0_15] : memref<16x128xf32, #tpu.memory_space<vmem>>, vector<16x128xf32>
      tpu.vector_store %arg6[%c0_14, %c0_15], %15 {strides = array<i32>} : memref<16x128xf32, #tpu.memory_space<vmem>>, vector<16x128xf32>,
    } else {
    }
    return
  }
  func.func @transform_0(%arg0: i32, %arg1: i32, %arg2: i32) -> (i32, i32) {
    %c0_i32 = arith.constant 0 : i32
    return %arg0, %arg2 : i32, i32
  }
  func.func @transform_1(%arg0: i32, %arg1: i32, %arg2: i32) -> (i32, i32) {
    %c0_i32 = arith.constant 0 : i32
    return %arg2, %arg1 : i32, i32
  }
  func.func @transform_2(%arg0: i32, %arg1: i32, %arg2: i32) -> (i32, i32) {
    %c0_i32 = arith.constant 0 : i32
    %c0_i32_0 = arith.constant 0 : i32
    return %c0_i32, %arg1 : i32, i32
  }
  func.func @transform_3(%arg0: i32, %arg1: i32, %arg2: i32) -> (i32, i32) {
    %c0_i32 = arith.constant 0 : i32
    return %arg0, %arg1 : i32, i32
  }
}

</mosaic_0001>

<llo_original>
// kernel: decoder_forward.20
$region0: #{decoder_forward.20}
  #allocation0 [shape = 'u32[]', space=smem, size = 0x4, offset = 0x4, fixed_abs, tag = 'smem constant byte address 0x4 - core index']
  #allocation1 [shape = 'u32[144,128]{1,0:T(1,128)}', space=vmem, size = 0x12000, scoped, tag = 'internal scratch']
  #allocation2 [shape = 'f32[16,32]{1,0:T(8,128)}', space=vmem, size = 0x2000, scoped, tag = 'scratch operand']
  %s0 = inlined_call_operand.vmem [shape: bf16[16,32], index: 0, kind: input, shape index: {}]
  %s1 = inlined_call_operand.vmem [shape: bf16[32,32], index: 1, kind: input, shape index: {}]
  %s2 = inlined_call_operand.vmem [shape: f32[1,32], index: 2, kind: input, shape index: {}]
  %s3 = inlined_call_operand.vmem [shape: bf16[16,32], index: 3, kind: output, shape index: {}]
  %s4 = sld [smem:[#allocation0]]
  $region30: #{decoder_forward.20} parent=0
    _
  %s6 = ssub.s32 1, %s4
  %s7 = scalar_select 0, %s6, %s4
  // Predicated region
  $region2: #{decoder_forward.20} parent=0 // pred_check
    _
  $region3: #{decoder_forward.20} parent=0 // pred_check_branch
    %9 = sbr.rel (0) target = $region5
  $region4: #{decoder_forward.20} parent=0 // pred_region
    _
  $region5: #{decoder_forward.20} parent=0 // pred_fallthru
    _
  // Predicated region
  $region6: #{decoder_forward.20} parent=0 // pred_check
    _
  $region7: #{decoder_forward.20} parent=0 // pred_check_branch
    %11 = sbr.rel (0) target = $region9
  $region8: #{decoder_forward.20} parent=0 // pred_region
    _
  $region9: #{decoder_forward.20} parent=0 // pred_fallthru
    _
  // Predicated region
  $region10: #{decoder_forward.20} parent=0 // pred_check
    _
  $region11: #{decoder_forward.20} parent=0 // pred_check_branch
    %13 = sbr.rel (0) target = $region13
  $region12: #{decoder_forward.20} parent=0 // pred_region
    _
  $region13: #{decoder_forward.20} parent=0 // pred_fallthru
    _
  %p15 = scmp.eq.s32.totalorder 0, 0
  // Predicated region
  $region14: #{decoder_forward.20} parent=0 // pred_check
    %p16 = pneg %p15
  $region15: #{decoder_forward.20} parent=0 // pred_check_branch
    %18 = sbr.rel (%p16) target = $region17
  $region16: #{decoder_forward.20} parent=0 // pred_region
    %vm19 = vcmask 261120
    %20 = vst.msk [vmem:[#allocation2] sm:$0xff] %vm19, 0.0
    %21 = vst.msk [vmem:[#allocation2 + $0x8] sm:$0xff] %vm19, 0.0
  $region17: #{decoder_forward.20} parent=0 // pred_fallthru
    _
  %v22 = vld [vmem:[#allocation2] sm:$0xff]
  %v23 = vld [vmem:[#allocation2 + $0x8] sm:$0xff]
  %v24 = vld [vmem:[%s0] sm:$0xf]
  %v25 = vld [vmem:[%s0 + $0x4] sm:$0xf]
  %v26 = vld [vmem:[%s1] sm:$0xf]
  %v27 = vld [vmem:[%s1 + $0x4] sm:$0xf]
  %v28 = vld [vmem:[%s1 + $0x8] sm:$0xf]
  %v29 = vld [vmem:[%s1 + $0xc] sm:$0xf]
  %v32 = vunpack.c.l.b16 %v24
  %v33 = vunpack.c.l.b16 %v25
  %v34 = vpack.c.b16 %v33, %v32
  %v39 = vunpack.c.l.b16 %v26
  %v40 = vunpack.c.l.b16 %v27
  %v41 = vunpack.c.l.b16 %v28
  %v42 = vunpack.c.l.b16 %v29
  %v43 = vpack.c.b16 %v40, %v39
  %v44 = vpack.c.b16 %v42, %v41
  %vm47 = vcmask 261120
  %v49 = vsel %vm47, %v34, 0
  %51 = vmatprep.subr.bf16.mxu0 0
  %52 = vmatpush1.bf16.msra.mxu0 0
  %53 = vmatprep.subr.bf16.mxu0 0
  %54 = vmatpush1.bf16.msra.mxu0 0
  %55 = vmatprep.subr.bf16.mxu0 0
  %56 = vmatpush1.bf16.msra.mxu0 0
  %57 = vmatprep.subr.bf16.mxu0 0
  %58 = vmatpush1.bf16.msra.mxu0 0
  %59 = vmatprep.subr.bf16.mxu0 0
  %60 = vmatpush1.bf16.msra.mxu0 0
  %61 = vmatprep.subr.bf16.mxu0 0
  %62 = vmatpush1.bf16.msra.mxu0 0
  %63 = vmatprep.subr.bf16.mxu0 0
  %64 = vmatpush1.bf16.msra.mxu0 %v44
  %65 = vmatprep.subr.bf16.mxu0 0
  %66 = vmatpush1.bf16.msra.mxu0 %v43
  %67 = vmatprep.subr.bf16.mxu0 0
  %68 = vmatpush2.bf16.msra.mxu0 0
  %69 = vmatprep.subr.bf16.mxu0 0
  %70 = vmatpush2.bf16.msra.mxu0 0
  %71 = vmatprep.subr.bf16.mxu0 0
  %72 = vmatpush2.bf16.msra.mxu0 0
  %73 = vmatprep.subr.bf16.mxu0 0
  %74 = vmatpush2.bf16.msra.mxu0 0
  %75 = vmatprep.subr.bf16.mxu0 0
  %76 = vmatpush2.bf16.msra.mxu0 0
  %77 = vmatprep.subr.bf16.mxu0 0
  %78 = vmatpush2.bf16.msra.mxu0 0
  %79 = vmatprep.subr.bf16.mxu0 0
  %80 = vmatpush2.bf16.msra.mxu0 0
  %81 = vmatprep.subr.bf16.mxu0 0
  %82 = vmatpush2.bf16.msra.mxu0 0
  %83 = vmatprep.mubr.bf16.mxu0 0
  %84 = vmatmul.mubr.bf16.gmra.mxu0 %v49
  %v85 = vpop.f32.mrf.mxu0
  %v86 = vadd.f32 0.0, %v85
  %v87 = vpop.f32.mrf.mxu0
  %v88 = vpop.f32.mrf.mxu0
  %v89 = vadd.f32 0.0, %v88
  %v90 = vpop.f32.mrf.mxu0
  %91 = vdwg.mxu0
  %v92 = vadd.f32 %v22, %v86
  %v93 = vadd.f32 %v23, %v89
  %94 = vst.msk [vmem:[#allocation2] sm:$0xff] %vm47, %v92
  %95 = vst.msk [vmem:[#allocation2 + $0x8] sm:$0xff] %vm47, %v93
  // Predicated region
  $region18: #{decoder_forward.20} parent=0 // pred_check
    %p96 = pneg %p15
  $region19: #{decoder_forward.20} parent=0 // pred_check_branch
    %98 = sbr.rel (%p96) target = $region21
  $region20: #{decoder_forward.20} parent=0 // pred_region
    %v99 = vld [vmem:[#allocation2] sm:$0xff]
    %v100 = vld [vmem:[#allocation2 + $0x8] sm:$0xff]
    %v101 = vld [vmem:[%s2] sm:$0x1]
    %v103 = vlaneseq
    %v104 = vshrl.u32 %v103, 7
    %v105 = vsub.s32 0, %v104
    %v106 = vrot.slane %v101, %v105
    %v108 = vadd.f32 %v99, %v106
    %v109 = vadd.f32 %v100, %v106
    %v110 = vpack.c.bf16 %v109, %v108
    %v112 = vunpack.c.l.b16 %v110
    %v113 = vunpack.c.h.b16 %v110
    %v114 = vpack.c.b16 %v112, %v112
    %v115 = vpack.c.b16 %v113, %v113
    %vm118 = vcmask 257024
    %119 = vst.msk [vmem:[%s3] sm:$0xf] %vm118, %v114
    %120 = vst.msk [vmem:[%s3 + $0x4] sm:$0xf] %vm118, %v115
  $region21: #{decoder_forward.20} parent=0 // pred_fallthru
    _
  // Predicated region
  $region22: #{decoder_forward.20} parent=0 // pred_check
    _
  $region23: #{decoder_forward.20} parent=0 // pred_check_branch
    %122 = sbr.rel (0) target = $region25
  $region24: #{decoder_forward.20} parent=0 // pred_region
    _
  $region25: #{decoder_forward.20} parent=0 // pred_fallthru
    _
  // Predicated region
  $region26: #{decoder_forward.20} parent=0 // pred_check
    _
  $region27: #{decoder_forward.20} parent=0 // pred_check_branch
    %124 = sbr.rel (0) target = $region29
  $region28: #{decoder_forward.20} parent=0 // pred_region
    _
  $region29: #{decoder_forward.20} parent=0 // pred_fallthru
    _

// kernel: decoder_forward.19
$region0: #{decoder_forward.19}
  #allocation0 [shape = 'u32[]', space=smem, size = 0x4, offset = 0x4, fixed_abs, tag = 'smem constant byte address 0x4 - core index']
  #allocation1 [shape = 'u32[144,128]{1,0:T(1,128)}', space=vmem, size = 0x12000, scoped, tag = 'internal scratch']
  #allocation2 [shape = 'f32[16,32]{1,0:T(8,128)}', space=vmem, size = 0x2000, scoped, tag = 'scratch operand']
  %s0 = inlined_call_operand.vmem [shape: bf16[16,32], index: 0, kind: input, shape index: {}]
  %s1 = inlined_call_operand.vmem [shape: bf16[32,32], index: 1, kind: input, shape index: {}]
  %s2 = inlined_call_operand.vmem [shape: f32[1,32], index: 2, kind: input, shape index: {}]
  %s3 = inlined_call_operand.vmem [shape: bf16[16,32], index: 3, kind: input, shape index: {}]
  %s4 = inlined_call_operand.vmem [shape: f32[1,32], index: 4, kind: input, shape index: {}]
  %s5 = inlined_call_operand.vmem [shape: f32[1,32], index: 5, kind: input, shape index: {}]
  %s6 = inlined_call_operand.vmem [shape: bf16[16,32], index: 6, kind: output, shape index: {}]
  %s7 = sld [smem:[#allocation0]]
  $region42: #{decoder_forward.19} parent=0
    _
  %s9 = ssub.s32 1, %s7
  %s10 = scalar_select 0, %s9, %s7
  // Predicated region
  $region2: #{decoder_forward.19} parent=0 // pred_check
    _
  $region3: #{decoder_forward.19} parent=0 // pred_check_branch
    %12 = sbr.rel (0) target = $region5
  $region4: #{decoder_forward.19} parent=0 // pred_region
    _
  $region5: #{decoder_forward.19} parent=0 // pred_fallthru
    _
  // Predicated region
  $region6: #{decoder_forward.19} parent=0 // pred_check
    _
  $region7: #{decoder_forward.19} parent=0 // pred_check_branch
    %14 = sbr.rel (0) target = $region9
  $region8: #{decoder_forward.19} parent=0 // pred_region
    _
  $region9: #{decoder_forward.19} parent=0 // pred_fallthru
    _
  // Predicated region
  $region10: #{decoder_forward.19} parent=0 // pred_check
    _
  $region11: #{decoder_forward.19} parent=0 // pred_check_branch
    %16 = sbr.rel (0) target = $region13
  $region12: #{decoder_forward.19} parent=0 // pred_region
    _
  $region13: #{decoder_forward.19} parent=0 // pred_fallthru
    _
  // Predicated region
  $region14: #{decoder_forward.19} parent=0 // pred_check
    _
  $region15: #{decoder_forward.19} parent=0 // pred_check_branch
    %18 = sbr.rel (0) target = $region17
  $region16: #{decoder_forward.19} parent=0 // pred_region
    _
  $region17: #{decoder_forward.19} parent=0 // pred_fallthru
    _
  // Predicated region
  $region18: #{decoder_forward.19} parent=0 // pred_check
    _
  $region19: #{decoder_forward.19} parent=0 // pred_check_branch
    %20 = sbr.rel (0) target = $region21
  $region20: #{decoder_forward.19} parent=0 // pred_region
    _
  $region21: #{decoder_forward.19} parent=0 // pred_fallthru
    _
  // Predicated region
  $region22: #{decoder_forward.19} parent=0 // pred_check
    _
  $region23: #{decoder_forward.19} parent=0 // pred_check_branch
    %22 = sbr.rel (0) target = $region25
  $region24: #{decoder_forward.19} parent=0 // pred_region
    _
  $region25: #{decoder_forward.19} parent=0 // pred_fallthru
    _
  %p24 = scmp.eq.s32.totalorder 0, 0
  // Predicated region
  $region26: #{decoder_forward.19} parent=0 // pred_check
    %p25 = pneg %p24
  $region27: #{decoder_forward.19} parent=0 // pred_check_branch
    %27 = sbr.rel (%p25) target = $region29
  $region28: #{decoder_forward.19} parent=0 // pred_region
    %vm28 = vcmask 261120
    %29 = vst.msk [vmem:[#allocation2] sm:$0xff] %vm28, 0.0
    %30 = vst.msk [vmem:[#allocation2 + $0x8] sm:$0xff] %vm28, 0.0
  $region29: #{decoder_forward.19} parent=0 // pred_fallthru
    _
  %v31 = vld [vmem:[#allocation2] sm:$0xff]
  %v32 = vld [vmem:[#allocation2 + $0x8] sm:$0xff]
  %v33 = vld [vmem:[%s0] sm:$0xf]
  %v34 = vld [vmem:[%s0 + $0x4] sm:$0xf]
  %v35 = vld [vmem:[%s1] sm:$0xf]
  %v36 = vld [vmem:[%s1 + $0x4] sm:$0xf]
  %v37 = vld [vmem:[%s1 + $0x8] sm:$0xf]
  %v38 = vld [vmem:[%s1 + $0xc] sm:$0xf]
  %v41 = vunpack.c.l.b16 %v33
  %v42 = vunpack.c.l.b16 %v34
  %v43 = vpack.c.b16 %v42, %v41
  %v48 = vunpack.c.l.b16 %v35
  %v49 = vunpack.c.l.b16 %v36
  %v50 = vunpack.c.l.b16 %v37
  %v51 = vunpack.c.l.b16 %v38
  %v52 = vpack.c.b16 %v49, %v48
  %v53 = vpack.c.b16 %v51, %v50
  %vm56 = vcmask 261120
  %v58 = vsel %vm56, %v43, 0
  %60 = vmatprep.subr.bf16.mxu0 0
  %61 = vmatpush1.bf16.msra.mxu0 0
  %62 = vmatprep.subr.bf16.mxu0 0
  %63 = vmatpush1.bf16.msra.mxu0 0
  %64 = vmatprep.subr.bf16.mxu0 0
  %65 = vmatpush1.bf16.msra.mxu0 0
  %66 = vmatprep.subr.bf16.mxu0 0
  %67 = vmatpush1.bf16.msra.mxu0 0
  %68 = vmatprep.subr.bf16.mxu0 0
  %69 = vmatpush1.bf16.msra.mxu0 0
  %70 = vmatprep.subr.bf16.mxu0 0
  %71 = vmatpush1.bf16.msra.mxu0 0
  %72 = vmatprep.subr.bf16.mxu0 0
  %73 = vmatpush1.bf16.msra.mxu0 %v53
  %74 = vmatprep.subr.bf16.mxu0 0
  %75 = vmatpush1.bf16.msra.mxu0 %v52
  %76 = vmatprep.subr.bf16.mxu0 0
  %77 = vmatpush2.bf16.msra.mxu0 0
  %78 = vmatprep.subr.bf16.mxu0 0
  %79 = vmatpush2.bf16.msra.mxu0 0
  %80 = vmatprep.subr.bf16.mxu0 0
  %81 = vmatpush2.bf16.msra.mxu0 0
  %82 = vmatprep.subr.bf16.mxu0 0
  %83 = vmatpush2.bf16.msra.mxu0 0
  %84 = vmatprep.subr.bf16.mxu0 0
  %85 = vmatpush2.bf16.msra.mxu0 0
  %86 = vmatprep.subr.bf16.mxu0 0
  %87 = vmatpush2.bf16.msra.mxu0 0
  %88 = vmatprep.subr.bf16.mxu0 0
  %89 = vmatpush2.bf16.msra.mxu0 0
  %90 = vmatprep.subr.bf16.mxu0 0
  %91 = vmatpush2.bf16.msra.mxu0 0
  %92 = vmatprep.mubr.bf16.mxu0 0
  %93 = vmatmul.mubr.bf16.gmra.mxu0 %v58
  %v94 = vpop.f32.mrf.mxu0
  %v95 = vadd.f32 0.0, %v94
  %v96 = vpop.f32.mrf.mxu0
  %v97 = vpop.f32.mrf.mxu0
  %v98 = vadd.f32 0.0, %v97
  %v99 = vpop.f32.mrf.mxu0
  %100 = vdwg.mxu0
  %v101 = vadd.f32 %v31, %v95
  %v102 = vadd.f32 %v32, %v98
  %103 = vst.msk [vmem:[#allocation2] sm:$0xff] %vm56, %v101
  %104 = vst.msk [vmem:[#allocation2 + $0x8] sm:$0xff] %vm56, %v102
  // Predicated region
  $region30: #{decoder_forward.19} parent=0 // pred_check
    %p105 = pneg %p24
  $region31: #{decoder_forward.19} parent=0 // pred_check_branch
    %107 = sbr.rel (%p105) target = $region33
  $region32: #{decoder_forward.19} parent=0 // pred_region
    %v108 = vld [vmem:[#allocation2] sm:$0xff]
    %v109 = vld [vmem:[#allocation2 + $0x8] sm:$0xff]
    %v110 = vld [vmem:[%s2] sm:$0x1]
    %v112 = vlaneseq
    %v113 = vshrl.u32 %v112, 7
    %v114 = vsub.s32 0, %v113
    %v115 = vrot.slane %v110, %v114
    %v117 = vadd.f32 %v108, %v115
    %v118 = vadd.f32 %v109, %v115
    %v119 = vld [vmem:[%s3] sm:$0xf]
    %v120 = vld [vmem:[%s3 + $0x4] sm:$0xf]
    %v121 = vunpack.c.l.bf16 %v119
    %v122 = vunpack.c.l.bf16 %v120
    %v123 = vadd.f32 %v117, %v121
    %v124 = vadd.f32 %v118, %v122
    %v125 = vld [vmem:[%s4] sm:$0x1]
    %v126 = vld [vmem:[%s5] sm:$0x1]
    %v127 = vsel %vm56, %v123, 0.0
    %128 = vadd.xlane.f32.xlu0 %v127
    %v129 = vpop.xlane.xlu0 %128
    %v130 = vsel %vm56, %v124, 0.0
    %131 = vadd.xlane.f32.xlu0 %v130
    %v132 = vpop.xlane.xlu0 %131
    %v133 = vrcp.pop 32.0
    %v134 = vmul.f32 %v129, %v133
    %v135 = vmul.f32 %v132, %v133
    %v136 = vmul.f32 %v123, %v123
    %v137 = vmul.f32 %v124, %v124
    %v138 = vsel %vm56, %v136, 0.0
    %139 = vadd.xlane.f32.xlu0 %v138
    %v140 = vpop.xlane.xlu0 %139
    %v141 = vsel %vm56, %v137, 0.0
    %142 = vadd.xlane.f32.xlu0 %v141
    %v143 = vpop.xlane.xlu0 %142
    %v144 = vmul.f32 %v140, %v133
    %v145 = vmul.f32 %v143, %v133
    %v146 = vmul.f32 %v134, %v134
    %v147 = vmul.f32 %v135, %v135
    %v148 = vsub.f32 %v144, %v146
    %v149 = vsub.f32 %v145, %v147
    %v150 = vmax.f32 %v148, 0.0
    %v151 = vmax.f32 %v149, 0.0
    %v152 = vsub.f32 %v123, %v134
    %v153 = vsub.f32 %v124, %v135
    %v154 = vadd.f32 %v150, 1e-05
    %v155 = vadd.f32 %v151, 1e-05
    %v156 = vrsqrt.pop %v154
    %v157 = vrsqrt.pop %v155
    %v158 = vmul.f32 %v152, %v156
    %v159 = vmul.f32 %v153, %v157
    %v161 = vlaneseq
    %v162 = vshrl.u32 %v161, 7
    %v163 = vsub.s32 0, %v162
    %v164 = vrot.slane %v125, %v163
    %v166 = vmul.f32 %v158, %v164
    %v167 = vmul.f32 %v159, %v164
    %v169 = vlaneseq
    %v170 = vshrl.u32 %v169, 7
    %v171 = vsub.s32 0, %v170
    %v172 = vrot.slane %v126, %v171
    %v174 = vadd.f32 %v166, %v172
    %v175 = vadd.f32 %v167, %v172
    %v176 = vpack.c.bf16 %v175, %v174
    %v178 = vunpack.c.l.b16 %v176
    %v179 = vunpack.c.h.b16 %v176
    %v180 = vpack.c.b16 %v178, %v178
    %v181 = vpack.c.b16 %v179, %v179
    %vm184 = vcmask 257024
    %185 = vst.msk [vmem:[%s6] sm:$0xf] %vm184, %v180
    %186 = vst.msk [vmem:[%s6 + $0x4] sm:$0xf] %vm184, %v181
  $region33: #{decoder_forward.19} parent=0 // pred_fallthru
    _
  // Predicated region
  $region34: #{decoder_forward.19} parent=0 // pred_check
    _
  $region35: #{decoder_forward.19} parent=0 // pred_check_branch
    %188 = sbr.rel (0) target = $region37
  $region36: #{decoder_forward.19} parent=0 // pred_region
    _
  $region37: #{decoder_forward.19} parent=0 // pred_fallthru
    _
  // Predicated region
  $region38: #{decoder_forward.19} parent=0 // pred_check
    _
  $region39: #{decoder_forward.19} parent=0 // pred_check_branch
    %190 = sbr.rel (0) target = $region41
  $region40: #{decoder_forward.19} parent=0 // pred_region
    _
  $region41: #{decoder_forward.19} parent=0 // pred_fallthru
    _

// kernel: decoder_forward.17
$region0: #{decoder_forward.17}
  #allocation0 [shape = 'u32[]', space=smem, size = 0x4, offset = 0x4, fixed_abs, tag = 'smem constant byte address 0x4 - core index']
  #allocation1 [shape = 'u32[144,128]{1,0:T(1,128)}', space=vmem, size = 0x12000, scoped, tag = 'internal scratch']
  #allocation2 [shape = 'f32[16,96]{1,0:T(8,128)}', space=vmem, size = 0x2000, scoped, tag = 'scratch operand']
  %s0 = inlined_call_operand.vmem [shape: bf16[16,32], index: 0, kind: input, shape index: {}]
  %s1 = inlined_call_operand.vmem [shape: bf16[32,96], index: 1, kind: input, shape index: {}]
  %s2 = inlined_call_operand.vmem [shape: f32[1,96], index: 2, kind: input, shape index: {}]
  %s3 = inlined_call_operand.vmem [shape: bf16[16,96], index: 3, kind: output, shape index: {}]
  %s4 = sld [smem:[#allocation0]]
  $region30: #{decoder_forward.17} parent=0
    _
  %s6 = ssub.s32 1, %s4
  %s7 = scalar_select 0, %s6, %s4
  // Predicated region
  $region2: #{decoder_forward.17} parent=0 // pred_check
    _
  $region3: #{decoder_forward.17} parent=0 // pred_check_branch
    %9 = sbr.rel (0) target = $region5
  $region4: #{decoder_forward.17} parent=0 // pred_region
    _
  $region5: #{decoder_forward.17} parent=0 // pred_fallthru
    _
  // Predicated region
  $region6: #{decoder_forward.17} parent=0 // pred_check
    _
  $region7: #{decoder_forward.17} parent=0 // pred_check_branch
    %11 = sbr.rel (0) target = $region9
  $region8: #{decoder_forward.17} parent=0 // pred_region
    _
  $region9: #{decoder_forward.17} parent=0 // pred_fallthru
    _
  // Predicated region
  $region10: #{decoder_forward.17} parent=0 // pred_check
    _
  $region11: #{decoder_forward.17} parent=0 // pred_check_branch
    %13 = sbr.rel (0) target = $region13
  $region12: #{decoder_forward.17} parent=0 // pred_region
    _
  $region13: #{decoder_forward.17} parent=0 // pred_fallthru
    _
  %p15 = scmp.eq.s32.totalorder 0, 0
  // Predicated region
  $region14: #{decoder_forward.17} parent=0 // pred_check
    %p16 = pneg %p15
  $region15: #{decoder_forward.17} parent=0 // pred_check_branch
    %18 = sbr.rel (%p16) target = $region17
  $region16: #{decoder_forward.17} parent=0 // pred_region
    %vm19 = vcmask 785408
    %20 = vst.msk [vmem:[#allocation2] sm:$0xff] %vm19, 0.0
    %21 = vst.msk [vmem:[#allocation2 + $0x8] sm:$0xff] %vm19, 0.0
  $region17: #{decoder_forward.17} parent=0 // pred_fallthru
    _
  %v22 = vld [vmem:[#allocation2] sm:$0xff]
  %v23 = vld [vmem:[#allocation2 + $0x8] sm:$0xff]
  %v24 = vld [vmem:[%s0] sm:$0xf]
  %v25 = vld [vmem:[%s0 + $0x4] sm:$0xf]
  %v26 = vld [vmem:[%s1] sm:$0xf]
  %v27 = vld [vmem:[%s1 + $0x4] sm:$0xf]
  %v28 = vld [vmem:[%s1 + $0x8] sm:$0xf]
  %v29 = vld [vmem:[%s1 + $0xc] sm:$0xf]
  %v32 = vunpack.c.l.b16 %v24
  %v33 = vunpack.c.l.b16 %v25
  %v34 = vpack.c.b16 %v33, %v32
  %v39 = vunpack.c.l.b16 %v26
  %v40 = vunpack.c.l.b16 %v27
  %v41 = vunpack.c.l.b16 %v28
  %v42 = vunpack.c.l.b16 %v29
  %v43 = vpack.c.b16 %v40, %v39
  %v44 = vpack.c.b16 %v42, %v41
  %vm47 = vcmask 261120
  %v49 = vsel %vm47, %v34, 0
  %51 = vmatprep.subr.bf16.mxu0 0
  %52 = vmatpush1.bf16.msra.mxu0 0
  %53 = vmatprep.subr.bf16.mxu0 0
  %54 = vmatpush1.bf16.msra.mxu0 0
  %55 = vmatprep.subr.bf16.mxu0 0
  %56 = vmatpush1.bf16.msra.mxu0 0
  %57 = vmatprep.subr.bf16.mxu0 0
  %58 = vmatpush1.bf16.msra.mxu0 0
  %59 = vmatprep.subr.bf16.mxu0 0
  %60 = vmatpush1.bf16.msra.mxu0 0
  %61 = vmatprep.subr.bf16.mxu0 0
  %62 = vmatpush1.bf16.msra.mxu0 0
  %63 = vmatprep.subr.bf16.mxu0 0
  %64 = vmatpush1.bf16.msra.mxu0 %v44
  %65 = vmatprep.subr.bf16.mxu0 0
  %66 = vmatpush1.bf16.msra.mxu0 %v43
  %67 = vmatprep.subr.bf16.mxu0 0
  %68 = vmatpush2.bf16.msra.mxu0 0
  %69 = vmatprep.subr.bf16.mxu0 0
  %70 = vmatpush2.bf16.msra.mxu0 0
  %71 = vmatprep.subr.bf16.mxu0 0
  %72 = vmatpush2.bf16.msra.mxu0 0
  %73 = vmatprep.subr.bf16.mxu0 0
  %74 = vmatpush2.bf16.msra.mxu0 0
  %75 = vmatprep.subr.bf16.mxu0 0
  %76 = vmatpush2.bf16.msra.mxu0 0
  %77 = vmatprep.subr.bf16.mxu0 0
  %78 = vmatpush2.bf16.msra.mxu0 0
  %79 = vmatprep.subr.bf16.mxu0 0
  %80 = vmatpush2.bf16.msra.mxu0 0
  %81 = vmatprep.subr.bf16.mxu0 0
  %82 = vmatpush2.bf16.msra.mxu0 0
  %83 = vmatprep.mubr.bf16.mxu0 0
  %84 = vmatmul.mubr.bf16.gmra.mxu0 %v49
  %v85 = vpop.f32.mrf.mxu0
  %v86 = vadd.f32 0.0, %v85
  %v87 = vpop.f32.mrf.mxu0
  %v88 = vpop.f32.mrf.mxu0
  %v89 = vadd.f32 0.0, %v88
  %v90 = vpop.f32.mrf.mxu0
  %91 = vdwg.mxu0
  %v92 = vadd.f32 %v22, %v86
  %v93 = vadd.f32 %v23, %v89
  %vm94 = vcmask 785408
  %95 = vst.msk [vmem:[#allocation2] sm:$0xff] %vm94, %v92
  %96 = vst.msk [vmem:[#allocation2 + $0x8] sm:$0xff] %vm94, %v93
  // Predicated region
  $region18: #{decoder_forward.17} parent=0 // pred_check
    %p97 = pneg %p15
  $region19: #{decoder_forward.17} parent=0 // pred_check_branch
    %99 = sbr.rel (%p97) target = $region21
  $region20: #{decoder_forward.17} parent=0 // pred_region
    %v100 = vld [vmem:[#allocation2] sm:$0xff]
    %v101 = vld [vmem:[#allocation2 + $0x8] sm:$0xff]
    %v102 = vld [vmem:[%s2] sm:$0x1]
    %v104 = vlaneseq
    %v105 = vshrl.u32 %v104, 7
    %v106 = vsub.s32 0, %v105
    %v107 = vrot.slane %v102, %v106
    %v109 = vadd.f32 %v100, %v107
    %v110 = vadd.f32 %v101, %v107
    %v111 = vpack.c.bf16 %v110, %v109
    %v113 = vunpack.c.l.b16 %v111
    %v114 = vunpack.c.h.b16 %v111
    %v115 = vpack.c.b16 %v113, %v113
    %v116 = vpack.c.b16 %v114, %v114
    %vm119 = vcmask 781312
    %120 = vst.msk [vmem:[%s3] sm:$0xf] %vm119, %v115
    %121 = vst.msk [vmem:[%s3 + $0x4] sm:$0xf] %vm119, %v116
  $region21: #{decoder_forward.17} parent=0 // pred_fallthru
    _
  // Predicated region
  $region22: #{decoder_forward.17} parent=0 // pred_check
    _
  $region23: #{decoder_forward.17} parent=0 // pred_check_branch
    %123 = sbr.rel (0) target = $region25
  $region24: #{decoder_forward.17} parent=0 // pred_region
    _
  $region25: #{decoder_forward.17} parent=0 // pred_fallthru
    _
  // Predicated region
  $region26: #{decoder_forward.17} parent=0 // pred_check
    _
  $region27: #{decoder_forward.17} parent=0 // pred_check_branch
    %125 = sbr.rel (0) target = $region29
  $region28: #{decoder_forward.17} parent=0 // pred_region
    _
  $region29: #{decoder_forward.17} parent=0 // pred_fallthru
    _

// kernel: decoder_forward.18
$region0: #{decoder_forward.18}
  #allocation0 [shape = 'u32[]', space=smem, size = 0x4, offset = 0x4, fixed_abs, tag = 'smem constant byte address 0x4 - core index']
  #allocation1 [shape = 'u32[144,128]{1,0:T(1,128)}', space=vmem, size = 0x12000, scoped, tag = 'internal scratch']
  %s0 = inlined_call_operand.vmem [shape: bf16[2,4,8,8], index: 0, kind: input, shape index: {}]
  %s1 = inlined_call_operand.vmem [shape: bf16[2,4,8,8], index: 1, kind: input, shape index: {}]
  %s2 = inlined_call_operand.vmem [shape: bf16[2,4,8,8], index: 2, kind: input, shape index: {}]
  %s3 = inlined_call_operand.vmem [shape: bf16[2,4,8,8], index: 3, kind: output, shape index: {}]
  %s4 = sld [smem:[#allocation0]]
  $region45: #{decoder_forward.18} parent=0
    _
  %s6 = ssub.s32 1, %s4
  %s7 = scalar_select 0, %s6, %s4
  loop: start=0, step=1, limit=10
  $region2: #{decoder_forward.18} parent=0 // loop_pre_header
    _
  $region3: #{decoder_forward.18} parent=0 // loop_header
    %s9 = sphi 0, %s13
    %p10 = scmp.ge.s32.totalorder %s9, 10
    %s16 = sphi 0, %s35
    %s17 = sphi 0, %s31
    %s18 = sphi 0, %s27
    %s19 = sphi 0, %s16
    %s20 = sphi 0, %s17
    %s21 = sphi 0, %s18
    %s22 = sphi 0, %s19
    %s23 = sphi 0, %s20
    %s24 = sphi 0, %s21
    %s42 = sphi 0, %s44
    %s45 = sphi 0, %s42
    %s46 = sphi 0, %s45
    %s62 = sphi 0, %s46
    %s70 = sphi 0, %s72
    %s73 = sphi 0, %s70
    %s74 = sphi 0, %s73
    %s90 = sphi 0, %s74
    %s98 = sphi 0, %s100
    %s101 = sphi 0, %s98
    %s102 = sphi 0, %s101
    %s118 = sphi 0, %s102
    %s128 = sphi 0, %s130
    %s131 = sphi 0, %s128
    %s132 = sphi 0, %s131
    %s148 = sphi 0, %s132
  $region4: #{decoder_forward.18} parent=0 // loop_header_branch
    %12 = sbr.rel (%p10) target = $region8
  $region5: #{decoder_forward.18} parent=0 // loop_body
    %s14 = ssub.s32 %s9, 1
    %s15 = ssub.s32 %s9, 2
    %s25 = sadd.s32 1, %s18
    %p26 = scmp.ge.s32.totalorder %s25, 1
    %s27 = scalar_select %p26, 0, %s25
    %s28 = sadd.s32 1, %s17
    %s29 = scalar_select %p26, %s28, %s17
    %p30 = scmp.ge.s32.totalorder %s29, 4
    %s31 = scalar_select %p30, 0, %s29
    %s32 = sadd.s32 1, %s16
    %s33 = scalar_select %p30, %s32, %s16
    %p34 = scmp.ge.s32.totalorder %s33, 2
    %s35 = scalar_select %p34, 0, %s33
    %s36 = ssub.s32 %s16, %s35
    %s37 = ssub.s32 %s17, %s31
    %s38 = sor.u32 %s36, %s37
    %s39 = ssub.s32 %s18, %s27
    %s40 = sor.u32 %s38, %s39
    %p41 = scmp.eq.s32.totalorder %s40, 0
    %s43 = sadd.s32 %s42, 1
    %s44 = scalar_select %p41, %s42, %s43
    %p47 = pneg %p41
    %p48 = scmp.eq.s32.totalorder %s9, 7
    %p49 = por %p47, %p48
    %p50 = scmp.ne.s32.totalorder %s42, %s45
    %p51 = scmp.eq.s32.totalorder %s9, 0
    %p52 = por %p50, %p51
    %p53 = scmp.ne.s32.totalorder %s42, %s45
    %p54 = scmp.eq.s32.totalorder %s14, 7
    %p55 = por %p53, %p54
    %p56 = scmp.ne.s32.totalorder %s45, %s46
    %p57 = scmp.eq.s32.totalorder %s14, 0
    %p58 = por %p56, %p57
    %p59 = scmp.ne.s32.totalorder %s45, %s46
    %p60 = scmp.eq.s32.totalorder %s15, 7
    %p61 = por %p59, %p60
    %p63 = scmp.ne.s32.totalorder %s46, %s62
    %p64 = scmp.eq.s32.totalorder %s15, 0
    %p65 = por %p63, %p64
    %s66 = ssub.s32 %s16, %s35
    %s67 = ssub.s32 %s17, %s31
    %s68 = sor.u32 %s66, %s67
    %p69 = scmp.eq.s32.totalorder %s68, 0
    %s71 = sadd.s32 %s70, 1
    %s72 = scalar_select %p69, %s70, %s71
    %p75 = pneg %p69
    %p76 = scmp.eq.s32.totalorder %s9, 7
    %p77 = por %p75, %p76
    %p78 = scmp.ne.s32.totalorder %s70, %s73
    %p79 = scmp.eq.s32.totalorder %s9, 0
    %p80 = por %p78, %p79
    %p81 = scmp.ne.s32.totalorder %s70, %s73
    %p82 = scmp.eq.s32.totalorder %s14, 7
    %p83 = por %p81, %p82
    %p84 = scmp.ne.s32.totalorder %s73, %s74
    %p85 = scmp.eq.s32.totalorder %s14, 0
    %p86 = por %p84, %p85
    %p87 = scmp.ne.s32.totalorder %s73, %s74
    %p88 = scmp.eq.s32.totalorder %s15, 7
    %p89 = por %p87, %p88
    %p91 = scmp.ne.s32.totalorder %s74, %s90
    %p92 = scmp.eq.s32.totalorder %s15, 0
    %p93 = por %p91, %p92
    %s94 = ssub.s32 %s16, %s35
    %s95 = ssub.s32 %s17, %s31
    %s96 = sor.u32 %s94, %s95
    %p97 = scmp.eq.s32.totalorder %s96, 0
    %s99 = sadd.s32 %s98, 1
    %s100 = scalar_select %p97, %s98, %s99
    %p103 = pneg %p97
    %p104 = scmp.eq.s32.totalorder %s9, 7
    %p105 = por %p103, %p104
    %p106 = scmp.ne.s32.totalorder %s98, %s101
    %p107 = scmp.eq.s32.totalorder %s9, 0
    %p108 = por %p106, %p107
    %p109 = scmp.ne.s32.totalorder %s98, %s101
    %p110 = scmp.eq.s32.totalorder %s14, 7
    %p111 = por %p109, %p110
    %p112 = scmp.ne.s32.totalorder %s101, %s102
    %p113 = scmp.eq.s32.totalorder %s14, 0
    %p114 = por %p112, %p113
    %p115 = scmp.ne.s32.totalorder %s101, %s102
    %p116 = scmp.eq.s32.totalorder %s15, 7
    %p117 = por %p115, %p116
    %p119 = scmp.ne.s32.totalorder %s102, %s118
    %p120 = scmp.eq.s32.totalorder %s15, 0
    %p121 = por %p119, %p120
    %s122 = ssub.s32 %s16, %s35
    %s123 = ssub.s32 %s17, %s31
    %s124 = sor.u32 %s122, %s123
    %s125 = ssub.s32 %s18, %s27
    %s126 = sor.u32 %s124, %s125
    %p127 = scmp.eq.s32.totalorder %s126, 0
    %s129 = sadd.s32 %s128, 1
    %s130 = scalar_select %p127, %s128, %s129
    %p133 = pneg %p127
    %p134 = scmp.eq.s32.totalorder %s9, 7
    %p135 = por %p133, %p134
    %p136 = scmp.ne.s32.totalorder %s128, %s131
    %p137 = scmp.eq.s32.totalorder %s9, 0
    %p138 = por %p136, %p137
    %p139 = scmp.ne.s32.totalorder %s128, %s131
    %p140 = scmp.eq.s32.totalorder %s14, 7
    %p141 = por %p139, %p140
    %p142 = scmp.ne.s32.totalorder %s131, %s132
    %p143 = scmp.eq.s32.totalorder %s14, 0
    %p144 = por %p142, %p143
    %p145 = scmp.ne.s32.totalorder %s131, %s132
    %p146 = scmp.eq.s32.totalorder %s15, 7
    %p147 = por %p145, %p146
    %p149 = scmp.ne.s32.totalorder %s132, %s148
    %p150 = scmp.eq.s32.totalorder %s15, 0
    %p151 = por %p149, %p150
    %p152 = scmp.le.s32.totalorder 1, %s9
    %p153 = scmp.lt.s32.totalorder %s9, 9
    %p154 = pnand %p152, %p153
    %p155 = pneg %p154
    // Predicated region
    $region9: #{decoder_forward.18} parent=5 // pred_check
      _
    $region10: #{decoder_forward.18} parent=5 // pred_check_branch
      %157 = sbr.rel (%p154) target = $region12
    $region11: #{decoder_forward.18} parent=5 // pred_region
      %s158 = ssub.s32 %s9, 1
    $region12: #{decoder_forward.18} parent=5 // pred_fallthru
      _
    %p159 = scmp.lt.s32.totalorder %s9, 8
    // Predicated region
    $region13: #{decoder_forward.18} parent=5 // pred_check
      %p160 = pneg %p159
    $region14: #{decoder_forward.18} parent=5 // pred_check_branch
      %162 = sbr.rel (%p160) target = $region16
    $region15: #{decoder_forward.18} parent=5 // pred_region
      // Predicated region
      $region17: #{decoder_forward.18} parent=15 // pred_check
        %p163 = pneg %p52
      $region18: #{decoder_forward.18} parent=15 // pred_check_branch
        %165 = sbr.rel (%p163) target = $region20
      $region19: #{decoder_forward.18} parent=15 // pred_region
        %p166 = scmp.lt.s32.totalorder %s16, 1
        %s167 = scalar_select %p166, %s16, 1
        %p168 = scmp.lt.s32.totalorder %s17, 3
        %s169 = scalar_select %p168, %s17, 3
        %p170 = scmp.lt.s32.totalorder %s18, 0
        %s171 = scalar_select %p170, %s18, 0
        %s172 = sadd.s32 %s171, %s169
        %s173 = smul.addr %s167, 4
        %s174 = sadd.s32 %s172, %s173
        %s175 = smul.addr %s174, 4
        %s176 = scalar_lea.vmem %s0, %s175
      $region20: #{decoder_forward.18} parent=15 // pred_fallthru
        _
      // Predicated region
      $region21: #{decoder_forward.18} parent=15 // pred_check
        %p177 = pneg %p80
      $region22: #{decoder_forward.18} parent=15 // pred_check_branch
        %179 = sbr.rel (%p177) target = $region24
      $region23: #{decoder_forward.18} parent=15 // pred_region
        %p180 = scmp.lt.s32.totalorder %s16, 1
        %s181 = scalar_select %p180, %s16, 1
        %p182 = scmp.lt.s32.totalorder %s17, 3
        %s183 = scalar_select %p182, %s17, 3
        %s184 = smul.addr %s181, 4
        %s185 = sadd.s32 %s183, %s184
        %s186 = smul.addr %s185, 4
        %s187 = scalar_lea.vmem %s1, %s186
      $region24: #{decoder_forward.18} parent=15 // pred_fallthru
        _
      // Predicated region
      $region25: #{decoder_forward.18} parent=15 // pred_check
        %p188 = pneg %p108
      $region26: #{decoder_forward.18} parent=15 // pred_check_branch
        %190 = sbr.rel (%p188) target = $region28
      $region27: #{decoder_forward.18} parent=15 // pred_region
        %p191 = scmp.lt.s32.totalorder %s16, 1
        %s192 = scalar_select %p191, %s16, 1
        %p193 = scmp.lt.s32.totalorder %s17, 3
        %s194 = scalar_select %p193, %s17, 3
        %s195 = smul.addr %s192, 4
        %s196 = sadd.s32 %s194, %s195
        %s197 = smul.addr %s196, 4
        %s198 = scalar_lea.vmem %s2, %s197
      $region28: #{decoder_forward.18} parent=15 // pred_fallthru
        _
    $region16: #{decoder_forward.18} parent=5 // pred_fallthru
      _
    %p199 = scmp.le.s32.totalorder 1, %s9
    %p200 = scmp.lt.s32.totalorder %s9, 9
    %p201 = pnand %p199, %p200
    %p202 = pneg %p201
    // Predicated region
    $region29: #{decoder_forward.18} parent=5 // pred_check
      _
    $region30: #{decoder_forward.18} parent=5 // pred_check_branch
      %204 = sbr.rel (%p201) target = $region32
    $region31: #{decoder_forward.18} parent=5 // pred_region
      %s205 = ssub.s32 %s9, 1
      %p206 = scmp.lt.s32.totalorder %s19, 1
      %s207 = scalar_select %p206, %s19, 1
      %p208 = scmp.lt.s32.totalorder %s20, 3
      %s209 = scalar_select %p208, %s20, 3
      %p210 = scmp.lt.s32.totalorder %s21, 0
      %s211 = scalar_select %p210, %s21, 0
      %s212 = sadd.s32 %s211, %s209
      %s213 = smul.addr %s207, 4
      %s214 = sadd.s32 %s212, %s213
      %s215 = smul.addr %s214, 4
      %s216 = scalar_lea.vmem %s0, %s215
      %p217 = pneg %p58
      %p218 = pneg %p55
      %p219 = scmp.lt.s32.totalorder %s19, 1
      %s220 = scalar_select %p219, %s19, 1
      %p221 = scmp.lt.s32.totalorder %s20, 3
      %s222 = scalar_select %p221, %s20, 3
      %s223 = smul.addr %s220, 4
      %s224 = sadd.s32 %s222, %s223
      %s225 = smul.addr %s224, 4
      %s226 = scalar_lea.vmem %s1, %s225
      %p227 = pneg %p86
      %p228 = pneg %p83
      %p229 = scmp.lt.s32.totalorder %s19, 1
      %s230 = scalar_select %p229, %s19, 1
      %p231 = scmp.lt.s32.totalorder %s20, 3
      %s232 = scalar_select %p231, %s20, 3
      %s233 = smul.addr %s230, 4
      %s234 = sadd.s32 %s232, %s233
      %s235 = smul.addr %s234, 4
      %s236 = scalar_lea.vmem %s2, %s235
      %p237 = pneg %p114
      %p238 = pneg %p111
      %p239 = pneg %p144
      %p240 = pneg %p141
      %p241 = scmp.lt.s32.totalorder %s19, 1
      %s242 = scalar_select %p241, %s19, 1
      %p243 = scmp.lt.s32.totalorder %s20, 3
      %s244 = scalar_select %p243, %s20, 3
      %p245 = scmp.lt.s32.totalorder %s21, 0
      %s246 = scalar_select %p245, %s21, 0
      %s247 = sadd.s32 %s246, %s244
      %s248 = smul.addr %s242, 4
      %s249 = sadd.s32 %s247, %s248
      %s250 = smul.addr %s249, 4
      %s251 = scalar_lea.vmem %s3, %s250
      %p252 = scmp.lt.s32.totalorder %s19, 1
      %s253 = scalar_select %p252, %s19, 1
      %p254 = scmp.lt.s32.totalorder %s20, 3
      %s255 = scalar_select %p254, %s20, 3
      %p256 = scmp.lt.s32.totalorder %s21, 0
      %s257 = scalar_select %p256, %s21, 0
      %s258 = sadd.s32 %s257, %s255
      %s259 = smul.addr %s253, 4
      %s260 = sadd.s32 %s258, %s259
      %s261 = smul.addr %s260, 4
      %s262 = scalar_lea.vmem %s0, %s261
      %p263 = scmp.lt.s32.totalorder %s19, 1
      %s264 = scalar_select %p263, %s19, 1
      %p265 = scmp.lt.s32.totalorder %s20, 3
      %s266 = scalar_select %p265, %s20, 3
      %s267 = smul.addr %s264, 4
      %s268 = sadd.s32 %s266, %s267
      %s269 = smul.addr %s268, 4
      %s270 = scalar_lea.vmem %s1, %s269
      %p271 = scmp.lt.s32.totalorder %s19, 1
      %s272 = scalar_select %p271, %s19, 1
      %p273 = scmp.lt.s32.totalorder %s20, 3
      %s274 = scalar_select %p273, %s20, 3
      %s275 = smul.addr %s272, 4
      %s276 = sadd.s32 %s274, %s275
      %s277 = smul.addr %s276, 4
      %s278 = scalar_lea.vmem %s2, %s277
      %p279 = scmp.lt.s32.totalorder %s19, 1
      %s280 = scalar_select %p279, %s19, 1
      %p281 = scmp.lt.s32.totalorder %s20, 3
      %s282 = scalar_select %p281, %s20, 3
      %p283 = scmp.lt.s32.totalorder %s21, 0
      %s284 = scalar_select %p283, %s21, 0
      %s285 = sadd.s32 %s284, %s282
      %s286 = smul.addr %s280, 4
      %s287 = sadd.s32 %s285, %s286
      %s288 = smul.addr %s287, 4
      %s289 = scalar_lea.vmem %s3, %s288
      %v291 = vld [vmem:[%s262] sm:$0xf]
      %v292 = vld [vmem:[%s270] sm:$0xf]
      %vm293 = vcmask 64512
      %v295 = vsel %vm293, %v291, 0
      %v298 = vsel %vm293, %v292, 0
      %300 = vmatprep.subr.bf16.mxu0 0
      %301 = vmatpush1.bf16.xpose.msra.mxu0 0
      %302 = vmatprep.subr.bf16.mxu0 0
      %303 = vmatpush1.bf16.xpose.msra.mxu0 0
      %304 = vmatprep.subr.bf16.mxu0 0
      %305 = vmatpush1.bf16.xpose.msra.mxu0 0
      %306 = vmatprep.subr.bf16.mxu0 0
      %307 = vmatpush1.bf16.xpose.msra.mxu0 0
      %308 = vmatprep.subr.bf16.mxu0 0
      %309 = vmatpush1.bf16.xpose.msra.mxu0 0
      %310 = vmatprep.subr.bf16.mxu0 0
      %311 = vmatpush1.bf16.xpose.msra.mxu0 0
      %312 = vmatprep.subr.bf16.mxu0 0
      %313 = vmatpush1.bf16.xpose.msra.mxu0 0
      %314 = vmatprep.subr.bf16.mxu0 0
      %315 = vmatpush1.bf16.xpose.msra.mxu0 %v298
      %316 = vmatprep.subr.bf16.mxu0 0
      %317 = vmatpush2.bf16.xpose.msra.mxu0 0
      %318 = vmatprep.subr.bf16.mxu0 0
      %319 = vmatpush2.bf16.xpose.msra.mxu0 0
      %320 = vmatprep.subr.bf16.mxu0 0
      %321 = vmatpush2.bf16.xpose.msra.mxu0 0
      %322 = vmatprep.subr.bf16.mxu0 0
      %323 = vmatpush2.bf16.xpose.msra.mxu0 0
      %324 = vmatprep.subr.bf16.mxu0 0
      %325 = vmatpush2.bf16.xpose.msra.mxu0 0
      %326 = vmatprep.subr.bf16.mxu0 0
      %327 = vmatpush2.bf16.xpose.msra.mxu0 0
      %328 = vmatprep.subr.bf16.mxu0 0
      %329 = vmatpush2.bf16.xpose.msra.mxu0 0
      %330 = vmatprep.subr.bf16.mxu0 0
      %331 = vmatpush2.bf16.xpose.msra.mxu0 0
      %332 = vmatprep.mubr.bf16.mxu0 0
      %333 = vmatmul.mubr.bf16.gmra.mxu0 %v295
      %v334 = vpop.f32.mrf.mxu0
      %v335 = vadd.f32 0.0, %v334
      %v336 = vpop.f32.mrf.mxu0
      %v337 = vpop.f32.mrf.mxu0
      %v338 = vpop.f32.mrf.mxu0
      %339 = vdwg.mxu0
      %s340 = smul.u32 %s21, 8
      %v341 = vlaneseq
      %v342 = vshrl.u32 %v341, 7
      %v343 = vstv %s340
      %v344 = vadd.s32 %v343, %v342
      %v345 = vlaneseq
      %v346 = vand.u32 %v345, 127
      %vm347 = vcmp.le.s32.totalorder %v346, %v344
      %v348 = vsel %vm347, %v335, -1e+09
      %v349 = vsel %vm293, %v348, -inf
      %350 = vmax.xlane.f32.xlu0 %v349
      %v351 = vpop.xlane.xlu0 %350
      %v352 = vsub.f32 %v348, %v351
      %v353 = vmul.f32 %v352, 1.442695
      %v354 = vpow.pop %v353
      %v355 = vsel %vm293, %v354, 0.0
      %356 = vadd.xlane.f32.xlu0 %v355
      %v357 = vpop.xlane.xlu0 %356
      %v358 = vrcp.pop %v357
      %v359 = vmul.f32 %v354, %v358
      %v360 = vpack.c.bf16 %v359, %v359
      %v361 = vld [vmem:[%s278] sm:$0xf]
      %v363 = vsel %vm293, %v360, 0
      %vm365 = vcmask 1043456
      %v367 = vsel %vm365, %v361, 0
      %369 = vmatprep.subr.bf16.mxu0 0
      %370 = vmatpush1.bf16.msra.mxu0 0
      %371 = vmatprep.subr.bf16.mxu0 0
      %372 = vmatpush1.bf16.msra.mxu0 0
      %373 = vmatprep.subr.bf16.mxu0 0
      %374 = vmatpush1.bf16.msra.mxu0 0
      %375 = vmatprep.subr.bf16.mxu0 0
      %376 = vmatpush1.bf16.msra.mxu0 0
      %377 = vmatprep.subr.bf16.mxu0 0
      %378 = vmatpush1.bf16.msra.mxu0 0
      %379 = vmatprep.subr.bf16.mxu0 0
      %380 = vmatpush1.bf16.msra.mxu0 0
      %381 = vmatprep.subr.bf16.mxu0 0
      %382 = vmatpush1.bf16.msra.mxu0 0
      %383 = vmatprep.subr.bf16.mxu0 0
      %384 = vmatpush1.bf16.msra.mxu0 %v367
      %385 = vmatprep.subr.bf16.mxu0 0
      %386 = vmatpush2.bf16.msra.mxu0 0
      %387 = vmatprep.subr.bf16.mxu0 0
      %388 = vmatpush2.bf16.msra.mxu0 0
      %389 = vmatprep.subr.bf16.mxu0 0
      %390 = vmatpush2.bf16.msra.mxu0 0
      %391 = vmatprep.subr.bf16.mxu0 0
      %392 = vmatpush2.bf16.msra.mxu0 0
      %393 = vmatprep.subr.bf16.mxu0 0
      %394 = vmatpush2.bf16.msra.mxu0 0
      %395 = vmatprep.subr.bf16.mxu0 0
      %396 = vmatpush2.bf16.msra.mxu0 0
      %397 = vmatprep.subr.bf16.mxu0 0
      %398 = vmatpush2.bf16.msra.mxu0 0
      %399 = vmatprep.subr.bf16.mxu0 0
      %400 = vmatpush2.bf16.msra.mxu0 0
      %401 = vmatprep.mubr.bf16.mxu0 0
      %402 = vmatmul.mubr.bf16.gmra.mxu0 %v363
      %v403 = vpop.f32.mrf.mxu0
      %v404 = vadd.f32 0.0, %v403
      %v405 = vpop.f32.mrf.mxu0
      %v406 = vpop.f32.mrf.mxu0
      %v407 = vpop.f32.mrf.mxu0
      %408 = vdwg.mxu0
      %v409 = vpack.c.bf16 %v404, %v404
      %vm410 = vcmask 60416
      %411 = vst.msk [vmem:[%s289] sm:$0xf] %vm410, %v409
      %p412 = scmp.lt.s32.totalorder %s19, 1
      %s413 = scalar_select %p412, %s19, 1
      %p414 = scmp.lt.s32.totalorder %s20, 3
      %s415 = scalar_select %p414, %s20, 3
      %p416 = scmp.lt.s32.totalorder %s21, 0
      %s417 = scalar_select %p416, %s21, 0
      %s418 = sadd.s32 %s417, %s415
      %s419 = smul.addr %s413, 4
      %s420 = sadd.s32 %s418, %s419
      %s421 = smul.addr %s420, 4
      %s422 = scalar_lea.vmem %s3, %s421
      // Predicated region
      $region33: #{decoder_forward.18} parent=31 // pred_check
        %p423 = pneg %p141
      $region34: #{decoder_forward.18} parent=31 // pred_check_branch
        %425 = sbr.rel (%p423) target = $region36
      $region35: #{decoder_forward.18} parent=31 // pred_region
        _
      $region36: #{decoder_forward.18} parent=31 // pred_fallthru
        _
    $region32: #{decoder_forward.18} parent=5 // pred_fallthru
      _
    %p426 = scmp.le.s32.totalorder 2, %s9
    // Predicated region
    $region37: #{decoder_forward.18} parent=5 // pred_check
      %p427 = pneg %p426
    $region38: #{decoder_forward.18} parent=5 // pred_check_branch
      %429 = sbr.rel (%p427) target = $region40
    $region39: #{decoder_forward.18} parent=5 // pred_region
      %s430 = ssub.s32 %s9, 2
      // Predicated region
      $region41: #{decoder_forward.18} parent=39 // pred_check
        %p431 = pneg %p147
      $region42: #{decoder_forward.18} parent=39 // pred_check_branch
        %433 = sbr.rel (%p431) target = $region44
      $region43: #{decoder_forward.18} parent=39 // pred_region
        %p434 = scmp.lt.s32.totalorder %s22, 1
        %s435 = scalar_select %p434, %s22, 1
        %p436 = scmp.lt.s32.totalorder %s23, 3
        %s437 = scalar_select %p436, %s23, 3
        %p438 = scmp.lt.s32.totalorder %s24, 0
        %s439 = scalar_select %p438, %s24, 0
        %s440 = sadd.s32 %s439, %s437
        %s441 = smul.addr %s435, 4
        %s442 = sadd.s32 %s440, %s441
        %s443 = smul.addr %s442, 4
        %s444 = scalar_lea.vmem %s3, %s443
      $region44: #{decoder_forward.18} parent=39 // pred_fallthru
        _
    $region40: #{decoder_forward.18} parent=5 // pred_fallthru
      _
  $region6: #{decoder_forward.18} parent=0 // loop_footer
    %s13 = sadd.s32 1, %s9
  $region7: #{decoder_forward.18} parent=0 // loop_footer_branch
    %8 = sbr.rel target = $region3
  $region8: #{decoder_forward.18} parent=0 // loop_exit
    _

// kernel: decoder_forward.21
$region0: #{decoder_forward.21}
  #allocation0 [shape = 'u32[]', space=smem, size = 0x4, offset = 0x4, fixed_abs, tag = 'smem constant byte address 0x4 - core index']
  #allocation1 [shape = 'u32[144,128]{1,0:T(1,128)}', space=vmem, size = 0x12000, scoped, tag = 'internal scratch']
  #allocation2 [shape = 'f32[16,64]{1,0:T(8,128)}', space=vmem, size = 0x2000, scoped, tag = 'scratch operand']
  %s0 = inlined_call_operand.vmem [shape: bf16[16,32], index: 0, kind: input, shape index: {}]
  %s1 = inlined_call_operand.vmem [shape: bf16[32,64], index: 1, kind: input, shape index: {}]
  %s2 = inlined_call_operand.vmem [shape: f32[1,64], index: 2, kind: input, shape index: {}]
  %s3 = inlined_call_operand.vmem [shape: bf16[16,64], index: 3, kind: output, shape index: {}]
  %s4 = sld [smem:[#allocation0]]
  $region30: #{decoder_forward.21} parent=0
    _
  %s6 = ssub.s32 1, %s4
  %s7 = scalar_select 0, %s6, %s4
  // Predicated region
  $region2: #{decoder_forward.21} parent=0 // pred_check
    _
  $region3: #{decoder_forward.21} parent=0 // pred_check_branch
    %9 = sbr.rel (0) target = $region5
  $region4: #{decoder_forward.21} parent=0 // pred_region
    _
  $region5: #{decoder_forward.21} parent=0 // pred_fallthru
    _
  // Predicated region
  $region6: #{decoder_forward.21} parent=0 // pred_check
    _
  $region7: #{decoder_forward.21} parent=0 // pred_check_branch
    %11 = sbr.rel (0) target = $region9
  $region8: #{decoder_forward.21} parent=0 // pred_region
    _
  $region9: #{decoder_forward.21} parent=0 // pred_fallthru
    _
  // Predicated region
  $region10: #{decoder_forward.21} parent=0 // pred_check
    _
  $region11: #{decoder_forward.21} parent=0 // pred_check_branch
    %13 = sbr.rel (0) target = $region13
  $region12: #{decoder_forward.21} parent=0 // pred_region
    _
  $region13: #{decoder_forward.21} parent=0 // pred_fallthru
    _
  %p15 = scmp.eq.s32.totalorder 0, 0
  // Predicated region
  $region14: #{decoder_forward.21} parent=0 // pred_check
    %p16 = pneg %p15
  $region15: #{decoder_forward.21} parent=0 // pred_check_branch
    %18 = sbr.rel (%p16) target = $region17
  $region16: #{decoder_forward.21} parent=0 // pred_region
    %vm19 = vcmask 523264
    %20 = vst.msk [vmem:[#allocation2] sm:$0xff] %vm19, 0.0
    %21 = vst.msk [vmem:[#allocation2 + $0x8] sm:$0xff] %vm19, 0.0
  $region17: #{decoder_forward.21} parent=0 // pred_fallthru
    _
  %v22 = vld [vmem:[#allocation2] sm:$0xff]
  %v23 = vld [vmem:[#allocation2 + $0x8] sm:$0xff]
  %v24 = vld [vmem:[%s0] sm:$0xf]
  %v25 = vld [vmem:[%s0 + $0x4] sm:$0xf]
  %v26 = vld [vmem:[%s1] sm:$0xf]
  %v27 = vld [vmem:[%s1 + $0x4] sm:$0xf]
  %v28 = vld [vmem:[%s1 + $0x8] sm:$0xf]
  %v29 = vld [vmem:[%s1 + $0xc] sm:$0xf]
  %v32 = vunpack.c.l.b16 %v24
  %v33 = vunpack.c.l.b16 %v25
  %v34 = vpack.c.b16 %v33, %v32
  %v39 = vunpack.c.l.b16 %v26
  %v40 = vunpack.c.l.b16 %v27
  %v41 = vunpack.c.l.b16 %v28
  %v42 = vunpack.c.l.b16 %v29
  %v43 = vpack.c.b16 %v40, %v39
  %v44 = vpack.c.b16 %v42, %v41
  %vm47 = vcmask 261120
  %v49 = vsel %vm47, %v34, 0
  %51 = vmatprep.subr.bf16.mxu0 0
  %52 = vmatpush1.bf16.msra.mxu0 0
  %53 = vmatprep.subr.bf16.mxu0 0
  %54 = vmatpush1.bf16.msra.mxu0 0
  %55 = vmatprep.subr.bf16.mxu0 0
  %56 = vmatpush1.bf16.msra.mxu0 0
  %57 = vmatprep.subr.bf16.mxu0 0
  %58 = vmatpush1.bf16.msra.mxu0 0
  %59 = vmatprep.subr.bf16.mxu0 0
  %60 = vmatpush1.bf16.msra.mxu0 0
  %61 = vmatprep.subr.bf16.mxu0 0
  %62 = vmatpush1.bf16.msra.mxu0 0
  %63 = vmatprep.subr.bf16.mxu0 0
  %64 = vmatpush1.bf16.msra.mxu0 %v44
  %65 = vmatprep.subr.bf16.mxu0 0
  %66 = vmatpush1.bf16.msra.mxu0 %v43
  %67 = vmatprep.subr.bf16.mxu0 0
  %68 = vmatpush2.bf16.msra.mxu0 0
  %69 = vmatprep.subr.bf16.mxu0 0
  %70 = vmatpush2.bf16.msra.mxu0 0
  %71 = vmatprep.subr.bf16.mxu0 0
  %72 = vmatpush2.bf16.msra.mxu0 0
  %73 = vmatprep.subr.bf16.mxu0 0
  %74 = vmatpush2.bf16.msra.mxu0 0
  %75 = vmatprep.subr.bf16.mxu0 0
  %76 = vmatpush2.bf16.msra.mxu0 0
  %77 = vmatprep.subr.bf16.mxu0 0
  %78 = vmatpush2.bf16.msra.mxu0 0
  %79 = vmatprep.subr.bf16.mxu0 0
  %80 = vmatpush2.bf16.msra.mxu0 0
  %81 = vmatprep.subr.bf16.mxu0 0
  %82 = vmatpush2.bf16.msra.mxu0 0
  %83 = vmatprep.mubr.bf16.mxu0 0
  %84 = vmatmul.mubr.bf16.gmra.mxu0 %v49
  %v85 = vpop.f32.mrf.mxu0
  %v86 = vadd.f32 0.0, %v85
  %v87 = vpop.f32.mrf.mxu0
  %v88 = vpop.f32.mrf.mxu0
  %v89 = vadd.f32 0.0, %v88
  %v90 = vpop.f32.mrf.mxu0
  %91 = vdwg.mxu0
  %v92 = vadd.f32 %v22, %v86
  %v93 = vadd.f32 %v23, %v89
  %vm94 = vcmask 523264
  %95 = vst.msk [vmem:[#allocation2] sm:$0xff] %vm94, %v92
  %96 = vst.msk [vmem:[#allocation2 + $0x8] sm:$0xff] %vm94, %v93
  // Predicated region
  $region18: #{decoder_forward.21} parent=0 // pred_check
    %p97 = pneg %p15
  $region19: #{decoder_forward.21} parent=0 // pred_check_branch
    %99 = sbr.rel (%p97) target = $region21
  $region20: #{decoder_forward.21} parent=0 // pred_region
    %v100 = vld [vmem:[#allocation2] sm:$0xff]
    %v101 = vld [vmem:[#allocation2 + $0x8] sm:$0xff]
    %v102 = vld [vmem:[%s2] sm:$0x1]
    %v104 = vlaneseq
    %v105 = vshrl.u32 %v104, 7
    %v106 = vsub.s32 0, %v105
    %v107 = vrot.slane %v102, %v106
    %v109 = vadd.f32 %v100, %v107
    %v110 = vadd.f32 %v101, %v107
    %v111 = vpack.c.bf16 %v110, %v109
    %v113 = vunpack.c.l.b16 %v111
    %v114 = vunpack.c.h.b16 %v111
    %v115 = vpack.c.b16 %v113, %v113
    %v116 = vpack.c.b16 %v114, %v114
    %vm119 = vcmask 519168
    %120 = vst.msk [vmem:[%s3] sm:$0xf] %vm119, %v115
    %121 = vst.msk [vmem:[%s3 + $0x4] sm:$0xf] %vm119, %v116
  $region21: #{decoder_forward.21} parent=0 // pred_fallthru
    _
  // Predicated region
  $region22: #{decoder_forward.21} parent=0 // pred_check
    _
  $region23: #{decoder_forward.21} parent=0 // pred_check_branch
    %123 = sbr.rel (0) target = $region25
  $region24: #{decoder_forward.21} parent=0 // pred_region
    _
  $region25: #{decoder_forward.21} parent=0 // pred_fallthru
    _
  // Predicated region
  $region26: #{decoder_forward.21} parent=0 // pred_check
    _
  $region27: #{decoder_forward.21} parent=0 // pred_check_branch
    %125 = sbr.rel (0) target = $region29
  $region28: #{decoder_forward.21} parent=0 // pred_region
    _
  $region29: #{decoder_forward.21} parent=0 // pred_fallthru
    _

// kernel: decoder_forward.22
$region0: #{decoder_forward.22}
  #allocation0 [shape = 'u32[]', space=smem, size = 0x4, offset = 0x4, fixed_abs, tag = 'smem constant byte address 0x4 - core index']
  #allocation1 [shape = 'u32[144,128]{1,0:T(1,128)}', space=vmem, size = 0x12000, scoped, tag = 'internal scratch']
  #allocation2 [shape = 's32[1]{0}', space=sflag, size = 0x4, scoped, tag = 'scoped memory for decoder_forward.22']
  #allocation3 [shape = 'u8[512]{0}', space=smem, size = 0x200, scoped, tag = 'prefetched SMEM operand 0']
  %s0 = inlined_call_operand.vmem [shape: s32[2], index: 0, kind: input, shape index: {}]
  %s1 = inlined_call_operand.vmem [shape: bf16[2,4,8,8], index: 1, kind: input, shape index: {}]
  %s2 = inlined_call_operand.vmem [shape: bf16[2,4,8,8], index: 2, kind: input, shape index: {}]
  %s3 = inlined_call_operand.vmem [shape: bf16[2,4,8,8], index: 3, kind: input, shape index: {}]
  %s4 = inlined_call_operand.vmem [shape: bf16[2,4,8,8], index: 4, kind: output, shape index: {}]
  %s5 = sld [smem:[#allocation0]]
  $region45: #{decoder_forward.22} parent=0
    _
  %s7 = ssub.s32 1, %s5
  %s8 = scalar_select 0, %s7, %s5
  %s9 = sshll.u32 %s0, 4
  %s10 = int_to_ptr.vmem [resolvable:$true] %s9
  %12 = dma.vmem_to_smem %s10, 16, [#allocation3], [#allocation2]
  %13 = dma.done [#allocation2], 16
  %14 = sfence
  loop: start=0, step=1, limit=10
  $region2: #{decoder_forward.22} parent=0 // loop_pre_header
    _
  $region3: #{decoder_forward.22} parent=0 // loop_header
    %s16 = sphi 0, %s20
    %p17 = scmp.ge.s32.totalorder %s16, 10
    %s23 = sphi 0, %s42
    %s24 = sphi 0, %s38
    %s25 = sphi 0, %s34
    %s26 = sphi 0, %s23
    %s27 = sphi 0, %s24
    %s28 = sphi 0, %s25
    %s29 = sphi 0, %s26
    %s30 = sphi 0, %s27
    %s31 = sphi 0, %s28
    %s49 = sphi 0, %s51
    %s52 = sphi 0, %s49
    %s53 = sphi 0, %s52
    %s69 = sphi 0, %s53
    %s77 = sphi 0, %s79
    %s80 = sphi 0, %s77
    %s81 = sphi 0, %s80
    %s97 = sphi 0, %s81
    %s105 = sphi 0, %s107
    %s108 = sphi 0, %s105
    %s109 = sphi 0, %s108
    %s125 = sphi 0, %s109
    %s135 = sphi 0, %s137
    %s138 = sphi 0, %s135
    %s139 = sphi 0, %s138
    %s155 = sphi 0, %s139
  $region4: #{decoder_forward.22} parent=0 // loop_header_branch
    %19 = sbr.rel (%p17) target = $region8
  $region5: #{decoder_forward.22} parent=0 // loop_body
    %s21 = ssub.s32 %s16, 1
    %s22 = ssub.s32 %s16, 2
    %s32 = sadd.s32 1, %s25
    %p33 = scmp.ge.s32.totalorder %s32, 1
    %s34 = scalar_select %p33, 0, %s32
    %s35 = sadd.s32 1, %s24
    %s36 = scalar_select %p33, %s35, %s24
    %p37 = scmp.ge.s32.totalorder %s36, 4
    %s38 = scalar_select %p37, 0, %s36
    %s39 = sadd.s32 1, %s23
    %s40 = scalar_select %p37, %s39, %s23
    %p41 = scmp.ge.s32.totalorder %s40, 2
    %s42 = scalar_select %p41, 0, %s40
    %s43 = ssub.s32 %s23, %s42
    %s44 = ssub.s32 %s24, %s38
    %s45 = sor.u32 %s43, %s44
    %s46 = ssub.s32 %s25, %s34
    %s47 = sor.u32 %s45, %s46
    %p48 = scmp.eq.s32.totalorder %s47, 0
    %s50 = sadd.s32 %s49, 1
    %s51 = scalar_select %p48, %s49, %s50
    %p54 = pneg %p48
    %p55 = scmp.eq.s32.totalorder %s16, 7
    %p56 = por %p54, %p55
    %p57 = scmp.ne.s32.totalorder %s49, %s52
    %p58 = scmp.eq.s32.totalorder %s16, 0
    %p59 = por %p57, %p58
    %p60 = scmp.ne.s32.totalorder %s49, %s52
    %p61 = scmp.eq.s32.totalorder %s21, 7
    %p62 = por %p60, %p61
    %p63 = scmp.ne.s32.totalorder %s52, %s53
    %p64 = scmp.eq.s32.totalorder %s21, 0
    %p65 = por %p63, %p64
    %p66 = scmp.ne.s32.totalorder %s52, %s53
    %p67 = scmp.eq.s32.totalorder %s22, 7
    %p68 = por %p66, %p67
    %p70 = scmp.ne.s32.totalorder %s53, %s69
    %p71 = scmp.eq.s32.totalorder %s22, 0
    %p72 = por %p70, %p71
    %s73 = ssub.s32 %s23, %s42
    %s74 = ssub.s32 %s24, %s38
    %s75 = sor.u32 %s73, %s74
    %p76 = scmp.eq.s32.totalorder %s75, 0
    %s78 = sadd.s32 %s77, 1
    %s79 = scalar_select %p76, %s77, %s78
    %p82 = pneg %p76
    %p83 = scmp.eq.s32.totalorder %s16, 7
    %p84 = por %p82, %p83
    %p85 = scmp.ne.s32.totalorder %s77, %s80
    %p86 = scmp.eq.s32.totalorder %s16, 0
    %p87 = por %p85, %p86
    %p88 = scmp.ne.s32.totalorder %s77, %s80
    %p89 = scmp.eq.s32.totalorder %s21, 7
    %p90 = por %p88, %p89
    %p91 = scmp.ne.s32.totalorder %s80, %s81
    %p92 = scmp.eq.s32.totalorder %s21, 0
    %p93 = por %p91, %p92
    %p94 = scmp.ne.s32.totalorder %s80, %s81
    %p95 = scmp.eq.s32.totalorder %s22, 7
    %p96 = por %p94, %p95
    %p98 = scmp.ne.s32.totalorder %s81, %s97
    %p99 = scmp.eq.s32.totalorder %s22, 0
    %p100 = por %p98, %p99
    %s101 = ssub.s32 %s23, %s42
    %s102 = ssub.s32 %s24, %s38
    %s103 = sor.u32 %s101, %s102
    %p104 = scmp.eq.s32.totalorder %s103, 0
    %s106 = sadd.s32 %s105, 1
    %s107 = scalar_select %p104, %s105, %s106
    %p110 = pneg %p104
    %p111 = scmp.eq.s32.totalorder %s16, 7
    %p112 = por %p110, %p111
    %p113 = scmp.ne.s32.totalorder %s105, %s108
    %p114 = scmp.eq.s32.totalorder %s16, 0
    %p115 = por %p113, %p114
    %p116 = scmp.ne.s32.totalorder %s105, %s108
    %p117 = scmp.eq.s32.totalorder %s21, 7
    %p118 = por %p116, %p117
    %p119 = scmp.ne.s32.totalorder %s108, %s109
    %p120 = scmp.eq.s32.totalorder %s21, 0
    %p121 = por %p119, %p120
    %p122 = scmp.ne.s32.totalorder %s108, %s109
    %p123 = scmp.eq.s32.totalorder %s22, 7
    %p124 = por %p122, %p123
    %p126 = scmp.ne.s32.totalorder %s109, %s125
    %p127 = scmp.eq.s32.totalorder %s22, 0
    %p128 = por %p126, %p127
    %s129 = ssub.s32 %s23, %s42
    %s130 = ssub.s32 %s24, %s38
    %s131 = sor.u32 %s129, %s130
    %s132 = ssub.s32 %s25, %s34
    %s133 = sor.u32 %s131, %s132
    %p134 = scmp.eq.s32.totalorder %s133, 0
    %s136 = sadd.s32 %s135, 1
    %s137 = scalar_select %p134, %s135, %s136
    %p140 = pneg %p134
    %p141 = scmp.eq.s32.totalorder %s16, 7
    %p142 = por %p140, %p141
    %p143 = scmp.ne.s32.totalorder %s135, %s138
    %p144 = scmp.eq.s32.totalorder %s16, 0
    %p145 = por %p143, %p144
    %p146 = scmp.ne.s32.totalorder %s135, %s138
    %p147 = scmp.eq.s32.totalorder %s21, 7
    %p148 = por %p146, %p147
    %p149 = scmp.ne.s32.totalorder %s138, %s139
    %p150 = scmp.eq.s32.totalorder %s21, 0
    %p151 = por %p149, %p150
    %p152 = scmp.ne.s32.totalorder %s138, %s139
    %p153 = scmp.eq.s32.totalorder %s22, 7
    %p154 = por %p152, %p153
    %p156 = scmp.ne.s32.totalorder %s139, %s155
    %p157 = scmp.eq.s32.totalorder %s22, 0
    %p158 = por %p156, %p157
    %p159 = scmp.le.s32.totalorder 1, %s16
    %p160 = scmp.lt.s32.totalorder %s16, 9
    %p161 = pnand %p159, %p160
    %p162 = pneg %p161
    // Predicated region
    $region9: #{decoder_forward.22} parent=5 // pred_check
      _
    $region10: #{decoder_forward.22} parent=5 // pred_check_branch
      %164 = sbr.rel (%p161) target = $region12
    $region11: #{decoder_forward.22} parent=5 // pred_region
      %s165 = ssub.s32 %s16, 1
    $region12: #{decoder_forward.22} parent=5 // pred_fallthru
      _
    %p166 = scmp.lt.s32.totalorder %s16, 8
    // Predicated region
    $region13: #{decoder_forward.22} parent=5 // pred_check
      %p167 = pneg %p166
    $region14: #{decoder_forward.22} parent=5 // pred_check_branch
      %169 = sbr.rel (%p167) target = $region16
    $region15: #{decoder_forward.22} parent=5 // pred_region
      // Predicated region
      $region17: #{decoder_forward.22} parent=15 // pred_check
        %p170 = pneg %p59
      $region18: #{decoder_forward.22} parent=15 // pred_check_branch
        %172 = sbr.rel (%p170) target = $region20
      $region19: #{decoder_forward.22} parent=15 // pred_region
        %p173 = scmp.lt.s32.totalorder %s23, 1
        %s174 = scalar_select %p173, %s23, 1
        %p175 = scmp.lt.s32.totalorder %s24, 3
        %s176 = scalar_select %p175, %s24, 3
        %p177 = scmp.lt.s32.totalorder %s25, 0
        %s178 = scalar_select %p177, %s25, 0
        %s179 = sadd.s32 %s178, %s176
        %s180 = smul.addr %s174, 4
        %s181 = sadd.s32 %s179, %s180
        %s182 = smul.addr %s181, 4
        %s183 = scalar_lea.vmem %s1, %s182
      $region20: #{decoder_forward.22} parent=15 // pred_fallthru
        _
      // Predicated region
      $region21: #{decoder_forward.22} parent=15 // pred_check
        %p184 = pneg %p87
      $region22: #{decoder_forward.22} parent=15 // pred_check_branch
        %186 = sbr.rel (%p184) target = $region24
      $region23: #{decoder_forward.22} parent=15 // pred_region
        %p187 = scmp.lt.s32.totalorder %s23, 1
        %s188 = scalar_select %p187, %s23, 1
        %p189 = scmp.lt.s32.totalorder %s24, 3
        %s190 = scalar_select %p189, %s24, 3
        %s191 = smul.addr %s188, 4
        %s192 = sadd.s32 %s190, %s191
        %s193 = smul.addr %s192, 4
        %s194 = scalar_lea.vmem %s2, %s193
      $region24: #{decoder_forward.22} parent=15 // pred_fallthru
        _
      // Predicated region
      $region25: #{decoder_forward.22} parent=15 // pred_check
        %p195 = pneg %p115
      $region26: #{decoder_forward.22} parent=15 // pred_check_branch
        %197 = sbr.rel (%p195) target = $region28
      $region27: #{decoder_forward.22} parent=15 // pred_region
        %p198 = scmp.lt.s32.totalorder %s23, 1
        %s199 = scalar_select %p198, %s23, 1
        %p200 = scmp.lt.s32.totalorder %s24, 3
        %s201 = scalar_select %p200, %s24, 3
        %s202 = smul.addr %s199, 4
        %s203 = sadd.s32 %s201, %s202
        %s204 = smul.addr %s203, 4
        %s205 = scalar_lea.vmem %s3, %s204
      $region28: #{decoder_forward.22} parent=15 // pred_fallthru
        _
    $region16: #{decoder_forward.22} parent=5 // pred_fallthru
      _
    %p206 = scmp.le.s32.totalorder 1, %s16
    %p207 = scmp.lt.s32.totalorder %s16, 9
    %p208 = pnand %p206, %p207
    %p209 = pneg %p208
    // Predicated region
    $region29: #{decoder_forward.22} parent=5 // pred_check
      _
    $region30: #{decoder_forward.22} parent=5 // pred_check_branch
      %211 = sbr.rel (%p208) target = $region32
    $region31: #{decoder_forward.22} parent=5 // pred_region
      %s212 = ssub.s32 %s16, 1
      %p213 = scmp.lt.s32.totalorder %s26, 1
      %s214 = scalar_select %p213, %s26, 1
      %p215 = scmp.lt.s32.totalorder %s27, 3
      %s216 = scalar_select %p215, %s27, 3
      %p217 = scmp.lt.s32.totalorder %s28, 0
      %s218 = scalar_select %p217, %s28, 0
      %s219 = sadd.s32 %s218, %s216
      %s220 = smul.addr %s214, 4
      %s221 = sadd.s32 %s219, %s220
      %s222 = smul.addr %s221, 4
      %s223 = scalar_lea.vmem %s1, %s222
      %p224 = pneg %p65
      %p225 = pneg %p62
      %p226 = scmp.lt.s32.totalorder %s26, 1
      %s227 = scalar_select %p226, %s26, 1
      %p228 = scmp.lt.s32.totalorder %s27, 3
      %s229 = scalar_select %p228, %s27, 3
      %s230 = smul.addr %s227, 4
      %s231 = sadd.s32 %s229, %s230
      %s232 = smul.addr %s231, 4
      %s233 = scalar_lea.vmem %s2, %s232
      %p234 = pneg %p93
      %p235 = pneg %p90
      %p236 = scmp.lt.s32.totalorder %s26, 1
      %s237 = scalar_select %p236, %s26, 1
      %p238 = scmp.lt.s32.totalorder %s27, 3
      %s239 = scalar_select %p238, %s27, 3
      %s240 = smul.addr %s237, 4
      %s241 = sadd.s32 %s239, %s240
      %s242 = smul.addr %s241, 4
      %s243 = scalar_lea.vmem %s3, %s242
      %p244 = pneg %p121
      %p245 = pneg %p118
      %p246 = pneg %p151
      %p247 = pneg %p148
      %p248 = scmp.lt.s32.totalorder %s26, 1
      %s249 = scalar_select %p248, %s26, 1
      %p250 = scmp.lt.s32.totalorder %s27, 3
      %s251 = scalar_select %p250, %s27, 3
      %p252 = scmp.lt.s32.totalorder %s28, 0
      %s253 = scalar_select %p252, %s28, 0
      %s254 = sadd.s32 %s253, %s251
      %s255 = smul.addr %s249, 4
      %s256 = sadd.s32 %s254, %s255
      %s257 = smul.addr %s256, 4
      %s258 = scalar_lea.vmem %s4, %s257
      %p259 = scmp.lt.s32.totalorder %s26, 1
      %s260 = scalar_select %p259, %s26, 1
      %p261 = scmp.lt.s32.totalorder %s27, 3
      %s262 = scalar_select %p261, %s27, 3
      %p263 = scmp.lt.s32.totalorder %s28, 0
      %s264 = scalar_select %p263, %s28, 0
      %s265 = sadd.s32 %s264, %s262
      %s266 = smul.addr %s260, 4
      %s267 = sadd.s32 %s265, %s266
      %s268 = smul.addr %s267, 4
      %s269 = scalar_lea.vmem %s1, %s268
      %p270 = scmp.lt.s32.totalorder %s26, 1
      %s271 = scalar_select %p270, %s26, 1
      %p272 = scmp.lt.s32.totalorder %s27, 3
      %s273 = scalar_select %p272, %s27, 3
      %s274 = smul.addr %s271, 4
      %s275 = sadd.s32 %s273, %s274
      %s276 = smul.addr %s275, 4
      %s277 = scalar_lea.vmem %s2, %s276
      %p278 = scmp.lt.s32.totalorder %s26, 1
      %s279 = scalar_select %p278, %s26, 1
      %p280 = scmp.lt.s32.totalorder %s27, 3
      %s281 = scalar_select %p280, %s27, 3
      %s282 = smul.addr %s279, 4
      %s283 = sadd.s32 %s281, %s282
      %s284 = smul.addr %s283, 4
      %s285 = scalar_lea.vmem %s3, %s284
      %p286 = scmp.lt.s32.totalorder %s26, 1
      %s287 = scalar_select %p286, %s26, 1
      %p288 = scmp.lt.s32.totalorder %s27, 3
      %s289 = scalar_select %p288, %s27, 3
      %p290 = scmp.lt.s32.totalorder %s28, 0
      %s291 = scalar_select %p290, %s28, 0
      %s292 = sadd.s32 %s291, %s289
      %s293 = smul.addr %s287, 4
      %s294 = sadd.s32 %s292, %s293
      %s295 = smul.addr %s294, 4
      %s296 = scalar_lea.vmem %s4, %s295
      %v298 = vld [vmem:[%s269] sm:$0xf]
      %v299 = vld [vmem:[%s277] sm:$0xf]
      %vm300 = vcmask 64512
      %v302 = vsel %vm300, %v298, 0
      %v305 = vsel %vm300, %v299, 0
      %307 = vmatprep.subr.bf16.mxu0 0
      %308 = vmatpush1.bf16.xpose.msra.mxu0 0
      %309 = vmatprep.subr.bf16.mxu0 0
      %310 = vmatpush1.bf16.xpose.msra.mxu0 0
      %311 = vmatprep.subr.bf16.mxu0 0
      %312 = vmatpush1.bf16.xpose.msra.mxu0 0
      %313 = vmatprep.subr.bf16.mxu0 0
      %314 = vmatpush1.bf16.xpose.msra.mxu0 0
      %315 = vmatprep.subr.bf16.mxu0 0
      %316 = vmatpush1.bf16.xpose.msra.mxu0 0
      %317 = vmatprep.subr.bf16.mxu0 0
      %318 = vmatpush1.bf16.xpose.msra.mxu0 0
      %319 = vmatprep.subr.bf16.mxu0 0
      %320 = vmatpush1.bf16.xpose.msra.mxu0 0
      %321 = vmatprep.subr.bf16.mxu0 0
      %322 = vmatpush1.bf16.xpose.msra.mxu0 %v305
      %323 = vmatprep.subr.bf16.mxu0 0
      %324 = vmatpush2.bf16.xpose.msra.mxu0 0
      %325 = vmatprep.subr.bf16.mxu0 0
      %326 = vmatpush2.bf16.xpose.msra.mxu0 0
      %327 = vmatprep.subr.bf16.mxu0 0
      %328 = vmatpush2.bf16.xpose.msra.mxu0 0
      %329 = vmatprep.subr.bf16.mxu0 0
      %330 = vmatpush2.bf16.xpose.msra.mxu0 0
      %331 = vmatprep.subr.bf16.mxu0 0
      %332 = vmatpush2.bf16.xpose.msra.mxu0 0
      %333 = vmatprep.subr.bf16.mxu0 0
      %334 = vmatpush2.bf16.xpose.msra.mxu0 0
      %335 = vmatprep.subr.bf16.mxu0 0
      %336 = vmatpush2.bf16.xpose.msra.mxu0 0
      %337 = vmatprep.subr.bf16.mxu0 0
      %338 = vmatpush2.bf16.xpose.msra.mxu0 0
      %339 = vmatprep.mubr.bf16.mxu0 0
      %340 = vmatmul.mubr.bf16.gmra.mxu0 %v302
      %v341 = vpop.f32.mrf.mxu0
      %v342 = vadd.f32 0.0, %v341
      %v343 = vpop.f32.mrf.mxu0
      %v344 = vpop.f32.mrf.mxu0
      %v345 = vpop.f32.mrf.mxu0
      %346 = vdwg.mxu0
      %v347 = vlaneseq
      %v348 = vand.u32 %v347, 127
      %s349 = sld [smem:[#allocation3 + %s26]]
      %v350 = vstv %s349
      %vm351 = vcmp.lt.s32.totalorder %v348, %v350
      %v352 = vsel %vm351, %v342, -1e+09
      %v353 = vsel %vm300, %v352, -inf
      %354 = vmax.xlane.f32.xlu0 %v353
      %v355 = vpop.xlane.xlu0 %354
      %v356 = vsub.f32 %v352, %v355
      %v357 = vmul.f32 %v356, 1.442695
      %v358 = vpow.pop %v357
      %v359 = vsel %vm300, %v358, 0.0
      %360 = vadd.xlane.f32.xlu0 %v359
      %v361 = vpop.xlane.xlu0 %360
      %v362 = vrcp.pop %v361
      %v363 = vmul.f32 %v358, %v362
      %v364 = vpack.c.bf16 %v363, %v363
      %v365 = vld [vmem:[%s285] sm:$0xf]
      %v367 = vsel %vm300, %v364, 0
      %vm369 = vcmask 1043456
      %v371 = vsel %vm369, %v365, 0
      %373 = vmatprep.subr.bf16.mxu0 0
      %374 = vmatpush1.bf16.msra.mxu0 0
      %375 = vmatprep.subr.bf16.mxu0 0
      %376 = vmatpush1.bf16.msra.mxu0 0
      %377 = vmatprep.subr.bf16.mxu0 0
      %378 = vmatpush1.bf16.msra.mxu0 0
      %379 = vmatprep.subr.bf16.mxu0 0
      %380 = vmatpush1.bf16.msra.mxu0 0
      %381 = vmatprep.subr.bf16.mxu0 0
      %382 = vmatpush1.bf16.msra.mxu0 0
      %383 = vmatprep.subr.bf16.mxu0 0
      %384 = vmatpush1.bf16.msra.mxu0 0
      %385 = vmatprep.subr.bf16.mxu0 0
      %386 = vmatpush1.bf16.msra.mxu0 0
      %387 = vmatprep.subr.bf16.mxu0 0
      %388 = vmatpush1.bf16.msra.mxu0 %v371
      %389 = vmatprep.subr.bf16.mxu0 0
      %390 = vmatpush2.bf16.msra.mxu0 0
      %391 = vmatprep.subr.bf16.mxu0 0
      %392 = vmatpush2.bf16.msra.mxu0 0
      %393 = vmatprep.subr.bf16.mxu0 0
      %394 = vmatpush2.bf16.msra.mxu0 0
      %395 = vmatprep.subr.bf16.mxu0 0
      %396 = vmatpush2.bf16.msra.mxu0 0
      %397 = vmatprep.subr.bf16.mxu0 0
      %398 = vmatpush2.bf16.msra.mxu0 0
      %399 = vmatprep.subr.bf16.mxu0 0
      %400 = vmatpush2.bf16.msra.mxu0 0
      %401 = vmatprep.subr.bf16.mxu0 0
      %402 = vmatpush2.bf16.msra.mxu0 0
      %403 = vmatprep.subr.bf16.mxu0 0
      %404 = vmatpush2.bf16.msra.mxu0 0
      %405 = vmatprep.mubr.bf16.mxu0 0
      %406 = vmatmul.mubr.bf16.gmra.mxu0 %v367
      %v407 = vpop.f32.mrf.mxu0
      %v408 = vadd.f32 0.0, %v407
      %v409 = vpop.f32.mrf.mxu0
      %v410 = vpop.f32.mrf.mxu0
      %v411 = vpop.f32.mrf.mxu0
      %412 = vdwg.mxu0
      %v413 = vpack.c.bf16 %v408, %v408
      %vm414 = vcmask 60416
      %415 = vst.msk [vmem:[%s296] sm:$0xf] %vm414, %v413
      %p416 = scmp.lt.s32.totalorder %s26, 1
      %s417 = scalar_select %p416, %s26, 1
      %p418 = scmp.lt.s32.totalorder %s27, 3
      %s419 = scalar_select %p418, %s27, 3
      %p420 = scmp.lt.s32.totalorder %s28, 0
      %s421 = scalar_select %p420, %s28, 0
      %s422 = sadd.s32 %s421, %s419
      %s423 = smul.addr %s417, 4
      %s424 = sadd.s32 %s422, %s423
      %s425 = smul.addr %s424, 4
      %s426 = scalar_lea.vmem %s4, %s425
      // Predicated region
      $region33: #{decoder_forward.22} parent=31 // pred_check
        %p427 = pneg %p148
      $region34: #{decoder_forward.22} parent=31 // pred_check_branch
        %429 = sbr.rel (%p427) target = $region36
      $region35: #{decoder_forward.22} parent=31 // pred_region
        _
      $region36: #{decoder_forward.22} parent=31 // pred_fallthru
        _
    $region32: #{decoder_forward.22} parent=5 // pred_fallthru
      _
    %p430 = scmp.le.s32.totalorder 2, %s16
    // Predicated region
    $region37: #{decoder_forward.22} parent=5 // pred_check
      %p431 = pneg %p430
    $region38: #{decoder_forward.22} parent=5 // pred_check_branch
      %433 = sbr.rel (%p431) target = $region40
    $region39: #{decoder_forward.22} parent=5 // pred_region
      %s434 = ssub.s32 %s16, 2
      // Predicated region
      $region41: #{decoder_forward.22} parent=39 // pred_check
        %p435 = pneg %p154
      $region42: #{decoder_forward.22} parent=39 // pred_check_branch
        %437 = sbr.rel (%p435) target = $region44
      $region43: #{decoder_forward.22} parent=39 // pred_region
        %p438 = scmp.lt.s32.totalorder %s29, 1
        %s439 = scalar_select %p438, %s29, 1
        %p440 = scmp.lt.s32.totalorder %s30, 3
        %s441 = scalar_select %p440, %s30, 3
        %p442 = scmp.lt.s32.totalorder %s31, 0
        %s443 = scalar_select %p442, %s31, 0
        %s444 = sadd.s32 %s443, %s441
        %s445 = smul.addr %s439, 4
        %s446 = sadd.s32 %s444, %s445
        %s447 = smul.addr %s446, 4
        %s448 = scalar_lea.vmem %s4, %s447
      $region44: #{decoder_forward.22} parent=39 // pred_fallthru
        _
    $region40: #{decoder_forward.22} parent=5 // pred_fallthru
      _
  $region6: #{decoder_forward.22} parent=0 // loop_footer
    %s20 = sadd.s32 1, %s16
  $region7: #{decoder_forward.22} parent=0 // loop_footer_branch
    %15 = sbr.rel target = $region3
  $region8: #{decoder_forward.22} parent=0 // loop_exit
    _

// kernel: decoder_forward.33
$region0: #{decoder_forward.33}
  #allocation0 [shape = 'u32[]', space=smem, size = 0x4, offset = 0x4, fixed_abs, tag = 'smem constant byte address 0x4 - core index']
  #allocation1 [shape = 'u32[144,128]{1,0:T(1,128)}', space=vmem, size = 0x12000, scoped, tag = 'internal scratch']
  #allocation2 [shape = 'f32[16,128]{1,0:T(8,128)}', space=vmem, size = 0x2000, scoped, tag = 'scratch operand']
  %s0 = inlined_call_operand.vmem [shape: bf16[16,32], index: 0, kind: input, shape index: {}]
  %s1 = inlined_call_operand.vmem [shape: bf16[32,128], index: 1, kind: input, shape index: {}]
  %s2 = inlined_call_operand.vmem [shape: f32[1,128], index: 2, kind: input, shape index: {}]
  %s3 = inlined_call_operand.vmem [shape: f32[16,128], index: 3, kind: output, shape index: {}]
  %s4 = sld [smem:[#allocation0]]
  $region30: #{decoder_forward.33} parent=0
    _
  %s6 = ssub.s32 1, %s4
  %s7 = scalar_select 0, %s6, %s4
  // Predicated region
  $region2: #{decoder_forward.33} parent=0 // pred_check
    _
  $region3: #{decoder_forward.33} parent=0 // pred_check_branch
    %9 = sbr.rel (0) target = $region5
  $region4: #{decoder_forward.33} parent=0 // pred_region
    _
  $region5: #{decoder_forward.33} parent=0 // pred_fallthru
    _
  // Predicated region
  $region6: #{decoder_forward.33} parent=0 // pred_check
    _
  $region7: #{decoder_forward.33} parent=0 // pred_check_branch
    %11 = sbr.rel (0) target = $region9
  $region8: #{decoder_forward.33} parent=0 // pred_region
    _
  $region9: #{decoder_forward.33} parent=0 // pred_fallthru
    _
  // Predicated region
  $region10: #{decoder_forward.33} parent=0 // pred_check
    _
  $region11: #{decoder_forward.33} parent=0 // pred_check_branch
    %13 = sbr.rel (0) target = $region13
  $region12: #{decoder_forward.33} parent=0 // pred_region
    _
  $region13: #{decoder_forward.33} parent=0 // pred_fallthru
    _
  %p15 = scmp.eq.s32.totalorder 0, 0
  // Predicated region
  $region14: #{decoder_forward.33} parent=0 // pred_check
    %p16 = pneg %p15
  $region15: #{decoder_forward.33} parent=0 // pred_check_branch
    %18 = sbr.rel (%p16) target = $region17
  $region16: #{decoder_forward.33} parent=0 // pred_region
    %19 = vst [vmem:[#allocation2] sm:$0xff] 0.0
    %20 = vst [vmem:[#allocation2 + $0x8] sm:$0xff] 0.0
  $region17: #{decoder_forward.33} parent=0 // pred_fallthru
    _
  %v21 = vld [vmem:[#allocation2] sm:$0xff]
  %v22 = vld [vmem:[#allocation2 + $0x8] sm:$0xff]
  %v23 = vld [vmem:[%s0] sm:$0xf]
  %v24 = vld [vmem:[%s0 + $0x4] sm:$0xf]
  %v25 = vld [vmem:[%s1] sm:$0xf]
  %v26 = vld [vmem:[%s1 + $0x4] sm:$0xf]
  %v27 = vld [vmem:[%s1 + $0x8] sm:$0xf]
  %v28 = vld [vmem:[%s1 + $0xc] sm:$0xf]
  %v31 = vunpack.c.l.b16 %v23
  %v32 = vunpack.c.l.b16 %v24
  %v33 = vpack.c.b16 %v32, %v31
  %v38 = vunpack.c.l.b16 %v25
  %v39 = vunpack.c.l.b16 %v26
  %v40 = vunpack.c.l.b16 %v27
  %v41 = vunpack.c.l.b16 %v28
  %v42 = vpack.c.b16 %v39, %v38
  %v43 = vpack.c.b16 %v41, %v40
  %vm46 = vcmask 261120
  %v48 = vsel %vm46, %v33, 0
  %50 = vmatprep.subr.bf16.mxu0 0
  %51 = vmatpush1.bf16.msra.mxu0 0
  %52 = vmatprep.subr.bf16.mxu0 0
  %53 = vmatpush1.bf16.msra.mxu0 0
  %54 = vmatprep.subr.bf16.mxu0 0
  %55 = vmatpush1.bf16.msra.mxu0 0
  %56 = vmatprep.subr.bf16.mxu0 0
  %57 = vmatpush1.bf16.msra.mxu0 0
  %58 = vmatprep.subr.bf16.mxu0 0
  %59 = vmatpush1.bf16.msra.mxu0 0
  %60 = vmatprep.subr.bf16.mxu0 0
  %61 = vmatpush1.bf16.msra.mxu0 0
  %62 = vmatprep.subr.bf16.mxu0 0
  %63 = vmatpush1.bf16.msra.mxu0 %v43
  %64 = vmatprep.subr.bf16.mxu0 0
  %65 = vmatpush1.bf16.msra.mxu0 %v42
  %66 = vmatprep.subr.bf16.mxu0 0
  %67 = vmatpush2.bf16.msra.mxu0 0
  %68 = vmatprep.subr.bf16.mxu0 0
  %69 = vmatpush2.bf16.msra.mxu0 0
  %70 = vmatprep.subr.bf16.mxu0 0
  %71 = vmatpush2.bf16.msra.mxu0 0
  %72 = vmatprep.subr.bf16.mxu0 0
  %73 = vmatpush2.bf16.msra.mxu0 0
  %74 = vmatprep.subr.bf16.mxu0 0
  %75 = vmatpush2.bf16.msra.mxu0 0
  %76 = vmatprep.subr.bf16.mxu0 0
  %77 = vmatpush2.bf16.msra.mxu0 0
  %78 = vmatprep.subr.bf16.mxu0 0
  %79 = vmatpush2.bf16.msra.mxu0 0
  %80 = vmatprep.subr.bf16.mxu0 0
  %81 = vmatpush2.bf16.msra.mxu0 0
  %82 = vmatprep.mubr.bf16.mxu0 0
  %83 = vmatmul.mubr.bf16.gmra.mxu0 %v48
  %v84 = vpop.f32.mrf.mxu0
  %v85 = vadd.f32 0.0, %v84
  %v86 = vpop.f32.mrf.mxu0
  %v87 = vpop.f32.mrf.mxu0
  %v88 = vadd.f32 0.0, %v87
  %v89 = vpop.f32.mrf.mxu0
  %90 = vdwg.mxu0
  %v91 = vadd.f32 %v21, %v85
  %v92 = vadd.f32 %v22, %v88
  %93 = vst [vmem:[#allocation2] sm:$0xff] %v91
  %94 = vst [vmem:[#allocation2 + $0x8] sm:$0xff] %v92
  // Predicated region
  $region18: #{decoder_forward.33} parent=0 // pred_check
    %p95 = pneg %p15
  $region19: #{decoder_forward.33} parent=0 // pred_check_branch
    %97 = sbr.rel (%p95) target = $region21
  $region20: #{decoder_forward.33} parent=0 // pred_region
    %v98 = vld [vmem:[#allocation2] sm:$0xff]
    %v99 = vld [vmem:[#allocation2 + $0x8] sm:$0xff]
    %v100 = vld [vmem:[%s2] sm:$0x1]
    %v102 = vlaneseq
    %v103 = vshrl.u32 %v102, 7
    %v104 = vsub.s32 0, %v103
    %v105 = vrot.slane %v100, %v104
    %v107 = vadd.f32 %v98, %v105
    %v108 = vadd.f32 %v99, %v105
    %109 = vst [vmem:[%s3] sm:$0xff] %v107
    %110 = vst [vmem:[%s3 + $0x8] sm:$0xff] %v108
  $region21: #{decoder_forward.33} parent=0 // pred_fallthru
    _
  // Predicated region
  $region22: #{decoder_forward.33} parent=0 // pred_check
    _
  $region23: #{decoder_forward.33} parent=0 // pred_check_branch
    %112 = sbr.rel (0) target = $region25
  $region24: #{decoder_forward.33} parent=0 // pred_region
    _
  $region25: #{decoder_forward.33} parent=0 // pred_fallthru
    _
  // Predicated region
  $region26: #{decoder_forward.33} parent=0 // pred_check
    _
  $region27: #{decoder_forward.33} parent=0 // pred_check_branch
    %114 = sbr.rel (0) target = $region29
  $region28: #{decoder_forward.33} parent=0 // pred_region
    _
  $region29: #{decoder_forward.33} parent=0 // pred_fallthru
    _

// kernel: decoder_forward.24
$region0: #{decoder_forward.24}
  #allocation0 [shape = 'u32[]', space=smem, size = 0x4, offset = 0x4, fixed_abs, tag = 'smem constant byte address 0x4 - core index']
  #allocation1 [shape = 'u32[144,128]{1,0:T(1,128)}', space=vmem, size = 0x12000, scoped, tag = 'internal scratch']
  #allocation2 [shape = 'f32[16,32]{1,0:T(8,128)}', space=vmem, size = 0x2000, scoped, tag = 'scratch operand']
  %s0 = inlined_call_operand.vmem [shape: bf16[16,32], index: 0, kind: input, shape index: {}]
  %s1 = inlined_call_operand.vmem [shape: bf16[32,64], index: 1, kind: input, shape index: {}]
  %s2 = inlined_call_operand.vmem [shape: f32[1,64], index: 2, kind: input, shape index: {}]
  %s3 = inlined_call_operand.vmem [shape: bf16[64,32], index: 3, kind: input, shape index: {}]
  %s4 = inlined_call_operand.vmem [shape: f32[1,32], index: 4, kind: input, shape index: {}]
  %s5 = inlined_call_operand.vmem [shape: f32[1,32], index: 5, kind: input, shape index: {}]
  %s6 = inlined_call_operand.vmem [shape: f32[1,32], index: 6, kind: input, shape index: {}]
  %s7 = inlined_call_operand.vmem [shape: bf16[16,32], index: 7, kind: output, shape index: {}]
  %s8 = sld [smem:[#allocation0]]
  $region46: #{decoder_forward.24} parent=0
    _
  %s10 = ssub.s32 1, %s8
  %s11 = scalar_select 0, %s10, %s8
  // Predicated region
  $region2: #{decoder_forward.24} parent=0 // pred_check
    _
  $region3: #{decoder_forward.24} parent=0 // pred_check_branch
    %13 = sbr.rel (0) target = $region5
  $region4: #{decoder_forward.24} parent=0 // pred_region
    _
  $region5: #{decoder_forward.24} parent=0 // pred_fallthru
    _
  // Predicated region
  $region6: #{decoder_forward.24} parent=0 // pred_check
    _
  $region7: #{decoder_forward.24} parent=0 // pred_check_branch
    %15 = sbr.rel (0) target = $region9
  $region8: #{decoder_forward.24} parent=0 // pred_region
    _
  $region9: #{decoder_forward.24} parent=0 // pred_fallthru
    _
  // Predicated region
  $region10: #{decoder_forward.24} parent=0 // pred_check
    _
  $region11: #{decoder_forward.24} parent=0 // pred_check_branch
    %17 = sbr.rel (0) target = $region13
  $region12: #{decoder_forward.24} parent=0 // pred_region
    _
  $region13: #{decoder_forward.24} parent=0 // pred_fallthru
    _
  // Predicated region
  $region14: #{decoder_forward.24} parent=0 // pred_check
    _
  $region15: #{decoder_forward.24} parent=0 // pred_check_branch
    %19 = sbr.rel (0) target = $region17
  $region16: #{decoder_forward.24} parent=0 // pred_region
    _
  $region17: #{decoder_forward.24} parent=0 // pred_fallthru
    _
  // Predicated region
  $region18: #{decoder_forward.24} parent=0 // pred_check
    _
  $region19: #{decoder_forward.24} parent=0 // pred_check_branch
    %21 = sbr.rel (0) target = $region21
  $region20: #{decoder_forward.24} parent=0 // pred_region
    _
  $region21: #{decoder_forward.24} parent=0 // pred_fallthru
    _
  // Predicated region
  $region22: #{decoder_forward.24} parent=0 // pred_check
    _
  $region23: #{decoder_forward.24} parent=0 // pred_check_branch
    %23 = sbr.rel (0) target = $region25
  $region24: #{decoder_forward.24} parent=0 // pred_region
    _
  $region25: #{decoder_forward.24} parent=0 // pred_fallthru
    _
  // Predicated region
  $region26: #{decoder_forward.24} parent=0 // pred_check
    _
  $region27: #{decoder_forward.24} parent=0 // pred_check_branch
    %25 = sbr.rel (0) target = $region29
  $region28: #{decoder_forward.24} parent=0 // pred_region
    _
  $region29: #{decoder_forward.24} parent=0 // pred_fallthru
    _
  %p27 = scmp.eq.s32.totalorder 0, 0
  // Predicated region
  $region30: #{decoder_forward.24} parent=0 // pred_check
    %p28 = pneg %p27
  $region31: #{decoder_forward.24} parent=0 // pred_check_branch
    %30 = sbr.rel (%p28) target = $region33
  $region32: #{decoder_forward.24} parent=0 // pred_region
    %vm31 = vcmask 261120
    %32 = vst.msk [vmem:[#allocation2] sm:$0xff] %vm31, 0.0
    %33 = vst.msk [vmem:[#allocation2 + $0x8] sm:$0xff] %vm31, 0.0
  $region33: #{decoder_forward.24} parent=0 // pred_fallthru
    _
  %v34 = vld [vmem:[%s0] sm:$0xf]
  %v35 = vld [vmem:[%s0 + $0x4] sm:$0xf]
  %v36 = vld [vmem:[%s1] sm:$0xf]
  %v37 = vld [vmem:[%s1 + $0x4] sm:$0xf]
  %v38 = vld [vmem:[%s1 + $0x8] sm:$0xf]
  %v39 = vld [vmem:[%s1 + $0xc] sm:$0xf]
  %v40 = vld [vmem:[%s2] sm:$0x1]
  %v42 = vlaneseq
  %v43 = vshrl.u32 %v42, 7
  %v44 = vsub.s32 0, %v43
  %v45 = vrot.slane %v40, %v44
  %v49 = vunpack.c.l.b16 %v34
  %v50 = vunpack.c.l.b16 %v35
  %v51 = vpack.c.b16 %v50, %v49
  %v56 = vunpack.c.l.b16 %v36
  %v57 = vunpack.c.l.b16 %v37
  %v58 = vunpack.c.l.b16 %v38
  %v59 = vunpack.c.l.b16 %v39
  %v60 = vpack.c.b16 %v57, %v56
  %v61 = vpack.c.b16 %v59, %v58
  %vm64 = vcmask 261120
  %v66 = vsel %vm64, %v51, 0
  %68 = vmatprep.subr.bf16.mxu0 0
  %69 = vmatpush1.bf16.msra.mxu0 0
  %70 = vmatprep.subr.bf16.mxu0 0
  %71 = vmatpush1.bf16.msra.mxu0 0
  %72 = vmatprep.subr.bf16.mxu0 0
  %73 = vmatpush1.bf16.msra.mxu0 0
  %74 = vmatprep.subr.bf16.mxu0 0
  %75 = vmatpush1.bf16.msra.mxu0 0
  %76 = vmatprep.subr.bf16.mxu0 0
  %77 = vmatpush1.bf16.msra.mxu0 0
  %78 = vmatprep.subr.bf16.mxu0 0
  %79 = vmatpush1.bf16.msra.mxu0 0
  %80 = vmatprep.subr.bf16.mxu0 0
  %81 = vmatpush1.bf16.msra.mxu0 %v61
  %82 = vmatprep.subr.bf16.mxu0 0
  %83 = vmatpush1.bf16.msra.mxu0 %v60
  %84 = vmatprep.subr.bf16.mxu0 0
  %85 = vmatpush2.bf16.msra.mxu0 0
  %86 = vmatprep.subr.bf16.mxu0 0
  %87 = vmatpush2.bf16.msra.mxu0 0
  %88 = vmatprep.subr.bf16.mxu0 0
  %89 = vmatpush2.bf16.msra.mxu0 0
  %90 = vmatprep.subr.bf16.mxu0 0
  %91 = vmatpush2.bf16.msra.mxu0 0
  %92 = vmatprep.subr.bf16.mxu0 0
  %93 = vmatpush2.bf16.msra.mxu0 0
  %94 = vmatprep.subr.bf16.mxu0 0
  %95 = vmatpush2.bf16.msra.mxu0 0
  %96 = vmatprep.subr.bf16.mxu0 0
  %97 = vmatpush2.bf16.msra.mxu0 0
  %98 = vmatprep.subr.bf16.mxu0 0
  %99 = vmatpush2.bf16.msra.mxu0 0
  %100 = vmatprep.mubr.bf16.mxu0 0
  %101 = vmatmul.mubr.bf16.gmra.mxu0 %v66
  %v102 = vpop.f32.mrf.mxu0
  %v103 = vadd.f32 %v45, %v102
  %v104 = vpop.f32.mrf.mxu0
  %v105 = vpop.f32.mrf.mxu0
  %v106 = vadd.f32 %v45, %v105
  %v107 = vpop.f32.mrf.mxu0
  %108 = vdwg.mxu0
  %v109 = vmax.f32 %v103, 0.0
  %v110 = vmax.f32 %v106, 0.0
  %v111 = vld [vmem:[#allocation2] sm:$0xff]
  %v112 = vld [vmem:[#allocation2 + $0x8] sm:$0xff]
  %v113 = vpack.c.bf16 %v110, %v109
  %v114 = vld [vmem:[%s3] sm:$0xf]
  %v115 = vld [vmem:[%s3 + $0x4] sm:$0xf]
  %v116 = vld [vmem:[%s3 + $0x8] sm:$0xf]
  %v117 = vld [vmem:[%s3 + $0xc] sm:$0xf]
  %v118 = vld [vmem:[%s3 + $0x10] sm:$0xf]
  %v119 = vld [vmem:[%s3 + $0x14] sm:$0xf]
  %v120 = vld [vmem:[%s3 + $0x18] sm:$0xf]
  %v121 = vld [vmem:[%s3 + $0x1c] sm:$0xf]
  %v130 = vunpack.c.l.b16 %v114
  %v131 = vunpack.c.l.b16 %v115
  %v132 = vunpack.c.l.b16 %v116
  %v133 = vunpack.c.l.b16 %v117
  %v134 = vunpack.c.l.b16 %v118
  %v135 = vunpack.c.l.b16 %v119
  %v136 = vunpack.c.l.b16 %v120
  %v137 = vunpack.c.l.b16 %v121
  %v138 = vpack.c.b16 %v131, %v130
  %v139 = vpack.c.b16 %v133, %v132
  %v140 = vpack.c.b16 %v135, %v134
  %v141 = vpack.c.b16 %v137, %v136
  %vm146 = vcmask 523264
  %v148 = vsel %vm146, %v113, 0
  %150 = vmatprep.subr.bf16.mxu0 0
  %151 = vmatpush1.bf16.msra.mxu0 0
  %152 = vmatprep.subr.bf16.mxu0 0
  %153 = vmatpush1.bf16.msra.mxu0 0
  %154 = vmatprep.subr.bf16.mxu0 0
  %155 = vmatpush1.bf16.msra.mxu0 0
  %156 = vmatprep.subr.bf16.mxu0 0
  %157 = vmatpush1.bf16.msra.mxu0 0
  %158 = vmatprep.subr.bf16.mxu0 0
  %159 = vmatpush1.bf16.msra.mxu0 %v141
  %160 = vmatprep.subr.bf16.mxu0 0
  %161 = vmatpush1.bf16.msra.mxu0 %v140
  %162 = vmatprep.subr.bf16.mxu0 0
  %163 = vmatpush1.bf16.msra.mxu0 %v139
  %164 = vmatprep.subr.bf16.mxu0 0
  %165 = vmatpush1.bf16.msra.mxu0 %v138
  %166 = vmatprep.subr.bf16.mxu0 0
  %167 = vmatpush2.bf16.msra.mxu0 0
  %168 = vmatprep.subr.bf16.mxu0 0
  %169 = vmatpush2.bf16.msra.mxu0 0
  %170 = vmatprep.subr.bf16.mxu0 0
  %171 = vmatpush2.bf16.msra.mxu0 0
  %172 = vmatprep.subr.bf16.mxu0 0
  %173 = vmatpush2.bf16.msra.mxu0 0
  %174 = vmatprep.subr.bf16.mxu0 0
  %175 = vmatpush2.bf16.msra.mxu0 0
  %176 = vmatprep.subr.bf16.mxu0 0
  %177 = vmatpush2.bf16.msra.mxu0 0
  %178 = vmatprep.subr.bf16.mxu0 0
  %179 = vmatpush2.bf16.msra.mxu0 0
  %180 = vmatprep.subr.bf16.mxu0 0
  %181 = vmatpush2.bf16.msra.mxu0 0
  %182 = vmatprep.mubr.bf16.mxu0 0
  %183 = vmatmul.mubr.bf16.gmra.mxu0 %v148
  %v184 = vpop.f32.mrf.mxu0
  %v185 = vadd.f32 0.0, %v184
  %v186 = vpop.f32.mrf.mxu0
  %v187 = vpop.f32.mrf.mxu0
  %v188 = vadd.f32 0.0, %v187
  %v189 = vpop.f32.mrf.mxu0
  %190 = vdwg.mxu0
  %v191 = vadd.f32 %v111, %v185
  %v192 = vadd.f32 %v112, %v188
  %193 = vst.msk [vmem:[#allocation2] sm:$0xff] %vm64, %v191
  %194 = vst.msk [vmem:[#allocation2 + $0x8] sm:$0xff] %vm64, %v192
  // Predicated region
  $region34: #{decoder_forward.24} parent=0 // pred_check
    %p195 = pneg %p27
  $region35: #{decoder_forward.24} parent=0 // pred_check_branch
    %197 = sbr.rel (%p195) target = $region37
  $region36: #{decoder_forward.24} parent=0 // pred_region
    %v198 = vld [vmem:[#allocation2] sm:$0xff]
    %v199 = vld [vmem:[#allocation2 + $0x8] sm:$0xff]
    %v200 = vld [vmem:[%s4] sm:$0x1]
    %v202 = vlaneseq
    %v203 = vshrl.u32 %v202, 7
    %v204 = vsub.s32 0, %v203
    %v205 = vrot.slane %v200, %v204
    %v207 = vadd.f32 %v198, %v205
    %v208 = vadd.f32 %v199, %v205
    %v209 = vld [vmem:[%s0] sm:$0xf]
    %v210 = vld [vmem:[%s0 + $0x4] sm:$0xf]
    %v211 = vunpack.c.l.bf16 %v209
    %v212 = vunpack.c.l.bf16 %v210
    %v213 = vadd.f32 %v207, %v211
    %v214 = vadd.f32 %v208, %v212
    %v215 = vld [vmem:[%s5] sm:$0x1]
    %v216 = vld [vmem:[%s6] sm:$0x1]
    %v217 = vsel %vm64, %v213, 0.0
    %218 = vadd.xlane.f32.xlu0 %v217
    %v219 = vpop.xlane.xlu0 %218
    %v220 = vsel %vm64, %v214, 0.0
    %221 = vadd.xlane.f32.xlu0 %v220
    %v222 = vpop.xlane.xlu0 %221
    %v223 = vrcp.pop 32.0
    %v224 = vmul.f32 %v219, %v223
    %v225 = vmul.f32 %v222, %v223
    %v226 = vmul.f32 %v213, %v213
    %v227 = vmul.f32 %v214, %v214
    %v228 = vsel %vm64, %v226, 0.0
    %229 = vadd.xlane.f32.xlu0 %v228
    %v230 = vpop.xlane.xlu0 %229
    %v231 = vsel %vm64, %v227, 0.0
    %232 = vadd.xlane.f32.xlu0 %v231
    %v233 = vpop.xlane.xlu0 %232
    %v234 = vmul.f32 %v230, %v223
    %v235 = vmul.f32 %v233, %v223
    %v236 = vmul.f32 %v224, %v224
    %v237 = vmul.f32 %v225, %v225
    %v238 = vsub.f32 %v234, %v236
    %v239 = vsub.f32 %v235, %v237
    %v240 = vmax.f32 %v238, 0.0
    %v241 = vmax.f32 %v239, 0.0
    %v242 = vsub.f32 %v213, %v224
    %v243 = vsub.f32 %v214, %v225
    %v244 = vadd.f32 %v240, 1e-05
    %v245 = vadd.f32 %v241, 1e-05
    %v246 = vrsqrt.pop %v244
    %v247 = vrsqrt.pop %v245
    %v248 = vmul.f32 %v242, %v246
    %v249 = vmul.f32 %v243, %v247
    %v251 = vlaneseq
    %v252 = vshrl.u32 %v251, 7
    %v253 = vsub.s32 0, %v252
    %v254 = vrot.slane %v215, %v253
    %v256 = vmul.f32 %v248, %v254
    %v257 = vmul.f32 %v249, %v254
    %v259 = vlaneseq
    %v260 = vshrl.u32 %v259, 7
    %v261 = vsub.s32 0, %v260
    %v262 = vrot.slane %v216, %v261
    %v264 = vadd.f32 %v256, %v262
    %v265 = vadd.f32 %v257, %v262
    %v266 = vpack.c.bf16 %v265, %v264
    %v268 = vunpack.c.l.b16 %v266
    %v269 = vunpack.c.h.b16 %v266
    %v270 = vpack.c.b16 %v268, %v268
    %v271 = vpack.c.b16 %v269, %v269
    %vm274 = vcmask 257024
    %275 = vst.msk [vmem:[%s7] sm:$0xf] %vm274, %v270
    %276 = vst.msk [vmem:[%s7 + $0x4] sm:$0xf] %vm274, %v271
  $region37: #{decoder_forward.24} parent=0 // pred_fallthru
    _
  // Predicated region
  $region38: #{decoder_forward.24} parent=0 // pred_check
    _
  $region39: #{decoder_forward.24} parent=0 // pred_check_branch
    %278 = sbr.rel (0) target = $region41
  $region40: #{decoder_forward.24} parent=0 // pred_region
    _
  $region41: #{decoder_forward.24} parent=0 // pred_fallthru
    _
  // Predicated region
  $region42: #{decoder_forward.24} parent=0 // pred_check
    _
  $region43: #{decoder_forward.24} parent=0 // pred_check_branch
    %280 = sbr.rel (0) target = $region45
  $region44: #{decoder_forward.24} parent=0 // pred_region
    _
  $region45: #{decoder_forward.24} parent=0 // pred_fallthru
    _

</llo_original>
